<compile_context>
chip_gen: v6e
topology: v6e:2x2x1
jax: 0.10.0
libtpu: 0.0.40
codegen_flags: <defaults>
</compile_context>

<pallas_src>
import jax
import jax.numpy as jnp
from jax.experimental import pallas as pl
from jax.experimental.pallas import tpu as pltpu

# Small-shape stand-ins for the module's image_size=64, num_channels=3
# (real scale IN_DIM = 3*64*64 = 12288). Forward semantics are identical.
image_size = 16
num_channels = 4
IN_DIM = num_channels * image_size * image_size   # 1024 here, 12288 at real scale
H1 = 1024
H2 = 512
H_OUT = 1
OUT_LANES = 128   # lane-dense output block width; column 0 holds the validity


def _round_up(x, m):
    return ((x + m - 1) // m) * m


def _leaky_relu(x, negative_slope=0.2):
    return jnp.where(x >= 0, x, negative_slope * x)


def _epilogue(acc, b1_ref, w2_ref, b2_ref, w3_ref, b3_ref, o_ref):
    """Layers 2 & 3 + activations on the finished layer-1 accumulator."""
    h1 = _leaky_relu(acc + b1_ref[...]).astype(jnp.bfloat16)            # (bm, H1) bf16
    h2 = jnp.dot(h1, w2_ref[...], preferred_element_type=jnp.float32) + b2_ref[...]
    h2 = _leaky_relu(h2)                                                 # (bm, H2) f32
    # Layer 3 has N=1: VPU multiply + cross-lane reduce (XLU) instead of an MXU
    # matmul with 1/128th column utilization.
    logits = jnp.sum(h2 * w3_ref[...], axis=-1, keepdims=True) + b3_ref[...]
    # Lane-dense store: broadcast the (bm, 1) validity across the 128-lane block.
    o_ref[...] = jnp.broadcast_to(jax.nn.sigmoid(logits), o_ref.shape)


def _streamed_kernel(x_ref, w1_ref, b1_ref, w2_ref, b2_ref, w3_ref, b3_ref,
                     o_ref, acc_ref):
    k = pl.program_id(1)

    @pl.when(k == 0)
    def _init():
        acc_ref[...] = jnp.zeros_like(acc_ref)

    # f32->bf16 cast fused into the kernel (VPU) - no bf16 copy of x in HBM.
    acc_ref[...] += jnp.dot(x_ref[...].astype(jnp.bfloat16), w1_ref[...],
                            preferred_element_type=jnp.float32)

    @pl.when(k == pl.num_programs(1) - 1)
    def _finalize():
        _epilogue(acc_ref[...], b1_ref, w2_ref, b2_ref, w3_ref, b3_ref, o_ref)


def _make_resident_kernel(tk):
    """w1 lives in HBM (pl.ANY); loaded once into a VMEM scratch, then reused."""

    def kernel(x_ref, w1_hbm, b1_ref, w2_ref, b2_ref, w3_ref, b3_ref,
               o_ref, acc_ref, w1_vmem, w1_sem):
        i = pl.program_id(0)
        k = pl.program_id(1)

        # Load the whole w1 into VMEM exactly once per kernel invocation.
        @pl.when((i == 0) & (k == 0))
        def _load_w1():
            cp = pltpu.make_async_copy(w1_hbm, w1_vmem, w1_sem)
            cp.start()
            cp.wait()

        @pl.when(k == 0)
        def _init():
            acc_ref[...] = jnp.zeros_like(acc_ref)

        k0 = pl.multiple_of(k * tk, 128)
        acc_ref[...] += jnp.dot(x_ref[...].astype(jnp.bfloat16),
                                w1_vmem[pl.ds(k0, tk), :],
                                preferred_element_type=jnp.float32)

        @pl.when(k == pl.num_programs(1) - 1)
        def _finalize():
            _epilogue(acc_ref[...], b1_ref, w2_ref, b2_ref, w3_ref, b3_ref, o_ref)

    return kernel


def _vmem_bytes(bm, tk, in_dim, resident):
    bf16, f32 = 2, 4
    nbuf = 3                                                # Buffered(3) streamed tiles
    x_tiles = nbuf * bm * tk * f32                          # f32 x tiles, cast in-kernel
    w1_bytes = (in_dim * H1 * bf16 if resident              # whole w1 resident in scratch
                else nbuf * tk * H1 * bf16)                 # streamed slabs, 3-deep
    const_blocks = 2 * (H1 * H2 * bf16                      # w2
                        + (H1 + 2 * H2 + 1) * f32)          # b1, b2, w3 row, b3
    out_bytes = 2 * bm * OUT_LANES * f32
    acc = bm * H1 * f32
    epilogue = bm * H1 * bf16 + 2 * bm * H2 * f32           # h1 bf16, h2 intermediates
    return x_tiles + w1_bytes + const_blocks + out_bytes + acc + epilogue


def _vmem_capacity():
    try:
        return int(pltpu.get_tpu_info().vmem_capacity_bytes)
    except Exception:
        return 64 << 20          # conservative (v7x-sized) fallback


def discriminator_forward(img, params, *, tk=None, bm=None, resident_w1=None):
    """img: (B, C, H, W) float32 (NCHW, like PyTorch). Returns (B, 1) validity."""
    B = img.shape[0]
    w1, b1, w2, b2, w3, b3 = params
    in_dim = w1.shape[0]
    assert w1.shape == (in_dim, H1), w1.shape
    assert w2.shape == (H1, H2), w2.shape
    assert w3.shape == (H2, H_OUT), w3.shape
    assert img.shape[1] * img.shape[2] * img.shape[3] == in_dim, (img.shape, in_dim)

    # K tile of the streamed layer-1 reduction: largest "nice" divisor <= 2048
    # (2048 at the real 12288-dim input; the whole dim when it already fits).
    if tk is None:
        if in_dim <= 2048:
            tk = in_dim
        else:
            tk = next(c for c in (2048, 1536, 1024, 768, 512, 384, 256, 128, in_dim)
                      if in_dim % c == 0)
    assert in_dim % tk == 0, (in_dim, tk)

    # Batch tile: big tiles amortize per-step overhead and cut w1 re-reads (the
    # dominant HBM traffic scales as (B/bm) * |w1|).  16-row floor for bf16
    # sublane packing; at very small B, batching several calls together is the
    # only real speedup (runtime is fixed by streaming w1 once).
    if bm is None:
        bm = 16 if B <= 16 else min(512, _round_up(B, 8))
    b_pad = _round_up(B, bm)
    n_btiles = b_pad // bm
    n_ksteps = in_dim // tk
    n_steps = n_btiles * n_ksteps

    # Same flattening as torch `.view(B, -1)`; the bf16 cast happens in-kernel.
    x = img.reshape(B, -1)
    if b_pad != B:
        x = jnp.pad(x, ((0, b_pad - B), (0, 0)))

    # bf16 weights for the MXU matmuls (f32 accumulation in-kernel); biases and the
    # tiny layer-3 row stay f32.
    w1b = w1.astype(jnp.bfloat16)
    w2b = w2.astype(jnp.bfloat16)
    b1r = b1.reshape(1, H1).astype(jnp.float32)
    b2r = b2.reshape(1, H2).astype(jnp.float32)
    w3_row = w3.reshape(1, H2).astype(jnp.float32)
    b3r = b3.reshape(1, 1).astype(jnp.float32)

    cap = _vmem_capacity()
    if resident_w1 is None:
        # Resident w1 only pays off when it would otherwise be re-streamed (>=2
        # batch tiles) and only on big-VMEM parts (v5e/v6e, 128 MiB).  Stays off on
        # v7x's 64 MiB where re-streaming is cheap at 3.2 TB/s.
        resident_w1 = (
            n_btiles >= 2
            and cap >= (96 << 20)
            and _vmem_bytes(bm, tk, in_dim, True) + (16 << 20) <= int(0.85 * cap)
        )

    vmem_limit = min(
        max(_vmem_bytes(bm, tk, in_dim, resident_w1) + (8 << 20), 32 << 20),
        int(0.85 * cap),
    )

    def _stream_spec(shape, index_map):
        # 3-deep pipelining keeps the streamed DMA busy across the epilogue at
        # batch-tile boundaries; fall back to the default double-buffer if this
        # JAX version doesn't support pipeline_mode.
        if n_steps >= 3:
            try:
                return pl.BlockSpec(shape, index_map, pipeline_mode=pl.Buffered(3))
            except Exception:
                pass
        return pl.BlockSpec(shape, index_map)

    const_specs = [
        pl.BlockSpec((1, H1), lambda i, k: (0, 0)),     # b1  : resident
        pl.BlockSpec((H1, H2), lambda i, k: (0, 0)),    # w2  : resident
        pl.BlockSpec((1, H2), lambda i, k: (0, 0)),     # b2  : resident
        pl.BlockSpec((1, H2), lambda i, k: (0, 0)),     # w3  : resident (row)
        pl.BlockSpec((1, 1), lambda i, k: (0, 0)),      # b3  : resident
    ]
    x_spec = _stream_spec((bm, tk), lambda i, k: (i, k))
    out_spec = pl.BlockSpec((bm, OUT_LANES), lambda i, k: (i, 0))

    if resident_w1:
        kernel = _make_resident_kernel(tk)
        in_specs = [x_spec, pl.BlockSpec(memory_space=pl.ANY)] + const_specs
        scratch_shapes = [
            pltpu.VMEM((bm, H1), jnp.float32),          # layer-1 f32 accumulator
            pltpu.VMEM((in_dim, H1), jnp.bfloat16),     # resident w1
            pltpu.SemaphoreType.DMA(()),
        ]
        # The one-shot w1 load at grid step (0,0) must execute first -> keep the
        # batch axis sequential ("arbitrary") as well.
        dim_sem = ("arbitrary", "arbitrary")
    else:
        kernel = _streamed_kernel
        in_specs = [x_spec,
                    _stream_spec((tk, H1), lambda i, k: (k, 0))] + const_specs
        scratch_shapes = [pltpu.VMEM((bm, H1), jnp.float32)]
        dim_sem = ("parallel", "arbitrary")

    out = pl.pallas_call(
        kernel,
        out_shape=jax.ShapeDtypeStruct((b_pad, OUT_LANES), jnp.float32),
        grid=(n_btiles, n_ksteps),
        in_specs=in_specs,
        out_specs=out_spec,
        scratch_shapes=scratch_shapes,
        compiler_params=pltpu.CompilerParams(
            dimension_semantics=dim_sem,
            vmem_limit_bytes=vmem_limit,
        ),
    )(x, w1b, b1r, w2b, b2r, w3_row, b3r)

    return out[:B, :H_OUT]


def _init_linear(kw, kb, fan_in, fan_out):
    # Deterministic init mimicking torch.nn.Linear default: U(-1/sqrt(fan_in), ...).
    bound = 1.0 / (fan_in ** 0.5)
    w = jax.random.uniform(kw, (fan_in, fan_out), jnp.float32, -bound, bound)
    b = jax.random.uniform(kb, (1, fan_out), jnp.float32, -bound, bound)
    return w, b


def _reference_forward(img, params):
    # Pure-JAX reference with identical bf16 quantization / f32 accumulation.
    w1, b1, w2, b2, w3, b3 = params
    x = img.reshape(img.shape[0], -1).astype(jnp.bfloat16)
    h1 = _leaky_relu(jnp.dot(x, w1.astype(jnp.bfloat16),
                             preferred_element_type=jnp.float32) + b1)
    h2 = _leaky_relu(jnp.dot(h1.astype(jnp.bfloat16), w2.astype(jnp.bfloat16),
                             preferred_element_type=jnp.float32) + b2)
    logits = h2 @ w3 + b3
    return jax.nn.sigmoid(logits)


if __name__ == "__main__":
    key = jax.random.PRNGKey(0)
    kimg, k1, k2, k3, k4, k5, k6, kimg2 = jax.random.split(key, 8)

    w1, b1 = _init_linear(k1, k2, IN_DIM, H1)
    w2, b2 = _init_linear(k3, k4, H1, H2)
    w3, b3 = _init_linear(k5, k6, H2, H_OUT)
    params = (w1, b1, w2, b2, w3, b3)

    # 1) Small batch (auto config: single batch tile, streamed K).
    B = 2
    img = jax.random.normal(kimg, (B, num_channels, image_size, image_size),
                            jnp.float32)
    out = jax.block_until_ready(discriminator_forward(img, params))
    assert out.shape == (B, H_OUT), out.shape
    ref = _reference_forward(img, params)
    assert jnp.allclose(out, ref, atol=2e-3, rtol=2e-3), "small-batch mismatch"

    # 2) Multi-tile batch exercising the 3-deep streamed pipeline and the
    #    resident-w1 path (forced on/off so both code paths are validated here).
    B2 = 48
    img2 = jax.random.normal(kimg2, (B2, num_channels, image_size, image_size),
                             jnp.float32)
    ref2 = _reference_forward(img2, params)
    out_s = jax.block_until_ready(
        discriminator_forward(img2, params, bm=16, tk=256, resident_w1=False))
    out_r = jax.block_until_ready(
        discriminator_forward(img2, params, bm=16, tk=256, resident_w1=True))
    assert out_s.shape == (B2, H_OUT) and out_r.shape == (B2, H_OUT)
    assert jnp.allclose(out_s, ref2, atol=2e-3, rtol=2e-3), "streamed path mismatch"
    assert jnp.allclose(out_r, ref2, atol=2e-3, rtol=2e-3), "resident-w1 path mismatch"

    print("KERNEL_OK")
</pallas_src>

<mosaic_0001>
module attributes {stable_mosaic.version = 11 : i64} {
  func.func @_streamed_kernel(%arg0: i32, %arg1: i32, %arg2: memref<16x1024xf32, #tpu.memory_space<vmem>>, %arg3: memref<1024x1024xbf16, #tpu.memory_space<vmem>>, %arg4: memref<1x1024xf32, #tpu.memory_space<vmem>>, %arg5: memref<1024x512xbf16, #tpu.memory_space<vmem>>, %arg6: memref<1x512xf32, #tpu.memory_space<vmem>>, %arg7: memref<1x512xf32, #tpu.memory_space<vmem>>, %arg8: memref<1x1xf32, #tpu.memory_space<vmem>>, %arg9: memref<16x128xf32, #tpu.memory_space<vmem>>, %arg10: memref<16x1024xf32, #tpu.memory_space<vmem>>) attributes {dimension_semantics = [#tpu.dimension_semantics<parallel>, #tpu.dimension_semantics<arbitrary>], iteration_bounds = array<i64: 1, 1>, scalar_prefetch = 0 : i64, scratch_operands = 1 : i64, tpu.core_type = #tpu.core_type<tc>, window_params = [{transform_indices = @transform_0, window_bounds = array<i64: 16, 1024>}, {transform_indices = @transform_1, window_bounds = array<i64: 1024, 1024>}, {pipeline_mode = #tpu.pipeline_mode<synchronous>, transform_indices = @transform_2, window_bounds = array<i64: 1, 1024>}, {pipeline_mode = #tpu.pipeline_mode<synchronous>, transform_indices = @transform_3, window_bounds = array<i64: 1024, 512>}, {pipeline_mode = #tpu.pipeline_mode<synchronous>, transform_indices = @transform_4, window_bounds = array<i64: 1, 512>}, {pipeline_mode = #tpu.pipeline_mode<synchronous>, transform_indices = @transform_5, window_bounds = array<i64: 1, 512>}, {pipeline_mode = #tpu.pipeline_mode<synchronous>, transform_indices = @transform_6, window_bounds = array<i64: 1, 1>}, {transform_indices = @transform_7, window_bounds = array<i64: 16, 128>}]} {
    %c0_i32 = arith.constant 0 : i32
    %0 = arith.cmpi eq, %arg1, %c0_i32 : i32
    %1 = arith.extui %0 : i1 to i32
    %c0_i32_0 = arith.constant 0 : i32
    %2 = arith.cmpi ne, %1, %c0_i32_0 : i32
    scf.if %2 {
      %cst_10 = arith.constant 0.000000e+00 : f32
      %13 = vector.broadcast %cst_10 : f32 to vector<16x1024xf32>
      %c0_11 = arith.constant 0 : index
      %c0_12 = arith.constant 0 : index
      %14 = vector.load %arg10[%c0_11, %c0_12] : memref<16x1024xf32, #tpu.memory_space<vmem>>, vector<16x1024xf32>
      tpu.vector_store %arg10[%c0_11, %c0_12], %13 {strides = array<i32>} : memref<16x1024xf32, #tpu.memory_space<vmem>>, vector<16x1024xf32>,
    } else {
    }
    %c0 = arith.constant 0 : index
    %c0_1 = arith.constant 0 : index
    %3 = vector.load %arg10[%c0, %c0_1] : memref<16x1024xf32, #tpu.memory_space<vmem>>, vector<16x1024xf32>
    %c0_2 = arith.constant 0 : index
    %c0_3 = arith.constant 0 : index
    %4 = vector.load %arg2[%c0_2, %c0_3] : memref<16x1024xf32, #tpu.memory_space<vmem>>, vector<16x1024xf32>
    %5 = arith.truncf %4 : vector<16x1024xf32> to vector<16x1024xbf16>
    %c0_4 = arith.constant 0 : index
    %c0_5 = arith.constant 0 : index
    %6 = vector.load %arg3[%c0_4, %c0_5] : memref<1024x1024xbf16, #tpu.memory_space<vmem>>, vector<1024x1024xbf16>
    %cst = arith.constant dense<0.000000e+00> : vector<16x1024xf32>
    %7 = tpu.matmul %5, %6, %cst {dimension_numbers = #tpu.dot_dimension_numbers<[1], [0], [0], [1], [0, 0, 1, 1], [], []>} : vector<16x1024xbf16>, vector<1024x1024xbf16>, vector<16x1024xf32> -> vector<16x1024xf32>
    %8 = arith.addf %3, %7 : vector<16x1024xf32>
    %c0_6 = arith.constant 0 : index
    %c0_7 = arith.constant 0 : index
    %9 = vector.load %arg10[%c0_6, %c0_7] : memref<16x1024xf32, #tpu.memory_space<vmem>>, vector<16x1024xf32>
    tpu.vector_store %arg10[%c0_6, %c0_7], %8 {strides = array<i32>} : memref<16x1024xf32, #tpu.memory_space<vmem>>, vector<16x1024xf32>,
    %c0_i32_8 = arith.constant 0 : i32
    %10 = arith.cmpi eq, %arg1, %c0_i32_8 : i32
    %11 = arith.extui %10 : i1 to i32
    %c0_i32_9 = arith.constant 0 : i32
    %12 = arith.cmpi ne, %11, %c0_i32_9 : i32
    scf.if %12 {
      %c0_10 = arith.constant 0 : index
      %c0_11 = arith.constant 0 : index
      %13 = vector.load %arg10[%c0_10, %c0_11] : memref<16x1024xf32, #tpu.memory_space<vmem>>, vector<16x1024xf32>
      %c0_12 = arith.constant 0 : index
      %c0_13 = arith.constant 0 : index
      %14 = vector.load %arg4[%c0_12, %c0_13] : memref<1x1024xf32, #tpu.memory_space<vmem>>, vector<1x1024xf32>
      %15 = vector.broadcast %14 : vector<1x1024xf32> to vector<16x1024xf32>
      %16 = arith.addf %13, %15 : vector<16x1024xf32>
      %cst_14 = arith.constant 0.000000e+00 : f32
      %17 = vector.broadcast %cst_14 : f32 to vector<16x1024xf32>
      %18 = arith.cmpf oge, %16, %17 : vector<16x1024xf32>
      %cst_15 = arith.constant 2.000000e-01 : f32
      %19 = vector.broadcast %cst_15 : f32 to vector<16x1024xf32>
      %20 = arith.mulf %19, %16 : vector<16x1024xf32>
      %21 = arith.select %18, %16, %20 : vector<16x1024xi1>, vector<16x1024xf32>
      %22 = arith.truncf %21 : vector<16x1024xf32> to vector<16x1024xbf16>
      %c0_16 = arith.constant 0 : index
      %c0_17 = arith.constant 0 : index
      %23 = vector.load %arg5[%c0_16, %c0_17] : memref<1024x512xbf16, #tpu.memory_space<vmem>>, vector<1024x512xbf16>
      %cst_18 = arith.constant dense<0.000000e+00> : vector<16x512xf32>
      %24 = tpu.matmul %22, %23, %cst_18 {dimension_numbers = #tpu.dot_dimension_numbers<[1], [0], [0], [1], [0, 0, 1, 1], [], []>} : vector<16x1024xbf16>, vector<1024x512xbf16>, vector<16x512xf32> -> vector<16x512xf32>
      %c0_19 = arith.constant 0 : index
      %c0_20 = arith.constant 0 : index
      %25 = vector.load %arg6[%c0_19, %c0_20] : memref<1x512xf32, #tpu.memory_space<vmem>>, vector<1x512xf32>
      %26 = vector.broadcast %25 : vector<1x512xf32> to vector<16x512xf32>
      %27 = arith.addf %24, %26 : vector<16x512xf32>
      %cst_21 = arith.constant 0.000000e+00 : f32
      %28 = vector.broadcast %cst_21 : f32 to vector<16x512xf32>
      %29 = arith.cmpf oge, %27, %28 : vector<16x512xf32>
      %cst_22 = arith.constant 2.000000e-01 : f32
      %30 = vector.broadcast %cst_22 : f32 to vector<16x512xf32>
      %31 = arith.mulf %30, %27 : vector<16x512xf32>
      %32 = arith.select %29, %27, %31 : vector<16x512xi1>, vector<16x512xf32>
      %c0_23 = arith.constant 0 : index
      %c0_24 = arith.constant 0 : index
      %33 = vector.load %arg7[%c0_23, %c0_24] : memref<1x512xf32, #tpu.memory_space<vmem>>, vector<1x512xf32>
      %34 = vector.broadcast %33 : vector<1x512xf32> to vector<16x512xf32>
      %35 = arith.mulf %32, %34 : vector<16x512xf32>
      %cst_25 = arith.constant dense<0.000000e+00> : vector<16xf32>
      %36 = vector.multi_reduction <add>, %35, %cst_25 [1] : vector<16x512xf32> to vector<16xf32>
      %37 = vector.shape_cast %36 : vector<16xf32> to vector<16x1xf32>
      %c0_26 = arith.constant 0 : index
      %c0_27 = arith.constant 0 : index
      %38 = vector.load %arg8[%c0_26, %c0_27] : memref<1x1xf32, #tpu.memory_space<vmem>>, vector<1x1xf32>
      %39 = vector.broadcast %38 : vector<1x1xf32> to vector<16x1xf32>
      %40 = arith.addf %37, %39 : vector<16x1xf32>
      %41 = arith.negf %40 : vector<16x1xf32>
      %42 = math.exp %41 : vector<16x1xf32>
      %cst_28 = arith.constant 1.000000e+00 : f32
      %43 = vector.broadcast %cst_28 : f32 to vector<16x1xf32>
      %44 = arith.addf %43, %42 : vector<16x1xf32>
      %45 = arith.divf %43, %44 : vector<16x1xf32>
      %46 = vector.shape_cast %45 : vector<16x1xf32> to vector<16x1xf32>
      %47 = vector.broadcast %46 : vector<16x1xf32> to vector<16x128xf32>
      %c0_29 = arith.constant 0 : index
      %c0_30 = arith.constant 0 : index
      %48 = vector.load %arg9[%c0_29, %c0_30] : memref<16x128xf32, #tpu.memory_space<vmem>>, vector<16x128xf32>
      tpu.vector_store %arg9[%c0_29, %c0_30], %47 {strides = array<i32>} : memref<16x128xf32, #tpu.memory_space<vmem>>, vector<16x128xf32>,
    } else {
    }
    return
  }
  func.func @transform_0(%arg0: i32, %arg1: i32) -> (i32, i32) {
    %c0_i32 = arith.constant 0 : i32
    return %arg0, %arg1 : i32, i32
  }
  func.func @transform_1(%arg0: i32, %arg1: i32) -> (i32, i32) {
    %c0_i32 = arith.constant 0 : i32
    %c0_i32_0 = arith.constant 0 : i32
    return %arg1, %c0_i32 : i32, i32
  }
  func.func @transform_2(%arg0: i32, %arg1: i32) -> (i32, i32) {
    %c0_i32 = arith.constant 0 : i32
    %c0_i32_0 = arith.constant 0 : i32
    %c0_i32_1 = arith.constant 0 : i32
    return %c0_i32, %c0_i32_0 : i32, i32
  }
  func.func @transform_3(%arg0: i32, %arg1: i32) -> (i32, i32) {
    %c0_i32 = arith.constant 0 : i32
    %c0_i32_0 = arith.constant 0 : i32
    %c0_i32_1 = arith.constant 0 : i32
    return %c0_i32, %c0_i32_0 : i32, i32
  }
  func.func @transform_4(%arg0: i32, %arg1: i32) -> (i32, i32) {
    %c0_i32 = arith.constant 0 : i32
    %c0_i32_0 = arith.constant 0 : i32
    %c0_i32_1 = arith.constant 0 : i32
    return %c0_i32, %c0_i32_0 : i32, i32
  }
  func.func @transform_5(%arg0: i32, %arg1: i32) -> (i32, i32) {
    %c0_i32 = arith.constant 0 : i32
    %c0_i32_0 = arith.constant 0 : i32
    %c0_i32_1 = arith.constant 0 : i32
    return %c0_i32, %c0_i32_0 : i32, i32
  }
  func.func @transform_6(%arg0: i32, %arg1: i32) -> (i32, i32) {
    %c0_i32 = arith.constant 0 : i32
    %c0_i32_0 = arith.constant 0 : i32
    %c0_i32_1 = arith.constant 0 : i32
    return %c0_i32, %c0_i32_0 : i32, i32
  }
  func.func @transform_7(%arg0: i32, %arg1: i32) -> (i32, i32) {
    %c0_i32 = arith.constant 0 : i32
    %c0_i32_0 = arith.constant 0 : i32
    return %arg0, %c0_i32 : i32, i32
  }
}

</mosaic_0001>

<llo_original>
// kernel: tpu_custom_call.1
$region0: #{tpu_custom_call.1}
  #allocation0 [shape = 'u32[]', space=smem, size = 0x4, offset = 0x4, fixed_abs, tag = 'smem constant byte address 0x4 - core index']
  #allocation1 [shape = 'u32[144,128]{1,0:T(1,128)}', space=vmem, size = 0x12000, scoped, tag = 'internal scratch']
  #allocation2 [shape = 'f32[16,1024]{1,0:T(8,128)}', space=vmem, size = 0x10000, scoped, tag = 'scratch operand']
  #allocation3 [shape = 'f32[1,1]{1,0:T(1,128)S(1)}', space=vmem, size = 0x200, scoped, tag = 'scoped memory for tpu_custom_call.1']
  %s0 = inlined_call_operand.hbm [shape: f32[16,1024], index: 0, kind: input, shape index: {}]
  %s1 = inlined_call_operand.hbm [shape: bf16[1024,1024], index: 1, kind: input, shape index: {}]
  %s2 = inlined_call_operand.hbm [shape: f32[1,1024], index: 2, kind: input, shape index: {}]
  %s3 = inlined_call_operand.hbm [shape: bf16[1024,512], index: 3, kind: input, shape index: {}]
  %s4 = inlined_call_operand.hbm [shape: f32[1,512], index: 4, kind: input, shape index: {}]
  %s5 = inlined_call_operand.hbm [shape: f32[1,512], index: 5, kind: input, shape index: {}]
  %s6 = inlined_call_operand.<no memory space> [shape: f32[1,1], index: 6, kind: input, shape index: {}]
  %s7 = inlined_call_operand.hbm [shape: f32[16,128], index: 7, kind: output, shape index: {}]
  %s8 = sld [smem:[#allocation0]]
  $region70: #{tpu_custom_call.1} parent=0
    _
  %s10 = ssub.s32 1, %s8
  %s11 = scalar_select 0, %s10, %s8
  %v12 = vstv %s6
  %13 = vst [vmem:[#allocation3] sm:$0x1] %v12
  $region1: #{tpu_custom_call.1} parent=0
    #allocation4 [shape = 'u8[65536]{0}', space=vmem, size = 0x10000, scoped, tag = 'input window, operand 0, single buffered']
    #allocation5 [shape = 's32[1]{0}', space=sflag, size = 0x4, scoped, tag = 'scoped memory for tpu_custom_call.1']
    #allocation6 [shape = 's32[1]{0}', space=sflag, size = 0x4, scoped, tag = 'scoped memory for tpu_custom_call.1']
    #allocation7 [shape = 'u8[2097152]{0}', space=vmem, size = 0x200000, scoped, tag = 'input window, operand 1, single buffered']
    #allocation8 [shape = 's32[1]{0}', space=sflag, size = 0x4, scoped, tag = 'scoped memory for tpu_custom_call.1']
    #allocation9 [shape = 'u8[4096]{0}', space=vmem, size = 0x1000, scoped, tag = 'input window, operand 2, single buffered']
    #allocation10 [shape = 'u8[1048576]{0}', space=vmem, size = 0x100000, scoped, tag = 'input window, operand 3, single buffered']
    #allocation11 [shape = 's32[1]{0}', space=sflag, size = 0x4, scoped, tag = 'scoped memory for tpu_custom_call.1']
    #allocation12 [shape = 'u8[2048]{0}', space=vmem, size = 0x800, scoped, tag = 'input window, operand 4, single buffered']
    #allocation13 [shape = 'u8[2048]{0}', space=vmem, size = 0x800, scoped, tag = 'input window, operand 5, single buffered']
    #allocation14 [shape = 's32[1]{0}', space=sflag, size = 0x4, scoped, tag = 'scoped memory for tpu_custom_call.1']
    #allocation15 [shape = 'u8[8192]{0}', space=vmem, size = 0x2000, scoped, tag = 'output window, operand 0, single buffered']
    %14 = vsyncpa [#allocation5], 0
    %15 = vsyncpa [#allocation8], 0
    %16 = vsyncpa [#allocation11], 0
    %17 = vsyncpa [#allocation14], 0
    %18 = vsyncpa [#allocation6], 0
    // Predicated region
    $region2: #{tpu_custom_call.1} parent=1 // pred_check
      _
    $region3: #{tpu_custom_call.1} parent=1 // pred_check_branch
      %20 = sbr.rel (0) target = $region5
    $region4: #{tpu_custom_call.1} parent=1 // pred_region
      %s22 = ssub.s32 2048, 2048
      %23 = vsyncadd [#allocation5], %s22
      %s24 = sshll.u32 [#allocation4], 4
      %s25 = int_to_ptr.vmem [resolvable:$true] %s24
      %30 = dma.hbm_to_vmem [thread:$0]  %s0, 2048, %s25, [#allocation5], 1024, 1024, 64
    $region5: #{tpu_custom_call.1} parent=1 // pred_fallthru
      _
    // Predicated region
    $region6: #{tpu_custom_call.1} parent=1 // pred_check
      _
    $region7: #{tpu_custom_call.1} parent=1 // pred_check_branch
      %32 = sbr.rel (0) target = $region9
    $region8: #{tpu_custom_call.1} parent=1 // pred_region
      %s34 = ssub.s32 65536, 65536
      %35 = vsyncadd [#allocation8], %s34
      %s36 = sshll.u32 [#allocation7], 4
      %s37 = int_to_ptr.vmem [resolvable:$true] %s36
      %42 = dma.hbm_to_vmem [thread:$0]  %s1, 65536, %s37, [#allocation8], 512, 512, 32
    $region9: #{tpu_custom_call.1} parent=1 // pred_fallthru
      _
    // Predicated region
    $region10: #{tpu_custom_call.1} parent=1 // pred_check
      _
    $region11: #{tpu_custom_call.1} parent=1 // pred_check_branch
      %44 = sbr.rel (0) target = $region13
    $region12: #{tpu_custom_call.1} parent=1 // pred_region
      %s46 = ssub.s32 128, 128
      %47 = vsyncadd [#allocation8], %s46
      %s49 = sshll.u32 [#allocation9], 4
      %s50 = int_to_ptr.vmem [resolvable:$true] %s49
      %52 = dma.hbm_to_vmem [thread:$0]  %s2, 128, %s50, [#allocation8]
    $region13: #{tpu_custom_call.1} parent=1 // pred_fallthru
      _
    // Predicated region
    $region14: #{tpu_custom_call.1} parent=1 // pred_check
      _
    $region15: #{tpu_custom_call.1} parent=1 // pred_check_branch
      %54 = sbr.rel (0) target = $region17
    $region16: #{tpu_custom_call.1} parent=1 // pred_region
      %s56 = ssub.s32 32768, 32768
      %57 = vsyncadd [#allocation11], %s56
      %s58 = sshll.u32 [#allocation10], 4
      %s59 = int_to_ptr.vmem [resolvable:$true] %s58
      %64 = dma.hbm_to_vmem [thread:$0]  %s3, 32768, %s59, [#allocation11], 256, 256, 16
    $region17: #{tpu_custom_call.1} parent=1 // pred_fallthru
      _
    // Predicated region
    $region18: #{tpu_custom_call.1} parent=1 // pred_check
      _
    $region19: #{tpu_custom_call.1} parent=1 // pred_check_branch
      %66 = sbr.rel (0) target = $region21
    $region20: #{tpu_custom_call.1} parent=1 // pred_region
      %s68 = ssub.s32 64, 64
      %69 = vsyncadd [#allocation11], %s68
      %s71 = sshll.u32 [#allocation12], 4
      %s72 = int_to_ptr.vmem [resolvable:$true] %s71
      %74 = dma.hbm_to_vmem [thread:$0]  %s4, 64, %s72, [#allocation11]
    $region21: #{tpu_custom_call.1} parent=1 // pred_fallthru
      _
    // Predicated region
    $region22: #{tpu_custom_call.1} parent=1 // pred_check
      _
    $region23: #{tpu_custom_call.1} parent=1 // pred_check_branch
      %76 = sbr.rel (0) target = $region25
    $region24: #{tpu_custom_call.1} parent=1 // pred_region
      %s78 = ssub.s32 64, 64
      %79 = vsyncadd [#allocation14], %s78
      %s81 = sshll.u32 [#allocation13], 4
      %s82 = int_to_ptr.vmem [resolvable:$true] %s81
      %84 = dma.hbm_to_vmem [thread:$0]  %s5, 64, %s82, [#allocation14]
    $region25: #{tpu_custom_call.1} parent=1 // pred_fallthru
      _
    // Predicated region
    $region26: #{tpu_custom_call.1} parent=1 // pred_check
      _
    $region27: #{tpu_custom_call.1} parent=1 // pred_check_branch
      %86 = sbr.rel (0) target = $region29
    $region28: #{tpu_custom_call.1} parent=1 // pred_region
      _
    $region29: #{tpu_custom_call.1} parent=1 // pred_fallthru
      _
    // Predicated region
    $region30: #{tpu_custom_call.1} parent=1 // pred_check
      _
    $region31: #{tpu_custom_call.1} parent=1 // pred_check_branch
      %88 = sbr.rel (0) target = $region33
    $region32: #{tpu_custom_call.1} parent=1 // pred_region
      %89 = dma.done [#allocation5], 2048
    $region33: #{tpu_custom_call.1} parent=1 // pred_fallthru
      _
    // Predicated region
    $region34: #{tpu_custom_call.1} parent=1 // pred_check
      _
    $region35: #{tpu_custom_call.1} parent=1 // pred_check_branch
      %91 = sbr.rel (0) target = $region37
    $region36: #{tpu_custom_call.1} parent=1 // pred_region
      %92 = dma.done [#allocation8], 65536
    $region37: #{tpu_custom_call.1} parent=1 // pred_fallthru
      _
    // Predicated region
    $region38: #{tpu_custom_call.1} parent=1 // pred_check
      _
    $region39: #{tpu_custom_call.1} parent=1 // pred_check_branch
      %94 = sbr.rel (0) target = $region41
    $region40: #{tpu_custom_call.1} parent=1 // pred_region
      %95 = dma.done [#allocation8], 128
    $region41: #{tpu_custom_call.1} parent=1 // pred_fallthru
      _
    // Predicated region
    $region42: #{tpu_custom_call.1} parent=1 // pred_check
      _
    $region43: #{tpu_custom_call.1} parent=1 // pred_check_branch
      %97 = sbr.rel (0) target = $region45
    $region44: #{tpu_custom_call.1} parent=1 // pred_region
      %98 = dma.done [#allocation11], 32768
    $region45: #{tpu_custom_call.1} parent=1 // pred_fallthru
      _
    // Predicated region
    $region46: #{tpu_custom_call.1} parent=1 // pred_check
      _
    $region47: #{tpu_custom_call.1} parent=1 // pred_check_branch
      %100 = sbr.rel (0) target = $region49
    $region48: #{tpu_custom_call.1} parent=1 // pred_region
      %101 = dma.done [#allocation11], 64
    $region49: #{tpu_custom_call.1} parent=1 // pred_fallthru
      _
    // Predicated region
    $region50: #{tpu_custom_call.1} parent=1 // pred_check
      _
    $region51: #{tpu_custom_call.1} parent=1 // pred_check_branch
      %103 = sbr.rel (0) target = $region53
    $region52: #{tpu_custom_call.1} parent=1 // pred_region
      %104 = dma.done [#allocation14], 64
    $region53: #{tpu_custom_call.1} parent=1 // pred_fallthru
      _
    %p105 = scmp.eq.s32.totalorder 0, 0
    // Predicated region
    $region54: #{tpu_custom_call.1} parent=1 // pred_check
      %p106 = pneg %p105
    $region55: #{tpu_custom_call.1} parent=1 // pred_check_branch
      %108 = sbr.rel (%p106) target = $region57
    $region56: #{tpu_custom_call.1} parent=1 // pred_region
      %109 = vst [vmem:[#allocation2] sm:$0xff] 0.0
      %110 = vst [vmem:[#allocation2 + $0x8] sm:$0xff] 0.0
      %111 = vst [vmem:[#allocation2 + $0x10] sm:$0xff] 0.0
      %112 = vst [vmem:[#allocation2 + $0x18] sm:$0xff] 0.0
      %113 = vst [vmem:[#allocation2 + $0x20] sm:$0xff] 0.0
      %114 = vst [vmem:[#allocation2 + $0x28] sm:$0xff] 0.0
      %115 = vst [vmem:[#allocation2 + $0x30] sm:$0xff] 0.0
      %116 = vst [vmem:[#allocation2 + $0x38] sm:$0xff] 0.0
      %117 = vst [vmem:[#allocation2 + $0x40] sm:$0xff] 0.0
      %118 = vst [vmem:[#allocation2 + $0x48] sm:$0xff] 0.0
      %119 = vst [vmem:[#allocation2 + $0x50] sm:$0xff] 0.0
      %120 = vst [vmem:[#allocation2 + $0x58] sm:$0xff] 0.0
      %121 = vst [vmem:[#allocation2 + $0x60] sm:$0xff] 0.0
      %122 = vst [vmem:[#allocation2 + $0x68] sm:$0xff] 0.0
      %123 = vst [vmem:[#allocation2 + $0x70] sm:$0xff] 0.0
      %124 = vst [vmem:[#allocation2 + $0x78] sm:$0xff] 0.0
    $region57: #{tpu_custom_call.1} parent=1 // pred_fallthru
      _
    %v125 = vld [vmem:[#allocation2] sm:$0xff]
    %v126 = vld [vmem:[#allocation2 + $0x8] sm:$0xff]
    %v127 = vld [vmem:[#allocation2 + $0x10] sm:$0xff]
    %v128 = vld [vmem:[#allocation2 + $0x18] sm:$0xff]
    %v129 = vld [vmem:[#allocation2 + $0x20] sm:$0xff]
    %v130 = vld [vmem:[#allocation2 + $0x28] sm:$0xff]
    %v131 = vld [vmem:[#allocation2 + $0x30] sm:$0xff]
    %v132 = vld [vmem:[#allocation2 + $0x38] sm:$0xff]
    %v133 = vld [vmem:[#allocation2 + $0x40] sm:$0xff]
    %v134 = vld [vmem:[#allocation2 + $0x48] sm:$0xff]
    %v135 = vld [vmem:[#allocation2 + $0x50] sm:$0xff]
    %v136 = vld [vmem:[#allocation2 + $0x58] sm:$0xff]
    %v137 = vld [vmem:[#allocation2 + $0x60] sm:$0xff]
    %v138 = vld [vmem:[#allocation2 + $0x68] sm:$0xff]
    %v139 = vld [vmem:[#allocation2 + $0x70] sm:$0xff]
    %v140 = vld [vmem:[#allocation2 + $0x78] sm:$0xff]
    %v141 = vld [vmem:[#allocation4] sm:$0xff]
    %v142 = vld [vmem:[#allocation4 + $0x8] sm:$0xff]
    %v143 = vld [vmem:[#allocation4 + $0x10] sm:$0xff]
    %v144 = vld [vmem:[#allocation4 + $0x18] sm:$0xff]
    %v145 = vld [vmem:[#allocation4 + $0x20] sm:$0xff]
    %v146 = vld [vmem:[#allocation4 + $0x28] sm:$0xff]
    %v147 = vld [vmem:[#allocation4 + $0x30] sm:$0xff]
    %v148 = vld [vmem:[#allocation4 + $0x38] sm:$0xff]
    %v149 = vld [vmem:[#allocation4 + $0x40] sm:$0xff]
    %v150 = vld [vmem:[#allocation4 + $0x48] sm:$0xff]
    %v151 = vld [vmem:[#allocation4 + $0x50] sm:$0xff]
    %v152 = vld [vmem:[#allocation4 + $0x58] sm:$0xff]
    %v153 = vld [vmem:[#allocation4 + $0x60] sm:$0xff]
    %v154 = vld [vmem:[#allocation4 + $0x68] sm:$0xff]
    %v155 = vld [vmem:[#allocation4 + $0x70] sm:$0xff]
    %v156 = vld [vmem:[#allocation4 + $0x78] sm:$0xff]
    %v157 = vpack.c.bf16 %v149, %v141
    %v158 = vpack.c.bf16 %v150, %v142
    %v159 = vpack.c.bf16 %v151, %v143
    %v160 = vpack.c.bf16 %v152, %v144
    %v161 = vpack.c.bf16 %v153, %v145
    %v162 = vpack.c.bf16 %v154, %v146
    %v163 = vpack.c.bf16 %v155, %v147
    %v164 = vpack.c.bf16 %v156, %v148
    %v165 = vld [vmem:[#allocation7] sm:$0xff]
    %v166 = vld [vmem:[#allocation7 + $0x8] sm:$0xff]
    %v167 = vld [vmem:[#allocation7 + $0x10] sm:$0xff]
    %v168 = vld [vmem:[#allocation7 + $0x18] sm:$0xff]
    %v169 = vld [vmem:[#allocation7 + $0x20] sm:$0xff]
    %v170 = vld [vmem:[#allocation7 + $0x28] sm:$0xff]
    %v171 = vld [vmem:[#allocation7 + $0x30] sm:$0xff]
    %v172 = vld [vmem:[#allocation7 + $0x38] sm:$0xff]
    %v173 = vld [vmem:[#allocation7 + $0x40] sm:$0xff]
    %v174 = vld [vmem:[#allocation7 + $0x48] sm:$0xff]
    %v175 = vld [vmem:[#allocation7 + $0x50] sm:$0xff]
    %v176 = vld [vmem:[#allocation7 + $0x58] sm:$0xff]
    %v177 = vld [vmem:[#allocation7 + $0x60] sm:$0xff]
    %v178 = vld [vmem:[#allocation7 + $0x68] sm:$0xff]
    %v179 = vld [vmem:[#allocation7 + $0x70] sm:$0xff]
    %v180 = vld [vmem:[#allocation7 + $0x78] sm:$0xff]
    %v181 = vld [vmem:[#allocation7 + $0x80] sm:$0xff]
    %v182 = vld [vmem:[#allocation7 + $0x88] sm:$0xff]
    %v183 = vld [vmem:[#allocation7 + $0x90] sm:$0xff]
    %v184 = vld [vmem:[#allocation7 + $0x98] sm:$0xff]
    %v185 = vld [vmem:[#allocation7 + $0xa0] sm:$0xff]
    %v186 = vld [vmem:[#allocation7 + $0xa8] sm:$0xff]
    %v187 = vld [vmem:[#allocation7 + $0xb0] sm:$0xff]
    %v188 = vld [vmem:[#allocation7 + $0xb8] sm:$0xff]
    %v189 = vld [vmem:[#allocation7 + $0xc0] sm:$0xff]
    %v190 = vld [vmem:[#allocation7 + $0xc8] sm:$0xff]
    %v191 = vld [vmem:[#allocation7 + $0xd0] sm:$0xff]
    %v192 = vld [vmem:[#allocation7 + $0xd8] sm:$0xff]
    %v193 = vld [vmem:[#allocation7 + $0xe0] sm:$0xff]
    %v194 = vld [vmem:[#allocation7 + $0xe8] sm:$0xff]
    %v195 = vld [vmem:[#allocation7 + $0xf0] sm:$0xff]
    %v196 = vld [vmem:[#allocation7 + $0xf8] sm:$0xff]
    %v197 = vld [vmem:[#allocation7 + $0x100] sm:$0xff]
    %v198 = vld [vmem:[#allocation7 + $0x108] sm:$0xff]
    %v199 = vld [vmem:[#allocation7 + $0x110] sm:$0xff]
    %v200 = vld [vmem:[#allocation7 + $0x118] sm:$0xff]
    %v201 = vld [vmem:[#allocation7 + $0x120] sm:$0xff]
    %v202 = vld [vmem:[#allocation7 + $0x128] sm:$0xff]
    %v203 = vld [vmem:[#allocation7 + $0x130] sm:$0xff]
    %v204 = vld [vmem:[#allocation7 + $0x138] sm:$0xff]
    %v205 = vld [vmem:[#allocation7 + $0x140] sm:$0xff]
    %v206 = vld [vmem:[#allocation7 + $0x148] sm:$0xff]
    %v207 = vld [vmem:[#allocation7 + $0x150] sm:$0xff]
    %v208 = vld [vmem:[#allocation7 + $0x158] sm:$0xff]
    %v209 = vld [vmem:[#allocation7 + $0x160] sm:$0xff]
    %v210 = vld [vmem:[#allocation7 + $0x168] sm:$0xff]
    %v211 = vld [vmem:[#allocation7 + $0x170] sm:$0xff]
    %v212 = vld [vmem:[#allocation7 + $0x178] sm:$0xff]
    %v213 = vld [vmem:[#allocation7 + $0x180] sm:$0xff]
    %v214 = vld [vmem:[#allocation7 + $0x188] sm:$0xff]
    %v215 = vld [vmem:[#allocation7 + $0x190] sm:$0xff]
    %v216 = vld [vmem:[#allocation7 + $0x198] sm:$0xff]
    %v217 = vld [vmem:[#allocation7 + $0x1a0] sm:$0xff]
    %v218 = vld [vmem:[#allocation7 + $0x1a8] sm:$0xff]
    %v219 = vld [vmem:[#allocation7 + $0x1b0] sm:$0xff]
    %v220 = vld [vmem:[#allocation7 + $0x1b8] sm:$0xff]
    %v221 = vld [vmem:[#allocation7 + $0x1c0] sm:$0xff]
    %v222 = vld [vmem:[#allocation7 + $0x1c8] sm:$0xff]
    %v223 = vld [vmem:[#allocation7 + $0x1d0] sm:$0xff]
    %v224 = vld [vmem:[#allocation7 + $0x1d8] sm:$0xff]
    %v225 = vld [vmem:[#allocation7 + $0x1e0] sm:$0xff]
    %v226 = vld [vmem:[#allocation7 + $0x1e8] sm:$0xff]
    %v227 = vld [vmem:[#allocation7 + $0x1f0] sm:$0xff]
    %v228 = vld [vmem:[#allocation7 + $0x1f8] sm:$0xff]
    %v229 = vld [vmem:[#allocation7 + $0x200] sm:$0xff]
    %v230 = vld [vmem:[#allocation7 + $0x208] sm:$0xff]
    %v231 = vld [vmem:[#allocation7 + $0x210] sm:$0xff]
    %v232 = vld [vmem:[#allocation7 + $0x218] sm:$0xff]
    %v233 = vld [vmem:[#allocation7 + $0x220] sm:$0xff]
    %v234 = vld [vmem:[#allocation7 + $0x228] sm:$0xff]
    %v235 = vld [vmem:[#allocation7 + $0x230] sm:$0xff]
    %v236 = vld [vmem:[#allocation7 + $0x238] sm:$0xff]
    %v237 = vld [vmem:[#allocation7 + $0x240] sm:$0xff]
    %v238 = vld [vmem:[#allocation7 + $0x248] sm:$0xff]
    %v239 = vld [vmem:[#allocation7 + $0x250] sm:$0xff]
    %v240 = vld [vmem:[#allocation7 + $0x258] sm:$0xff]
    %v241 = vld [vmem:[#allocation7 + $0x260] sm:$0xff]
    %v242 = vld [vmem:[#allocation7 + $0x268] sm:$0xff]
    %v243 = vld [vmem:[#allocation7 + $0x270] sm:$0xff]
    %v244 = vld [vmem:[#allocation7 + $0x278] sm:$0xff]
    %v245 = vld [vmem:[#allocation7 + $0x280] sm:$0xff]
    %v246 = vld [vmem:[#allocation7 + $0x288] sm:$0xff]
    %v247 = vld [vmem:[#allocation7 + $0x290] sm:$0xff]
    %v248 = vld [vmem:[#allocation7 + $0x298] sm:$0xff]
    %v249 = vld [vmem:[#allocation7 + $0x2a0] sm:$0xff]
    %v250 = vld [vmem:[#allocation7 + $0x2a8] sm:$0xff]
    %v251 = vld [vmem:[#allocation7 + $0x2b0] sm:$0xff]
    %v252 = vld [vmem:[#allocation7 + $0x2b8] sm:$0xff]
    %v253 = vld [vmem:[#allocation7 + $0x2c0] sm:$0xff]
    %v254 = vld [vmem:[#allocation7 + $0x2c8] sm:$0xff]
    %v255 = vld [vmem:[#allocation7 + $0x2d0] sm:$0xff]
    %v256 = vld [vmem:[#allocation7 + $0x2d8] sm:$0xff]
    %v257 = vld [vmem:[#allocation7 + $0x2e0] sm:$0xff]
    %v258 = vld [vmem:[#allocation7 + $0x2e8] sm:$0xff]
    %v259 = vld [vmem:[#allocation7 + $0x2f0] sm:$0xff]
    %v260 = vld [vmem:[#allocation7 + $0x2f8] sm:$0xff]
    %v261 = vld [vmem:[#allocation7 + $0x300] sm:$0xff]
    %v262 = vld [vmem:[#allocation7 + $0x308] sm:$0xff]
    %v263 = vld [vmem:[#allocation7 + $0x310] sm:$0xff]
    %v264 = vld [vmem:[#allocation7 + $0x318] sm:$0xff]
    %v265 = vld [vmem:[#allocation7 + $0x320] sm:$0xff]
    %v266 = vld [vmem:[#allocation7 + $0x328] sm:$0xff]
    %v267 = vld [vmem:[#allocation7 + $0x330] sm:$0xff]
    %v268 = vld [vmem:[#allocation7 + $0x338] sm:$0xff]
    %v269 = vld [vmem:[#allocation7 + $0x340] sm:$0xff]
    %v270 = vld [vmem:[#allocation7 + $0x348] sm:$0xff]
    %v271 = vld [vmem:[#allocation7 + $0x350] sm:$0xff]
    %v272 = vld [vmem:[#allocation7 + $0x358] sm:$0xff]
    %v273 = vld [vmem:[#allocation7 + $0x360] sm:$0xff]
    %v274 = vld [vmem:[#allocation7 + $0x368] sm:$0xff]
    %v275 = vld [vmem:[#allocation7 + $0x370] sm:$0xff]
    %v276 = vld [vmem:[#allocation7 + $0x378] sm:$0xff]
    %v277 = vld [vmem:[#allocation7 + $0x380] sm:$0xff]
    %v278 = vld [vmem:[#allocation7 + $0x388] sm:$0xff]
    %v279 = vld [vmem:[#allocation7 + $0x390] sm:$0xff]
    %v280 = vld [vmem:[#allocation7 + $0x398] sm:$0xff]
    %v281 = vld [vmem:[#allocation7 + $0x3a0] sm:$0xff]
    %v282 = vld [vmem:[#allocation7 + $0x3a8] sm:$0xff]
    %v283 = vld [vmem:[#allocation7 + $0x3b0] sm:$0xff]
    %v284 = vld [vmem:[#allocation7 + $0x3b8] sm:$0xff]
    %v285 = vld [vmem:[#allocation7 + $0x3c0] sm:$0xff]
    %v286 = vld [vmem:[#allocation7 + $0x3c8] sm:$0xff]
    %v287 = vld [vmem:[#allocation7 + $0x3d0] sm:$0xff]
    %v288 = vld [vmem:[#allocation7 + $0x3d8] sm:$0xff]
    %v289 = vld [vmem:[#allocation7 + $0x3e0] sm:$0xff]
    %v290 = vld [vmem:[#allocation7 + $0x3e8] sm:$0xff]
    %v291 = vld [vmem:[#allocation7 + $0x3f0] sm:$0xff]
    %v292 = vld [vmem:[#allocation7 + $0x3f8] sm:$0xff]
    %v293 = vld [vmem:[#allocation7 + $0x400] sm:$0xff]
    %v294 = vld [vmem:[#allocation7 + $0x408] sm:$0xff]
    %v295 = vld [vmem:[#allocation7 + $0x410] sm:$0xff]
    %v296 = vld [vmem:[#allocation7 + $0x418] sm:$0xff]
    %v297 = vld [vmem:[#allocation7 + $0x420] sm:$0xff]
    %v298 = vld [vmem:[#allocation7 + $0x428] sm:$0xff]
    %v299 = vld [vmem:[#allocation7 + $0x430] sm:$0xff]
    %v300 = vld [vmem:[#allocation7 + $0x438] sm:$0xff]
    %v301 = vld [vmem:[#allocation7 + $0x440] sm:$0xff]
    %v302 = vld [vmem:[#allocation7 + $0x448] sm:$0xff]
    %v303 = vld [vmem:[#allocation7 + $0x450] sm:$0xff]
    %v304 = vld [vmem:[#allocation7 + $0x458] sm:$0xff]
    %v305 = vld [vmem:[#allocation7 + $0x460] sm:$0xff]
    %v306 = vld [vmem:[#allocation7 + $0x468] sm:$0xff]
    %v307 = vld [vmem:[#allocation7 + $0x470] sm:$0xff]
    %v308 = vld [vmem:[#allocation7 + $0x478] sm:$0xff]
    %v309 = vld [vmem:[#allocation7 + $0x480] sm:$0xff]
    %v310 = vld [vmem:[#allocation7 + $0x488] sm:$0xff]
    %v311 = vld [vmem:[#allocation7 + $0x490] sm:$0xff]
    %v312 = vld [vmem:[#allocation7 + $0x498] sm:$0xff]
    %v313 = vld [vmem:[#allocation7 + $0x4a0] sm:$0xff]
    %v314 = vld [vmem:[#allocation7 + $0x4a8] sm:$0xff]
    %v315 = vld [vmem:[#allocation7 + $0x4b0] sm:$0xff]
    %v316 = vld [vmem:[#allocation7 + $0x4b8] sm:$0xff]
    %v317 = vld [vmem:[#allocation7 + $0x4c0] sm:$0xff]
    %v318 = vld [vmem:[#allocation7 + $0x4c8] sm:$0xff]
    %v319 = vld [vmem:[#allocation7 + $0x4d0] sm:$0xff]
    %v320 = vld [vmem:[#allocation7 + $0x4d8] sm:$0xff]
    %v321 = vld [vmem:[#allocation7 + $0x4e0] sm:$0xff]
    %v322 = vld [vmem:[#allocation7 + $0x4e8] sm:$0xff]
    %v323 = vld [vmem:[#allocation7 + $0x4f0] sm:$0xff]
    %v324 = vld [vmem:[#allocation7 + $0x4f8] sm:$0xff]
    %v325 = vld [vmem:[#allocation7 + $0x500] sm:$0xff]
    %v326 = vld [vmem:[#allocation7 + $0x508] sm:$0xff]
    %v327 = vld [vmem:[#allocation7 + $0x510] sm:$0xff]
    %v328 = vld [vmem:[#allocation7 + $0x518] sm:$0xff]
    %v329 = vld [vmem:[#allocation7 + $0x520] sm:$0xff]
    %v330 = vld [vmem:[#allocation7 + $0x528] sm:$0xff]
    %v331 = vld [vmem:[#allocation7 + $0x530] sm:$0xff]
    %v332 = vld [vmem:[#allocation7 + $0x538] sm:$0xff]
    %v333 = vld [vmem:[#allocation7 + $0x540] sm:$0xff]
    %v334 = vld [vmem:[#allocation7 + $0x548] sm:$0xff]
    %v335 = vld [vmem:[#allocation7 + $0x550] sm:$0xff]
    %v336 = vld [vmem:[#allocation7 + $0x558] sm:$0xff]
    %v337 = vld [vmem:[#allocation7 + $0x560] sm:$0xff]
    %v338 = vld [vmem:[#allocation7 + $0x568] sm:$0xff]
    %v339 = vld [vmem:[#allocation7 + $0x570] sm:$0xff]
    %v340 = vld [vmem:[#allocation7 + $0x578] sm:$0xff]
    %v341 = vld [vmem:[#allocation7 + $0x580] sm:$0xff]
    %v342 = vld [vmem:[#allocation7 + $0x588] sm:$0xff]
    %v343 = vld [vmem:[#allocation7 + $0x590] sm:$0xff]
    %v344 = vld [vmem:[#allocation7 + $0x598] sm:$0xff]
    %v345 = vld [vmem:[#allocation7 + $0x5a0] sm:$0xff]
    %v346 = vld [vmem:[#allocation7 + $0x5a8] sm:$0xff]
    %v347 = vld [vmem:[#allocation7 + $0x5b0] sm:$0xff]
    %v348 = vld [vmem:[#allocation7 + $0x5b8] sm:$0xff]
    %v349 = vld [vmem:[#allocation7 + $0x5c0] sm:$0xff]
    %v350 = vld [vmem:[#allocation7 + $0x5c8] sm:$0xff]
    %v351 = vld [vmem:[#allocation7 + $0x5d0] sm:$0xff]
    %v352 = vld [vmem:[#allocation7 + $0x5d8] sm:$0xff]
    %v353 = vld [vmem:[#allocation7 + $0x5e0] sm:$0xff]
    %v354 = vld [vmem:[#allocation7 + $0x5e8] sm:$0xff]
    %v355 = vld [vmem:[#allocation7 + $0x5f0] sm:$0xff]
    %v356 = vld [vmem:[#allocation7 + $0x5f8] sm:$0xff]
    %v357 = vld [vmem:[#allocation7 + $0x600] sm:$0xff]
    %v358 = vld [vmem:[#allocation7 + $0x608] sm:$0xff]
    %v359 = vld [vmem:[#allocation7 + $0x610] sm:$0xff]
    %v360 = vld [vmem:[#allocation7 + $0x618] sm:$0xff]
    %v361 = vld [vmem:[#allocation7 + $0x620] sm:$0xff]
    %v362 = vld [vmem:[#allocation7 + $0x628] sm:$0xff]
    %v363 = vld [vmem:[#allocation7 + $0x630] sm:$0xff]
    %v364 = vld [vmem:[#allocation7 + $0x638] sm:$0xff]
    %v365 = vld [vmem:[#allocation7 + $0x640] sm:$0xff]
    %v366 = vld [vmem:[#allocation7 + $0x648] sm:$0xff]
    %v367 = vld [vmem:[#allocation7 + $0x650] sm:$0xff]
    %v368 = vld [vmem:[#allocation7 + $0x658] sm:$0xff]
    %v369 = vld [vmem:[#allocation7 + $0x660] sm:$0xff]
    %v370 = vld [vmem:[#allocation7 + $0x668] sm:$0xff]
    %v371 = vld [vmem:[#allocation7 + $0x670] sm:$0xff]
    %v372 = vld [vmem:[#allocation7 + $0x678] sm:$0xff]
    %v373 = vld [vmem:[#allocation7 + $0x680] sm:$0xff]
    %v374 = vld [vmem:[#allocation7 + $0x688] sm:$0xff]
    %v375 = vld [vmem:[#allocation7 + $0x690] sm:$0xff]
    %v376 = vld [vmem:[#allocation7 + $0x698] sm:$0xff]
    %v377 = vld [vmem:[#allocation7 + $0x6a0] sm:$0xff]
    %v378 = vld [vmem:[#allocation7 + $0x6a8] sm:$0xff]
    %v379 = vld [vmem:[#allocation7 + $0x6b0] sm:$0xff]
    %v380 = vld [vmem:[#allocation7 + $0x6b8] sm:$0xff]
    %v381 = vld [vmem:[#allocation7 + $0x6c0] sm:$0xff]
    %v382 = vld [vmem:[#allocation7 + $0x6c8] sm:$0xff]
    %v383 = vld [vmem:[#allocation7 + $0x6d0] sm:$0xff]
    %v384 = vld [vmem:[#allocation7 + $0x6d8] sm:$0xff]
    %v385 = vld [vmem:[#allocation7 + $0x6e0] sm:$0xff]
    %v386 = vld [vmem:[#allocation7 + $0x6e8] sm:$0xff]
    %v387 = vld [vmem:[#allocation7 + $0x6f0] sm:$0xff]
    %v388 = vld [vmem:[#allocation7 + $0x6f8] sm:$0xff]
    %v389 = vld [vmem:[#allocation7 + $0x700] sm:$0xff]
    %v390 = vld [vmem:[#allocation7 + $0x708] sm:$0xff]
    %v391 = vld [vmem:[#allocation7 + $0x710] sm:$0xff]
    %v392 = vld [vmem:[#allocation7 + $0x718] sm:$0xff]
    %v393 = vld [vmem:[#allocation7 + $0x720] sm:$0xff]
    %v394 = vld [vmem:[#allocation7 + $0x728] sm:$0xff]
    %v395 = vld [vmem:[#allocation7 + $0x730] sm:$0xff]
    %v396 = vld [vmem:[#allocation7 + $0x738] sm:$0xff]
    %v397 = vld [vmem:[#allocation7 + $0x740] sm:$0xff]
    %v398 = vld [vmem:[#allocation7 + $0x748] sm:$0xff]
    %v399 = vld [vmem:[#allocation7 + $0x750] sm:$0xff]
    %v400 = vld [vmem:[#allocation7 + $0x758] sm:$0xff]
    %v401 = vld [vmem:[#allocation7 + $0x760] sm:$0xff]
    %v402 = vld [vmem:[#allocation7 + $0x768] sm:$0xff]
    %v403 = vld [vmem:[#allocation7 + $0x770] sm:$0xff]
    %v404 = vld [vmem:[#allocation7 + $0x778] sm:$0xff]
    %v405 = vld [vmem:[#allocation7 + $0x780] sm:$0xff]
    %v406 = vld [vmem:[#allocation7 + $0x788] sm:$0xff]
    %v407 = vld [vmem:[#allocation7 + $0x790] sm:$0xff]
    %v408 = vld [vmem:[#allocation7 + $0x798] sm:$0xff]
    %v409 = vld [vmem:[#allocation7 + $0x7a0] sm:$0xff]
    %v410 = vld [vmem:[#allocation7 + $0x7a8] sm:$0xff]
    %v411 = vld [vmem:[#allocation7 + $0x7b0] sm:$0xff]
    %v412 = vld [vmem:[#allocation7 + $0x7b8] sm:$0xff]
    %v413 = vld [vmem:[#allocation7 + $0x7c0] sm:$0xff]
    %v414 = vld [vmem:[#allocation7 + $0x7c8] sm:$0xff]
    %v415 = vld [vmem:[#allocation7 + $0x7d0] sm:$0xff]
    %v416 = vld [vmem:[#allocation7 + $0x7d8] sm:$0xff]
    %v417 = vld [vmem:[#allocation7 + $0x7e0] sm:$0xff]
    %v418 = vld [vmem:[#allocation7 + $0x7e8] sm:$0xff]
    %v419 = vld [vmem:[#allocation7 + $0x7f0] sm:$0xff]
    %v420 = vld [vmem:[#allocation7 + $0x7f8] sm:$0xff]
    %v421 = vld [vmem:[#allocation7 + $0x800] sm:$0xff]
    %v422 = vld [vmem:[#allocation7 + $0x808] sm:$0xff]
    %v423 = vld [vmem:[#allocation7 + $0x810] sm:$0xff]
    %v424 = vld [vmem:[#allocation7 + $0x818] sm:$0xff]
    %v425 = vld [vmem:[#allocation7 + $0x820] sm:$0xff]
    %v426 = vld [vmem:[#allocation7 + $0x828] sm:$0xff]
    %v427 = vld [vmem:[#allocation7 + $0x830] sm:$0xff]
    %v428 = vld [vmem:[#allocation7 + $0x838] sm:$0xff]
    %v429 = vld [vmem:[#allocation7 + $0x840] sm:$0xff]
    %v430 = vld [vmem:[#allocation7 + $0x848] sm:$0xff]
    %v431 = vld [vmem:[#allocation7 + $0x850] sm:$0xff]
    %v432 = vld [vmem:[#allocation7 + $0x858] sm:$0xff]
    %v433 = vld [vmem:[#allocation7 + $0x860] sm:$0xff]
    %v434 = vld [vmem:[#allocation7 + $0x868] sm:$0xff]
    %v435 = vld [vmem:[#allocation7 + $0x870] sm:$0xff]
    %v436 = vld [vmem:[#allocation7 + $0x878] sm:$0xff]
    %v437 = vld [vmem:[#allocation7 + $0x880] sm:$0xff]
    %v438 = vld [vmem:[#allocation7 + $0x888] sm:$0xff]
    %v439 = vld [vmem:[#allocation7 + $0x890] sm:$0xff]
    %v440 = vld [vmem:[#allocation7 + $0x898] sm:$0xff]
    %v441 = vld [vmem:[#allocation7 + $0x8a0] sm:$0xff]
    %v442 = vld [vmem:[#allocation7 + $0x8a8] sm:$0xff]
    %v443 = vld [vmem:[#allocation7 + $0x8b0] sm:$0xff]
    %v444 = vld [vmem:[#allocation7 + $0x8b8] sm:$0xff]
    %v445 = vld [vmem:[#allocation7 + $0x8c0] sm:$0xff]
    %v446 = vld [vmem:[#allocation7 + $0x8c8] sm:$0xff]
    %v447 = vld [vmem:[#allocation7 + $0x8d0] sm:$0xff]
    %v448 = vld [vmem:[#allocation7 + $0x8d8] sm:$0xff]
    %v449 = vld [vmem:[#allocation7 + $0x8e0] sm:$0xff]
    %v450 = vld [vmem:[#allocation7 + $0x8e8] sm:$0xff]
    %v451 = vld [vmem:[#allocation7 + $0x8f0] sm:$0xff]
    %v452 = vld [vmem:[#allocation7 + $0x8f8] sm:$0xff]
    %v453 = vld [vmem:[#allocation7 + $0x900] sm:$0xff]
    %v454 = vld [vmem:[#allocation7 + $0x908] sm:$0xff]
    %v455 = vld [vmem:[#allocation7 + $0x910] sm:$0xff]
    %v456 = vld [vmem:[#allocation7 + $0x918] sm:$0xff]
    %v457 = vld [vmem:[#allocation7 + $0x920] sm:$0xff]
    %v458 = vld [vmem:[#allocation7 + $0x928] sm:$0xff]
    %v459 = vld [vmem:[#allocation7 + $0x930] sm:$0xff]
    %v460 = vld [vmem:[#allocation7 + $0x938] sm:$0xff]
    %v461 = vld [vmem:[#allocation7 + $0x940] sm:$0xff]
    %v462 = vld [vmem:[#allocation7 + $0x948] sm:$0xff]
    %v463 = vld [vmem:[#allocation7 + $0x950] sm:$0xff]
    %v464 = vld [vmem:[#allocation7 + $0x958] sm:$0xff]
    %v465 = vld [vmem:[#allocation7 + $0x960] sm:$0xff]
    %v466 = vld [vmem:[#allocation7 + $0x968] sm:$0xff]
    %v467 = vld [vmem:[#allocation7 + $0x970] sm:$0xff]
    %v468 = vld [vmem:[#allocation7 + $0x978] sm:$0xff]
    %v469 = vld [vmem:[#allocation7 + $0x980] sm:$0xff]
    %v470 = vld [vmem:[#allocation7 + $0x988] sm:$0xff]
    %v471 = vld [vmem:[#allocation7 + $0x990] sm:$0xff]
    %v472 = vld [vmem:[#allocation7 + $0x998] sm:$0xff]
    %v473 = vld [vmem:[#allocation7 + $0x9a0] sm:$0xff]
    %v474 = vld [vmem:[#allocation7 + $0x9a8] sm:$0xff]
    %v475 = vld [vmem:[#allocation7 + $0x9b0] sm:$0xff]
    %v476 = vld [vmem:[#allocation7 + $0x9b8] sm:$0xff]
    %v477 = vld [vmem:[#allocation7 + $0x9c0] sm:$0xff]
    %v478 = vld [vmem:[#allocation7 + $0x9c8] sm:$0xff]
    %v479 = vld [vmem:[#allocation7 + $0x9d0] sm:$0xff]
    %v480 = vld [vmem:[#allocation7 + $0x9d8] sm:$0xff]
    %v481 = vld [vmem:[#allocation7 + $0x9e0] sm:$0xff]
    %v482 = vld [vmem:[#allocation7 + $0x9e8] sm:$0xff]
    %v483 = vld [vmem:[#allocation7 + $0x9f0] sm:$0xff]
    %v484 = vld [vmem:[#allocation7 + $0x9f8] sm:$0xff]
    %v485 = vld [vmem:[#allocation7 + $0xa00] sm:$0xff]
    %v486 = vld [vmem:[#allocation7 + $0xa08] sm:$0xff]
    %v487 = vld [vmem:[#allocation7 + $0xa10] sm:$0xff]
    %v488 = vld [vmem:[#allocation7 + $0xa18] sm:$0xff]
    %v489 = vld [vmem:[#allocation7 + $0xa20] sm:$0xff]
    %v490 = vld [vmem:[#allocation7 + $0xa28] sm:$0xff]
    %v491 = vld [vmem:[#allocation7 + $0xa30] sm:$0xff]
    %v492 = vld [vmem:[#allocation7 + $0xa38] sm:$0xff]
    %v493 = vld [vmem:[#allocation7 + $0xa40] sm:$0xff]
    %v494 = vld [vmem:[#allocation7 + $0xa48] sm:$0xff]
    %v495 = vld [vmem:[#allocation7 + $0xa50] sm:$0xff]
    %v496 = vld [vmem:[#allocation7 + $0xa58] sm:$0xff]
    %v497 = vld [vmem:[#allocation7 + $0xa60] sm:$0xff]
    %v498 = vld [vmem:[#allocation7 + $0xa68] sm:$0xff]
    %v499 = vld [vmem:[#allocation7 + $0xa70] sm:$0xff]
    %v500 = vld [vmem:[#allocation7 + $0xa78] sm:$0xff]
    %v501 = vld [vmem:[#allocation7 + $0xa80] sm:$0xff]
    %v502 = vld [vmem:[#allocation7 + $0xa88] sm:$0xff]
    %v503 = vld [vmem:[#allocation7 + $0xa90] sm:$0xff]
    %v504 = vld [vmem:[#allocation7 + $0xa98] sm:$0xff]
    %v505 = vld [vmem:[#allocation7 + $0xaa0] sm:$0xff]
    %v506 = vld [vmem:[#allocation7 + $0xaa8] sm:$0xff]
    %v507 = vld [vmem:[#allocation7 + $0xab0] sm:$0xff]
    %v508 = vld [vmem:[#allocation7 + $0xab8] sm:$0xff]
    %v509 = vld [vmem:[#allocation7 + $0xac0] sm:$0xff]
    %v510 = vld [vmem:[#allocation7 + $0xac8] sm:$0xff]
    %v511 = vld [vmem:[#allocation7 + $0xad0] sm:$0xff]
    %v512 = vld [vmem:[#allocation7 + $0xad8] sm:$0xff]
    %v513 = vld [vmem:[#allocation7 + $0xae0] sm:$0xff]
    %v514 = vld [vmem:[#allocation7 + $0xae8] sm:$0xff]
    %v515 = vld [vmem:[#allocation7 + $0xaf0] sm:$0xff]
    %v516 = vld [vmem:[#allocation7 + $0xaf8] sm:$0xff]
    %v517 = vld [vmem:[#allocation7 + $0xb00] sm:$0xff]
    %v518 = vld [vmem:[#allocation7 + $0xb08] sm:$0xff]
    %v519 = vld [vmem:[#allocation7 + $0xb10] sm:$0xff]
    %v520 = vld [vmem:[#allocation7 + $0xb18] sm:$0xff]
    %v521 = vld [vmem:[#allocation7 + $0xb20] sm:$0xff]
    %v522 = vld [vmem:[#allocation7 + $0xb28] sm:$0xff]
    %v523 = vld [vmem:[#allocation7 + $0xb30] sm:$0xff]
    %v524 = vld [vmem:[#allocation7 + $0xb38] sm:$0xff]
    %v525 = vld [vmem:[#allocation7 + $0xb40] sm:$0xff]
    %v526 = vld [vmem:[#allocation7 + $0xb48] sm:$0xff]
    %v527 = vld [vmem:[#allocation7 + $0xb50] sm:$0xff]
    %v528 = vld [vmem:[#allocation7 + $0xb58] sm:$0xff]
    %v529 = vld [vmem:[#allocation7 + $0xb60] sm:$0xff]
    %v530 = vld [vmem:[#allocation7 + $0xb68] sm:$0xff]
    %v531 = vld [vmem:[#allocation7 + $0xb70] sm:$0xff]
    %v532 = vld [vmem:[#allocation7 + $0xb78] sm:$0xff]
    %v533 = vld [vmem:[#allocation7 + $0xb80] sm:$0xff]
    %v534 = vld [vmem:[#allocation7 + $0xb88] sm:$0xff]
    %v535 = vld [vmem:[#allocation7 + $0xb90] sm:$0xff]
    %v536 = vld [vmem:[#allocation7 + $0xb98] sm:$0xff]
    %v537 = vld [vmem:[#allocation7 + $0xba0] sm:$0xff]
    %v538 = vld [vmem:[#allocation7 + $0xba8] sm:$0xff]
    %v539 = vld [vmem:[#allocation7 + $0xbb0] sm:$0xff]
    %v540 = vld [vmem:[#allocation7 + $0xbb8] sm:$0xff]
    %v541 = vld [vmem:[#allocation7 + $0xbc0] sm:$0xff]
    %v542 = vld [vmem:[#allocation7 + $0xbc8] sm:$0xff]
    %v543 = vld [vmem:[#allocation7 + $0xbd0] sm:$0xff]
    %v544 = vld [vmem:[#allocation7 + $0xbd8] sm:$0xff]
    %v545 = vld [vmem:[#allocation7 + $0xbe0] sm:$0xff]
    %v546 = vld [vmem:[#allocation7 + $0xbe8] sm:$0xff]
    %v547 = vld [vmem:[#allocation7 + $0xbf0] sm:$0xff]
    %v548 = vld [vmem:[#allocation7 + $0xbf8] sm:$0xff]
    %v549 = vld [vmem:[#allocation7 + $0xc00] sm:$0xff]
    %v550 = vld [vmem:[#allocation7 + $0xc08] sm:$0xff]
    %v551 = vld [vmem:[#allocation7 + $0xc10] sm:$0xff]
    %v552 = vld [vmem:[#allocation7 + $0xc18] sm:$0xff]
    %v553 = vld [vmem:[#allocation7 + $0xc20] sm:$0xff]
    %v554 = vld [vmem:[#allocation7 + $0xc28] sm:$0xff]
    %v555 = vld [vmem:[#allocation7 + $0xc30] sm:$0xff]
    %v556 = vld [vmem:[#allocation7 + $0xc38] sm:$0xff]
    %v557 = vld [vmem:[#allocation7 + $0xc40] sm:$0xff]
    %v558 = vld [vmem:[#allocation7 + $0xc48] sm:$0xff]
    %v559 = vld [vmem:[#allocation7 + $0xc50] sm:$0xff]
    %v560 = vld [vmem:[#allocation7 + $0xc58] sm:$0xff]
    %v561 = vld [vmem:[#allocation7 + $0xc60] sm:$0xff]
    %v562 = vld [vmem:[#allocation7 + $0xc68] sm:$0xff]
    %v563 = vld [vmem:[#allocation7 + $0xc70] sm:$0xff]
    %v564 = vld [vmem:[#allocation7 + $0xc78] sm:$0xff]
    %v565 = vld [vmem:[#allocation7 + $0xc80] sm:$0xff]
    %v566 = vld [vmem:[#allocation7 + $0xc88] sm:$0xff]
    %v567 = vld [vmem:[#allocation7 + $0xc90] sm:$0xff]
    %v568 = vld [vmem:[#allocation7 + $0xc98] sm:$0xff]
    %v569 = vld [vmem:[#allocation7 + $0xca0] sm:$0xff]
    %v570 = vld [vmem:[#allocation7 + $0xca8] sm:$0xff]
    %v571 = vld [vmem:[#allocation7 + $0xcb0] sm:$0xff]
    %v572 = vld [vmem:[#allocation7 + $0xcb8] sm:$0xff]
    %v573 = vld [vmem:[#allocation7 + $0xcc0] sm:$0xff]
    %v574 = vld [vmem:[#allocation7 + $0xcc8] sm:$0xff]
    %v575 = vld [vmem:[#allocation7 + $0xcd0] sm:$0xff]
    %v576 = vld [vmem:[#allocation7 + $0xcd8] sm:$0xff]
    %v577 = vld [vmem:[#allocation7 + $0xce0] sm:$0xff]
    %v578 = vld [vmem:[#allocation7 + $0xce8] sm:$0xff]
    %v579 = vld [vmem:[#allocation7 + $0xcf0] sm:$0xff]
    %v580 = vld [vmem:[#allocation7 + $0xcf8] sm:$0xff]
    %v581 = vld [vmem:[#allocation7 + $0xd00] sm:$0xff]
    %v582 = vld [vmem:[#allocation7 + $0xd08] sm:$0xff]
    %v583 = vld [vmem:[#allocation7 + $0xd10] sm:$0xff]
    %v584 = vld [vmem:[#allocation7 + $0xd18] sm:$0xff]
    %v585 = vld [vmem:[#allocation7 + $0xd20] sm:$0xff]
    %v586 = vld [vmem:[#allocation7 + $0xd28] sm:$0xff]
    %v587 = vld [vmem:[#allocation7 + $0xd30] sm:$0xff]
    %v588 = vld [vmem:[#allocation7 + $0xd38] sm:$0xff]
    %v589 = vld [vmem:[#allocation7 + $0xd40] sm:$0xff]
    %v590 = vld [vmem:[#allocation7 + $0xd48] sm:$0xff]
    %v591 = vld [vmem:[#allocation7 + $0xd50] sm:$0xff]
    %v592 = vld [vmem:[#allocation7 + $0xd58] sm:$0xff]
    %v593 = vld [vmem:[#allocation7 + $0xd60] sm:$0xff]
    %v594 = vld [vmem:[#allocation7 + $0xd68] sm:$0xff]
    %v595 = vld [vmem:[#allocation7 + $0xd70] sm:$0xff]
    %v596 = vld [vmem:[#allocation7 + $0xd78] sm:$0xff]
    %v597 = vld [vmem:[#allocation7 + $0xd80] sm:$0xff]
    %v598 = vld [vmem:[#allocation7 + $0xd88] sm:$0xff]
    %v599 = vld [vmem:[#allocation7 + $0xd90] sm:$0xff]
    %v600 = vld [vmem:[#allocation7 + $0xd98] sm:$0xff]
    %v601 = vld [vmem:[#allocation7 + $0xda0] sm:$0xff]
    %v602 = vld [vmem:[#allocation7 + $0xda8] sm:$0xff]
    %v603 = vld [vmem:[#allocation7 + $0xdb0] sm:$0xff]
    %v604 = vld [vmem:[#allocation7 + $0xdb8] sm:$0xff]
    %v605 = vld [vmem:[#allocation7 + $0xdc0] sm:$0xff]
    %v606 = vld [vmem:[#allocation7 + $0xdc8] sm:$0xff]
    %v607 = vld [vmem:[#allocation7 + $0xdd0] sm:$0xff]
    %v608 = vld [vmem:[#allocation7 + $0xdd8] sm:$0xff]
    %v609 = vld [vmem:[#allocation7 + $0xde0] sm:$0xff]
    %v610 = vld [vmem:[#allocation7 + $0xde8] sm:$0xff]
    %v611 = vld [vmem:[#allocation7 + $0xdf0] sm:$0xff]
    %v612 = vld [vmem:[#allocation7 + $0xdf8] sm:$0xff]
    %v613 = vld [vmem:[#allocation7 + $0xe00] sm:$0xff]
    %v614 = vld [vmem:[#allocation7 + $0xe08] sm:$0xff]
    %v615 = vld [vmem:[#allocation7 + $0xe10] sm:$0xff]
    %v616 = vld [vmem:[#allocation7 + $0xe18] sm:$0xff]
    %v617 = vld [vmem:[#allocation7 + $0xe20] sm:$0xff]
    %v618 = vld [vmem:[#allocation7 + $0xe28] sm:$0xff]
    %v619 = vld [vmem:[#allocation7 + $0xe30] sm:$0xff]
    %v620 = vld [vmem:[#allocation7 + $0xe38] sm:$0xff]
    %v621 = vld [vmem:[#allocation7 + $0xe40] sm:$0xff]
    %v622 = vld [vmem:[#allocation7 + $0xe48] sm:$0xff]
    %v623 = vld [vmem:[#allocation7 + $0xe50] sm:$0xff]
    %v624 = vld [vmem:[#allocation7 + $0xe58] sm:$0xff]
    %v625 = vld [vmem:[#allocation7 + $0xe60] sm:$0xff]
    %v626 = vld [vmem:[#allocation7 + $0xe68] sm:$0xff]
    %v627 = vld [vmem:[#allocation7 + $0xe70] sm:$0xff]
    %v628 = vld [vmem:[#allocation7 + $0xe78] sm:$0xff]
    %v629 = vld [vmem:[#allocation7 + $0xe80] sm:$0xff]
    %v630 = vld [vmem:[#allocation7 + $0xe88] sm:$0xff]
    %v631 = vld [vmem:[#allocation7 + $0xe90] sm:$0xff]
    %v632 = vld [vmem:[#allocation7 + $0xe98] sm:$0xff]
    %v633 = vld [vmem:[#allocation7 + $0xea0] sm:$0xff]
    %v634 = vld [vmem:[#allocation7 + $0xea8] sm:$0xff]
    %v635 = vld [vmem:[#allocation7 + $0xeb0] sm:$0xff]
    %v636 = vld [vmem:[#allocation7 + $0xeb8] sm:$0xff]
    %v637 = vld [vmem:[#allocation7 + $0xec0] sm:$0xff]
    %v638 = vld [vmem:[#allocation7 + $0xec8] sm:$0xff]
    %v639 = vld [vmem:[#allocation7 + $0xed0] sm:$0xff]
    %v640 = vld [vmem:[#allocation7 + $0xed8] sm:$0xff]
    %v641 = vld [vmem:[#allocation7 + $0xee0] sm:$0xff]
    %v642 = vld [vmem:[#allocation7 + $0xee8] sm:$0xff]
    %v643 = vld [vmem:[#allocation7 + $0xef0] sm:$0xff]
    %v644 = vld [vmem:[#allocation7 + $0xef8] sm:$0xff]
    %v645 = vld [vmem:[#allocation7 + $0xf00] sm:$0xff]
    %v646 = vld [vmem:[#allocation7 + $0xf08] sm:$0xff]
    %v647 = vld [vmem:[#allocation7 + $0xf10] sm:$0xff]
    %v648 = vld [vmem:[#allocation7 + $0xf18] sm:$0xff]
    %v649 = vld [vmem:[#allocation7 + $0xf20] sm:$0xff]
    %v650 = vld [vmem:[#allocation7 + $0xf28] sm:$0xff]
    %v651 = vld [vmem:[#allocation7 + $0xf30] sm:$0xff]
    %v652 = vld [vmem:[#allocation7 + $0xf38] sm:$0xff]
    %v653 = vld [vmem:[#allocation7 + $0xf40] sm:$0xff]
    %v654 = vld [vmem:[#allocation7 + $0xf48] sm:$0xff]
    %v655 = vld [vmem:[#allocation7 + $0xf50] sm:$0xff]
    %v656 = vld [vmem:[#allocation7 + $0xf58] sm:$0xff]
    %v657 = vld [vmem:[#allocation7 + $0xf60] sm:$0xff]
    %v658 = vld [vmem:[#allocation7 + $0xf68] sm:$0xff]
    %v659 = vld [vmem:[#allocation7 + $0xf70] sm:$0xff]
    %v660 = vld [vmem:[#allocation7 + $0xf78] sm:$0xff]
    %v661 = vld [vmem:[#allocation7 + $0xf80] sm:$0xff]
    %v662 = vld [vmem:[#allocation7 + $0xf88] sm:$0xff]
    %v663 = vld [vmem:[#allocation7 + $0xf90] sm:$0xff]
    %v664 = vld [vmem:[#allocation7 + $0xf98] sm:$0xff]
    %v665 = vld [vmem:[#allocation7 + $0xfa0] sm:$0xff]
    %v666 = vld [vmem:[#allocation7 + $0xfa8] sm:$0xff]
    %v667 = vld [vmem:[#allocation7 + $0xfb0] sm:$0xff]
    %v668 = vld [vmem:[#allocation7 + $0xfb8] sm:$0xff]
    %v669 = vld [vmem:[#allocation7 + $0xfc0] sm:$0xff]
    %v670 = vld [vmem:[#allocation7 + $0xfc8] sm:$0xff]
    %v671 = vld [vmem:[#allocation7 + $0xfd0] sm:$0xff]
    %v672 = vld [vmem:[#allocation7 + $0xfd8] sm:$0xff]
    %v673 = vld [vmem:[#allocation7 + $0xfe0] sm:$0xff]
    %v674 = vld [vmem:[#allocation7 + $0xfe8] sm:$0xff]
    %v675 = vld [vmem:[#allocation7 + $0xff0] sm:$0xff]
    %v676 = vld [vmem:[#allocation7 + $0xff8] sm:$0xff]
    %v1189 = vunpack.c.l.b16 %v165
    %v1190 = vunpack.c.h.b16 %v165
    %v1191 = vunpack.c.l.b16 %v166
    %v1192 = vunpack.c.h.b16 %v166
    %v1193 = vunpack.c.l.b16 %v167
    %v1194 = vunpack.c.h.b16 %v167
    %v1195 = vunpack.c.l.b16 %v168
    %v1196 = vunpack.c.h.b16 %v168
    %v1197 = vunpack.c.l.b16 %v169
    %v1198 = vunpack.c.h.b16 %v169
    %v1199 = vunpack.c.l.b16 %v170
    %v1200 = vunpack.c.h.b16 %v170
    %v1201 = vunpack.c.l.b16 %v171
    %v1202 = vunpack.c.h.b16 %v171
    %v1203 = vunpack.c.l.b16 %v172
    %v1204 = vunpack.c.h.b16 %v172
    %v1205 = vunpack.c.l.b16 %v173
    %v1206 = vunpack.c.h.b16 %v173
    %v1207 = vunpack.c.l.b16 %v174
    %v1208 = vunpack.c.h.b16 %v174
    %v1209 = vunpack.c.l.b16 %v175
    %v1210 = vunpack.c.h.b16 %v175
    %v1211 = vunpack.c.l.b16 %v176
    %v1212 = vunpack.c.h.b16 %v176
    %v1213 = vunpack.c.l.b16 %v177
    %v1214 = vunpack.c.h.b16 %v177
    %v1215 = vunpack.c.l.b16 %v178
    %v1216 = vunpack.c.h.b16 %v178
    %v1217 = vunpack.c.l.b16 %v179
    %v1218 = vunpack.c.h.b16 %v179
    %v1219 = vunpack.c.l.b16 %v180
    %v1220 = vunpack.c.h.b16 %v180
    %v1221 = vunpack.c.l.b16 %v181
    %v1222 = vunpack.c.h.b16 %v181
    %v1223 = vunpack.c.l.b16 %v182
    %v1224 = vunpack.c.h.b16 %v182
    %v1225 = vunpack.c.l.b16 %v183
    %v1226 = vunpack.c.h.b16 %v183
    %v1227 = vunpack.c.l.b16 %v184
    %v1228 = vunpack.c.h.b16 %v184
    %v1229 = vunpack.c.l.b16 %v185
    %v1230 = vunpack.c.h.b16 %v185
    %v1231 = vunpack.c.l.b16 %v186
    %v1232 = vunpack.c.h.b16 %v186
    %v1233 = vunpack.c.l.b16 %v187
    %v1234 = vunpack.c.h.b16 %v187
    %v1235 = vunpack.c.l.b16 %v188
    %v1236 = vunpack.c.h.b16 %v188
    %v1237 = vunpack.c.l.b16 %v189
    %v1238 = vunpack.c.h.b16 %v189
    %v1239 = vunpack.c.l.b16 %v190
    %v1240 = vunpack.c.h.b16 %v190
    %v1241 = vunpack.c.l.b16 %v191
    %v1242 = vunpack.c.h.b16 %v191
    %v1243 = vunpack.c.l.b16 %v192
    %v1244 = vunpack.c.h.b16 %v192
    %v1245 = vunpack.c.l.b16 %v193
    %v1246 = vunpack.c.h.b16 %v193
    %v1247 = vunpack.c.l.b16 %v194
    %v1248 = vunpack.c.h.b16 %v194
    %v1249 = vunpack.c.l.b16 %v195
    %v1250 = vunpack.c.h.b16 %v195
    %v1251 = vunpack.c.l.b16 %v196
    %v1252 = vunpack.c.h.b16 %v196
    %v1253 = vunpack.c.l.b16 %v197
    %v1254 = vunpack.c.h.b16 %v197
    %v1255 = vunpack.c.l.b16 %v198
    %v1256 = vunpack.c.h.b16 %v198
    %v1257 = vunpack.c.l.b16 %v199
    %v1258 = vunpack.c.h.b16 %v199
    %v1259 = vunpack.c.l.b16 %v200
    %v1260 = vunpack.c.h.b16 %v200
    %v1261 = vunpack.c.l.b16 %v201
    %v1262 = vunpack.c.h.b16 %v201
    %v1263 = vunpack.c.l.b16 %v202
    %v1264 = vunpack.c.h.b16 %v202
    %v1265 = vunpack.c.l.b16 %v203
    %v1266 = vunpack.c.h.b16 %v203
    %v1267 = vunpack.c.l.b16 %v204
    %v1268 = vunpack.c.h.b16 %v204
    %v1269 = vunpack.c.l.b16 %v205
    %v1270 = vunpack.c.h.b16 %v205
    %v1271 = vunpack.c.l.b16 %v206
    %v1272 = vunpack.c.h.b16 %v206
    %v1273 = vunpack.c.l.b16 %v207
    %v1274 = vunpack.c.h.b16 %v207
    %v1275 = vunpack.c.l.b16 %v208
    %v1276 = vunpack.c.h.b16 %v208
    %v1277 = vunpack.c.l.b16 %v209
    %v1278 = vunpack.c.h.b16 %v209
    %v1279 = vunpack.c.l.b16 %v210
    %v1280 = vunpack.c.h.b16 %v210
    %v1281 = vunpack.c.l.b16 %v211
    %v1282 = vunpack.c.h.b16 %v211
    %v1283 = vunpack.c.l.b16 %v212
    %v1284 = vunpack.c.h.b16 %v212
    %v1285 = vunpack.c.l.b16 %v213
    %v1286 = vunpack.c.h.b16 %v213
    %v1287 = vunpack.c.l.b16 %v214
    %v1288 = vunpack.c.h.b16 %v214
    %v1289 = vunpack.c.l.b16 %v215
    %v1290 = vunpack.c.h.b16 %v215
    %v1291 = vunpack.c.l.b16 %v216
    %v1292 = vunpack.c.h.b16 %v216
    %v1293 = vunpack.c.l.b16 %v217
    %v1294 = vunpack.c.h.b16 %v217
    %v1295 = vunpack.c.l.b16 %v218
    %v1296 = vunpack.c.h.b16 %v218
    %v1297 = vunpack.c.l.b16 %v219
    %v1298 = vunpack.c.h.b16 %v219
    %v1299 = vunpack.c.l.b16 %v220
    %v1300 = vunpack.c.h.b16 %v220
    %v1301 = vunpack.c.l.b16 %v221
    %v1302 = vunpack.c.h.b16 %v221
    %v1303 = vunpack.c.l.b16 %v222
    %v1304 = vunpack.c.h.b16 %v222
    %v1305 = vunpack.c.l.b16 %v223
    %v1306 = vunpack.c.h.b16 %v223
    %v1307 = vunpack.c.l.b16 %v224
    %v1308 = vunpack.c.h.b16 %v224
    %v1309 = vunpack.c.l.b16 %v225
    %v1310 = vunpack.c.h.b16 %v225
    %v1311 = vunpack.c.l.b16 %v226
    %v1312 = vunpack.c.h.b16 %v226
    %v1313 = vunpack.c.l.b16 %v227
    %v1314 = vunpack.c.h.b16 %v227
    %v1315 = vunpack.c.l.b16 %v228
    %v1316 = vunpack.c.h.b16 %v228
    %v1317 = vunpack.c.l.b16 %v229
    %v1318 = vunpack.c.h.b16 %v229
    %v1319 = vunpack.c.l.b16 %v230
    %v1320 = vunpack.c.h.b16 %v230
    %v1321 = vunpack.c.l.b16 %v231
    %v1322 = vunpack.c.h.b16 %v231
    %v1323 = vunpack.c.l.b16 %v232
    %v1324 = vunpack.c.h.b16 %v232
    %v1325 = vunpack.c.l.b16 %v233
    %v1326 = vunpack.c.h.b16 %v233
    %v1327 = vunpack.c.l.b16 %v234
    %v1328 = vunpack.c.h.b16 %v234
    %v1329 = vunpack.c.l.b16 %v235
    %v1330 = vunpack.c.h.b16 %v235
    %v1331 = vunpack.c.l.b16 %v236
    %v1332 = vunpack.c.h.b16 %v236
    %v1333 = vunpack.c.l.b16 %v237
    %v1334 = vunpack.c.h.b16 %v237
    %v1335 = vunpack.c.l.b16 %v238
    %v1336 = vunpack.c.h.b16 %v238
    %v1337 = vunpack.c.l.b16 %v239
    %v1338 = vunpack.c.h.b16 %v239
    %v1339 = vunpack.c.l.b16 %v240
    %v1340 = vunpack.c.h.b16 %v240
    %v1341 = vunpack.c.l.b16 %v241
    %v1342 = vunpack.c.h.b16 %v241
    %v1343 = vunpack.c.l.b16 %v242
    %v1344 = vunpack.c.h.b16 %v242
    %v1345 = vunpack.c.l.b16 %v243
    %v1346 = vunpack.c.h.b16 %v243
    %v1347 = vunpack.c.l.b16 %v244
    %v1348 = vunpack.c.h.b16 %v244
    %v1349 = vunpack.c.l.b16 %v245
    %v1350 = vunpack.c.h.b16 %v245
    %v1351 = vunpack.c.l.b16 %v246
    %v1352 = vunpack.c.h.b16 %v246
    %v1353 = vunpack.c.l.b16 %v247
    %v1354 = vunpack.c.h.b16 %v247
    %v1355 = vunpack.c.l.b16 %v248
    %v1356 = vunpack.c.h.b16 %v248
    %v1357 = vunpack.c.l.b16 %v249
    %v1358 = vunpack.c.h.b16 %v249
    %v1359 = vunpack.c.l.b16 %v250
    %v1360 = vunpack.c.h.b16 %v250
    %v1361 = vunpack.c.l.b16 %v251
    %v1362 = vunpack.c.h.b16 %v251
    %v1363 = vunpack.c.l.b16 %v252
    %v1364 = vunpack.c.h.b16 %v252
    %v1365 = vunpack.c.l.b16 %v253
    %v1366 = vunpack.c.h.b16 %v253
    %v1367 = vunpack.c.l.b16 %v254
    %v1368 = vunpack.c.h.b16 %v254
    %v1369 = vunpack.c.l.b16 %v255
    %v1370 = vunpack.c.h.b16 %v255
    %v1371 = vunpack.c.l.b16 %v256
    %v1372 = vunpack.c.h.b16 %v256
    %v1373 = vunpack.c.l.b16 %v257
    %v1374 = vunpack.c.h.b16 %v257
    %v1375 = vunpack.c.l.b16 %v258
    %v1376 = vunpack.c.h.b16 %v258
    %v1377 = vunpack.c.l.b16 %v259
    %v1378 = vunpack.c.h.b16 %v259
    %v1379 = vunpack.c.l.b16 %v260
    %v1380 = vunpack.c.h.b16 %v260
    %v1381 = vunpack.c.l.b16 %v261
    %v1382 = vunpack.c.h.b16 %v261
    %v1383 = vunpack.c.l.b16 %v262
    %v1384 = vunpack.c.h.b16 %v262
    %v1385 = vunpack.c.l.b16 %v263
    %v1386 = vunpack.c.h.b16 %v263
    %v1387 = vunpack.c.l.b16 %v264
    %v1388 = vunpack.c.h.b16 %v264
    %v1389 = vunpack.c.l.b16 %v265
    %v1390 = vunpack.c.h.b16 %v265
    %v1391 = vunpack.c.l.b16 %v266
    %v1392 = vunpack.c.h.b16 %v266
    %v1393 = vunpack.c.l.b16 %v267
    %v1394 = vunpack.c.h.b16 %v267
    %v1395 = vunpack.c.l.b16 %v268
    %v1396 = vunpack.c.h.b16 %v268
    %v1397 = vunpack.c.l.b16 %v269
    %v1398 = vunpack.c.h.b16 %v269
    %v1399 = vunpack.c.l.b16 %v270
    %v1400 = vunpack.c.h.b16 %v270
    %v1401 = vunpack.c.l.b16 %v271
    %v1402 = vunpack.c.h.b16 %v271
    %v1403 = vunpack.c.l.b16 %v272
    %v1404 = vunpack.c.h.b16 %v272
    %v1405 = vunpack.c.l.b16 %v273
    %v1406 = vunpack.c.h.b16 %v273
    %v1407 = vunpack.c.l.b16 %v274
    %v1408 = vunpack.c.h.b16 %v274
    %v1409 = vunpack.c.l.b16 %v275
    %v1410 = vunpack.c.h.b16 %v275
    %v1411 = vunpack.c.l.b16 %v276
    %v1412 = vunpack.c.h.b16 %v276
    %v1413 = vunpack.c.l.b16 %v277
    %v1414 = vunpack.c.h.b16 %v277
    %v1415 = vunpack.c.l.b16 %v278
    %v1416 = vunpack.c.h.b16 %v278
    %v1417 = vunpack.c.l.b16 %v279
    %v1418 = vunpack.c.h.b16 %v279
    %v1419 = vunpack.c.l.b16 %v280
    %v1420 = vunpack.c.h.b16 %v280
    %v1421 = vunpack.c.l.b16 %v281
    %v1422 = vunpack.c.h.b16 %v281
    %v1423 = vunpack.c.l.b16 %v282
    %v1424 = vunpack.c.h.b16 %v282
    %v1425 = vunpack.c.l.b16 %v283
    %v1426 = vunpack.c.h.b16 %v283
    %v1427 = vunpack.c.l.b16 %v284
    %v1428 = vunpack.c.h.b16 %v284
    %v1429 = vunpack.c.l.b16 %v285
    %v1430 = vunpack.c.h.b16 %v285
    %v1431 = vunpack.c.l.b16 %v286
    %v1432 = vunpack.c.h.b16 %v286
    %v1433 = vunpack.c.l.b16 %v287
    %v1434 = vunpack.c.h.b16 %v287
    %v1435 = vunpack.c.l.b16 %v288
    %v1436 = vunpack.c.h.b16 %v288
    %v1437 = vunpack.c.l.b16 %v289
    %v1438 = vunpack.c.h.b16 %v289
    %v1439 = vunpack.c.l.b16 %v290
    %v1440 = vunpack.c.h.b16 %v290
    %v1441 = vunpack.c.l.b16 %v291
    %v1442 = vunpack.c.h.b16 %v291
    %v1443 = vunpack.c.l.b16 %v292
    %v1444 = vunpack.c.h.b16 %v292
    %v1445 = vunpack.c.l.b16 %v293
    %v1446 = vunpack.c.h.b16 %v293
    %v1447 = vunpack.c.l.b16 %v294
    %v1448 = vunpack.c.h.b16 %v294
    %v1449 = vunpack.c.l.b16 %v295
    %v1450 = vunpack.c.h.b16 %v295
    %v1451 = vunpack.c.l.b16 %v296
    %v1452 = vunpack.c.h.b16 %v296
    %v1453 = vunpack.c.l.b16 %v297
    %v1454 = vunpack.c.h.b16 %v297
    %v1455 = vunpack.c.l.b16 %v298
    %v1456 = vunpack.c.h.b16 %v298
    %v1457 = vunpack.c.l.b16 %v299
    %v1458 = vunpack.c.h.b16 %v299
    %v1459 = vunpack.c.l.b16 %v300
    %v1460 = vunpack.c.h.b16 %v300
    %v1461 = vunpack.c.l.b16 %v301
    %v1462 = vunpack.c.h.b16 %v301
    %v1463 = vunpack.c.l.b16 %v302
    %v1464 = vunpack.c.h.b16 %v302
    %v1465 = vunpack.c.l.b16 %v303
    %v1466 = vunpack.c.h.b16 %v303
    %v1467 = vunpack.c.l.b16 %v304
    %v1468 = vunpack.c.h.b16 %v304
    %v1469 = vunpack.c.l.b16 %v305
    %v1470 = vunpack.c.h.b16 %v305
    %v1471 = vunpack.c.l.b16 %v306
    %v1472 = vunpack.c.h.b16 %v306
    %v1473 = vunpack.c.l.b16 %v307
    %v1474 = vunpack.c.h.b16 %v307
    %v1475 = vunpack.c.l.b16 %v308
    %v1476 = vunpack.c.h.b16 %v308
    %v1477 = vunpack.c.l.b16 %v309
    %v1478 = vunpack.c.h.b16 %v309
    %v1479 = vunpack.c.l.b16 %v310
    %v1480 = vunpack.c.h.b16 %v310
    %v1481 = vunpack.c.l.b16 %v311
    %v1482 = vunpack.c.h.b16 %v311
    %v1483 = vunpack.c.l.b16 %v312
    %v1484 = vunpack.c.h.b16 %v312
    %v1485 = vunpack.c.l.b16 %v313
    %v1486 = vunpack.c.h.b16 %v313
    %v1487 = vunpack.c.l.b16 %v314
    %v1488 = vunpack.c.h.b16 %v314
    %v1489 = vunpack.c.l.b16 %v315
    %v1490 = vunpack.c.h.b16 %v315
    %v1491 = vunpack.c.l.b16 %v316
    %v1492 = vunpack.c.h.b16 %v316
    %v1493 = vunpack.c.l.b16 %v317
    %v1494 = vunpack.c.h.b16 %v317
    %v1495 = vunpack.c.l.b16 %v318
    %v1496 = vunpack.c.h.b16 %v318
    %v1497 = vunpack.c.l.b16 %v319
    %v1498 = vunpack.c.h.b16 %v319
    %v1499 = vunpack.c.l.b16 %v320
    %v1500 = vunpack.c.h.b16 %v320
    %v1501 = vunpack.c.l.b16 %v321
    %v1502 = vunpack.c.h.b16 %v321
    %v1503 = vunpack.c.l.b16 %v322
    %v1504 = vunpack.c.h.b16 %v322
    %v1505 = vunpack.c.l.b16 %v323
    %v1506 = vunpack.c.h.b16 %v323
    %v1507 = vunpack.c.l.b16 %v324
    %v1508 = vunpack.c.h.b16 %v324
    %v1509 = vunpack.c.l.b16 %v325
    %v1510 = vunpack.c.h.b16 %v325
    %v1511 = vunpack.c.l.b16 %v326
    %v1512 = vunpack.c.h.b16 %v326
    %v1513 = vunpack.c.l.b16 %v327
    %v1514 = vunpack.c.h.b16 %v327
    %v1515 = vunpack.c.l.b16 %v328
    %v1516 = vunpack.c.h.b16 %v328
    %v1517 = vunpack.c.l.b16 %v329
    %v1518 = vunpack.c.h.b16 %v329
    %v1519 = vunpack.c.l.b16 %v330
    %v1520 = vunpack.c.h.b16 %v330
    %v1521 = vunpack.c.l.b16 %v331
    %v1522 = vunpack.c.h.b16 %v331
    %v1523 = vunpack.c.l.b16 %v332
    %v1524 = vunpack.c.h.b16 %v332
    %v1525 = vunpack.c.l.b16 %v333
    %v1526 = vunpack.c.h.b16 %v333
    %v1527 = vunpack.c.l.b16 %v334
    %v1528 = vunpack.c.h.b16 %v334
    %v1529 = vunpack.c.l.b16 %v335
    %v1530 = vunpack.c.h.b16 %v335
    %v1531 = vunpack.c.l.b16 %v336
    %v1532 = vunpack.c.h.b16 %v336
    %v1533 = vunpack.c.l.b16 %v337
    %v1534 = vunpack.c.h.b16 %v337
    %v1535 = vunpack.c.l.b16 %v338
    %v1536 = vunpack.c.h.b16 %v338
    %v1537 = vunpack.c.l.b16 %v339
    %v1538 = vunpack.c.h.b16 %v339
    %v1539 = vunpack.c.l.b16 %v340
    %v1540 = vunpack.c.h.b16 %v340
    %v1541 = vunpack.c.l.b16 %v341
    %v1542 = vunpack.c.h.b16 %v341
    %v1543 = vunpack.c.l.b16 %v342
    %v1544 = vunpack.c.h.b16 %v342
    %v1545 = vunpack.c.l.b16 %v343
    %v1546 = vunpack.c.h.b16 %v343
    %v1547 = vunpack.c.l.b16 %v344
    %v1548 = vunpack.c.h.b16 %v344
    %v1549 = vunpack.c.l.b16 %v345
    %v1550 = vunpack.c.h.b16 %v345
    %v1551 = vunpack.c.l.b16 %v346
    %v1552 = vunpack.c.h.b16 %v346
    %v1553 = vunpack.c.l.b16 %v347
    %v1554 = vunpack.c.h.b16 %v347
    %v1555 = vunpack.c.l.b16 %v348
    %v1556 = vunpack.c.h.b16 %v348
    %v1557 = vunpack.c.l.b16 %v349
    %v1558 = vunpack.c.h.b16 %v349
    %v1559 = vunpack.c.l.b16 %v350
    %v1560 = vunpack.c.h.b16 %v350
    %v1561 = vunpack.c.l.b16 %v351
    %v1562 = vunpack.c.h.b16 %v351
    %v1563 = vunpack.c.l.b16 %v352
    %v1564 = vunpack.c.h.b16 %v352
    %v1565 = vunpack.c.l.b16 %v353
    %v1566 = vunpack.c.h.b16 %v353
    %v1567 = vunpack.c.l.b16 %v354
    %v1568 = vunpack.c.h.b16 %v354
    %v1569 = vunpack.c.l.b16 %v355
    %v1570 = vunpack.c.h.b16 %v355
    %v1571 = vunpack.c.l.b16 %v356
    %v1572 = vunpack.c.h.b16 %v356
    %v1573 = vunpack.c.l.b16 %v357
    %v1574 = vunpack.c.h.b16 %v357
    %v1575 = vunpack.c.l.b16 %v358
    %v1576 = vunpack.c.h.b16 %v358
    %v1577 = vunpack.c.l.b16 %v359
    %v1578 = vunpack.c.h.b16 %v359
    %v1579 = vunpack.c.l.b16 %v360
    %v1580 = vunpack.c.h.b16 %v360
    %v1581 = vunpack.c.l.b16 %v361
    %v1582 = vunpack.c.h.b16 %v361
    %v1583 = vunpack.c.l.b16 %v362
    %v1584 = vunpack.c.h.b16 %v362
    %v1585 = vunpack.c.l.b16 %v363
    %v1586 = vunpack.c.h.b16 %v363
    %v1587 = vunpack.c.l.b16 %v364
    %v1588 = vunpack.c.h.b16 %v364
    %v1589 = vunpack.c.l.b16 %v365
    %v1590 = vunpack.c.h.b16 %v365
    %v1591 = vunpack.c.l.b16 %v366
    %v1592 = vunpack.c.h.b16 %v366
    %v1593 = vunpack.c.l.b16 %v367
    %v1594 = vunpack.c.h.b16 %v367
    %v1595 = vunpack.c.l.b16 %v368
    %v1596 = vunpack.c.h.b16 %v368
    %v1597 = vunpack.c.l.b16 %v369
    %v1598 = vunpack.c.h.b16 %v369
    %v1599 = vunpack.c.l.b16 %v370
    %v1600 = vunpack.c.h.b16 %v370
    %v1601 = vunpack.c.l.b16 %v371
    %v1602 = vunpack.c.h.b16 %v371
    %v1603 = vunpack.c.l.b16 %v372
    %v1604 = vunpack.c.h.b16 %v372
    %v1605 = vunpack.c.l.b16 %v373
    %v1606 = vunpack.c.h.b16 %v373
    %v1607 = vunpack.c.l.b16 %v374
    %v1608 = vunpack.c.h.b16 %v374
    %v1609 = vunpack.c.l.b16 %v375
    %v1610 = vunpack.c.h.b16 %v375
    %v1611 = vunpack.c.l.b16 %v376
    %v1612 = vunpack.c.h.b16 %v376
    %v1613 = vunpack.c.l.b16 %v377
    %v1614 = vunpack.c.h.b16 %v377
    %v1615 = vunpack.c.l.b16 %v378
    %v1616 = vunpack.c.h.b16 %v378
    %v1617 = vunpack.c.l.b16 %v379
    %v1618 = vunpack.c.h.b16 %v379
    %v1619 = vunpack.c.l.b16 %v380
    %v1620 = vunpack.c.h.b16 %v380
    %v1621 = vunpack.c.l.b16 %v381
    %v1622 = vunpack.c.h.b16 %v381
    %v1623 = vunpack.c.l.b16 %v382
    %v1624 = vunpack.c.h.b16 %v382
    %v1625 = vunpack.c.l.b16 %v383
    %v1626 = vunpack.c.h.b16 %v383
    %v1627 = vunpack.c.l.b16 %v384
    %v1628 = vunpack.c.h.b16 %v384
    %v1629 = vunpack.c.l.b16 %v385
    %v1630 = vunpack.c.h.b16 %v385
    %v1631 = vunpack.c.l.b16 %v386
    %v1632 = vunpack.c.h.b16 %v386
    %v1633 = vunpack.c.l.b16 %v387
    %v1634 = vunpack.c.h.b16 %v387
    %v1635 = vunpack.c.l.b16 %v388
    %v1636 = vunpack.c.h.b16 %v388
    %v1637 = vunpack.c.l.b16 %v389
    %v1638 = vunpack.c.h.b16 %v389
    %v1639 = vunpack.c.l.b16 %v390
    %v1640 = vunpack.c.h.b16 %v390
    %v1641 = vunpack.c.l.b16 %v391
    %v1642 = vunpack.c.h.b16 %v391
    %v1643 = vunpack.c.l.b16 %v392
    %v1644 = vunpack.c.h.b16 %v392
    %v1645 = vunpack.c.l.b16 %v393
    %v1646 = vunpack.c.h.b16 %v393
    %v1647 = vunpack.c.l.b16 %v394
    %v1648 = vunpack.c.h.b16 %v394
    %v1649 = vunpack.c.l.b16 %v395
    %v1650 = vunpack.c.h.b16 %v395
    %v1651 = vunpack.c.l.b16 %v396
    %v1652 = vunpack.c.h.b16 %v396
    %v1653 = vunpack.c.l.b16 %v397
    %v1654 = vunpack.c.h.b16 %v397
    %v1655 = vunpack.c.l.b16 %v398
    %v1656 = vunpack.c.h.b16 %v398
    %v1657 = vunpack.c.l.b16 %v399
    %v1658 = vunpack.c.h.b16 %v399
    %v1659 = vunpack.c.l.b16 %v400
    %v1660 = vunpack.c.h.b16 %v400
    %v1661 = vunpack.c.l.b16 %v401
    %v1662 = vunpack.c.h.b16 %v401
    %v1663 = vunpack.c.l.b16 %v402
    %v1664 = vunpack.c.h.b16 %v402
    %v1665 = vunpack.c.l.b16 %v403
    %v1666 = vunpack.c.h.b16 %v403
    %v1667 = vunpack.c.l.b16 %v404
    %v1668 = vunpack.c.h.b16 %v404
    %v1669 = vunpack.c.l.b16 %v405
    %v1670 = vunpack.c.h.b16 %v405
    %v1671 = vunpack.c.l.b16 %v406
    %v1672 = vunpack.c.h.b16 %v406
    %v1673 = vunpack.c.l.b16 %v407
    %v1674 = vunpack.c.h.b16 %v407
    %v1675 = vunpack.c.l.b16 %v408
    %v1676 = vunpack.c.h.b16 %v408
    %v1677 = vunpack.c.l.b16 %v409
    %v1678 = vunpack.c.h.b16 %v409
    %v1679 = vunpack.c.l.b16 %v410
    %v1680 = vunpack.c.h.b16 %v410
    %v1681 = vunpack.c.l.b16 %v411
    %v1682 = vunpack.c.h.b16 %v411
    %v1683 = vunpack.c.l.b16 %v412
    %v1684 = vunpack.c.h.b16 %v412
    %v1685 = vunpack.c.l.b16 %v413
    %v1686 = vunpack.c.h.b16 %v413
    %v1687 = vunpack.c.l.b16 %v414
    %v1688 = vunpack.c.h.b16 %v414
    %v1689 = vunpack.c.l.b16 %v415
    %v1690 = vunpack.c.h.b16 %v415
    %v1691 = vunpack.c.l.b16 %v416
    %v1692 = vunpack.c.h.b16 %v416
    %v1693 = vunpack.c.l.b16 %v417
    %v1694 = vunpack.c.h.b16 %v417
    %v1695 = vunpack.c.l.b16 %v418
    %v1696 = vunpack.c.h.b16 %v418
    %v1697 = vunpack.c.l.b16 %v419
    %v1698 = vunpack.c.h.b16 %v419
    %v1699 = vunpack.c.l.b16 %v420
    %v1700 = vunpack.c.h.b16 %v420
    %v1701 = vunpack.c.l.b16 %v421
    %v1702 = vunpack.c.h.b16 %v421
    %v1703 = vunpack.c.l.b16 %v422
    %v1704 = vunpack.c.h.b16 %v422
    %v1705 = vunpack.c.l.b16 %v423
    %v1706 = vunpack.c.h.b16 %v423
    %v1707 = vunpack.c.l.b16 %v424
    %v1708 = vunpack.c.h.b16 %v424
    %v1709 = vunpack.c.l.b16 %v425
    %v1710 = vunpack.c.h.b16 %v425
    %v1711 = vunpack.c.l.b16 %v426
    %v1712 = vunpack.c.h.b16 %v426
    %v1713 = vunpack.c.l.b16 %v427
    %v1714 = vunpack.c.h.b16 %v427
    %v1715 = vunpack.c.l.b16 %v428
    %v1716 = vunpack.c.h.b16 %v428
    %v1717 = vunpack.c.l.b16 %v429
    %v1718 = vunpack.c.h.b16 %v429
    %v1719 = vunpack.c.l.b16 %v430
    %v1720 = vunpack.c.h.b16 %v430
    %v1721 = vunpack.c.l.b16 %v431
    %v1722 = vunpack.c.h.b16 %v431
    %v1723 = vunpack.c.l.b16 %v432
    %v1724 = vunpack.c.h.b16 %v432
    %v1725 = vunpack.c.l.b16 %v433
    %v1726 = vunpack.c.h.b16 %v433
    %v1727 = vunpack.c.l.b16 %v434
    %v1728 = vunpack.c.h.b16 %v434
    %v1729 = vunpack.c.l.b16 %v435
    %v1730 = vunpack.c.h.b16 %v435
    %v1731 = vunpack.c.l.b16 %v436
    %v1732 = vunpack.c.h.b16 %v436
    %v1733 = vunpack.c.l.b16 %v437
    %v1734 = vunpack.c.h.b16 %v437
    %v1735 = vunpack.c.l.b16 %v438
    %v1736 = vunpack.c.h.b16 %v438
    %v1737 = vunpack.c.l.b16 %v439
    %v1738 = vunpack.c.h.b16 %v439
    %v1739 = vunpack.c.l.b16 %v440
    %v1740 = vunpack.c.h.b16 %v440
    %v1741 = vunpack.c.l.b16 %v441
    %v1742 = vunpack.c.h.b16 %v441
    %v1743 = vunpack.c.l.b16 %v442
    %v1744 = vunpack.c.h.b16 %v442
    %v1745 = vunpack.c.l.b16 %v443
    %v1746 = vunpack.c.h.b16 %v443
    %v1747 = vunpack.c.l.b16 %v444
    %v1748 = vunpack.c.h.b16 %v444
    %v1749 = vunpack.c.l.b16 %v445
    %v1750 = vunpack.c.h.b16 %v445
    %v1751 = vunpack.c.l.b16 %v446
    %v1752 = vunpack.c.h.b16 %v446
    %v1753 = vunpack.c.l.b16 %v447
    %v1754 = vunpack.c.h.b16 %v447
    %v1755 = vunpack.c.l.b16 %v448
    %v1756 = vunpack.c.h.b16 %v448
    %v1757 = vunpack.c.l.b16 %v449
    %v1758 = vunpack.c.h.b16 %v449
    %v1759 = vunpack.c.l.b16 %v450
    %v1760 = vunpack.c.h.b16 %v450
    %v1761 = vunpack.c.l.b16 %v451
    %v1762 = vunpack.c.h.b16 %v451
    %v1763 = vunpack.c.l.b16 %v452
    %v1764 = vunpack.c.h.b16 %v452
    %v1765 = vunpack.c.l.b16 %v453
    %v1766 = vunpack.c.h.b16 %v453
    %v1767 = vunpack.c.l.b16 %v454
    %v1768 = vunpack.c.h.b16 %v454
    %v1769 = vunpack.c.l.b16 %v455
    %v1770 = vunpack.c.h.b16 %v455
    %v1771 = vunpack.c.l.b16 %v456
    %v1772 = vunpack.c.h.b16 %v456
    %v1773 = vunpack.c.l.b16 %v457
    %v1774 = vunpack.c.h.b16 %v457
    %v1775 = vunpack.c.l.b16 %v458
    %v1776 = vunpack.c.h.b16 %v458
    %v1777 = vunpack.c.l.b16 %v459
    %v1778 = vunpack.c.h.b16 %v459
    %v1779 = vunpack.c.l.b16 %v460
    %v1780 = vunpack.c.h.b16 %v460
    %v1781 = vunpack.c.l.b16 %v461
    %v1782 = vunpack.c.h.b16 %v461
    %v1783 = vunpack.c.l.b16 %v462
    %v1784 = vunpack.c.h.b16 %v462
    %v1785 = vunpack.c.l.b16 %v463
    %v1786 = vunpack.c.h.b16 %v463
    %v1787 = vunpack.c.l.b16 %v464
    %v1788 = vunpack.c.h.b16 %v464
    %v1789 = vunpack.c.l.b16 %v465
    %v1790 = vunpack.c.h.b16 %v465
    %v1791 = vunpack.c.l.b16 %v466
    %v1792 = vunpack.c.h.b16 %v466
    %v1793 = vunpack.c.l.b16 %v467
    %v1794 = vunpack.c.h.b16 %v467
    %v1795 = vunpack.c.l.b16 %v468
    %v1796 = vunpack.c.h.b16 %v468
    %v1797 = vunpack.c.l.b16 %v469
    %v1798 = vunpack.c.h.b16 %v469
    %v1799 = vunpack.c.l.b16 %v470
    %v1800 = vunpack.c.h.b16 %v470
    %v1801 = vunpack.c.l.b16 %v471
    %v1802 = vunpack.c.h.b16 %v471
    %v1803 = vunpack.c.l.b16 %v472
    %v1804 = vunpack.c.h.b16 %v472
    %v1805 = vunpack.c.l.b16 %v473
    %v1806 = vunpack.c.h.b16 %v473
    %v1807 = vunpack.c.l.b16 %v474
    %v1808 = vunpack.c.h.b16 %v474
    %v1809 = vunpack.c.l.b16 %v475
    %v1810 = vunpack.c.h.b16 %v475
    %v1811 = vunpack.c.l.b16 %v476
    %v1812 = vunpack.c.h.b16 %v476
    %v1813 = vunpack.c.l.b16 %v477
    %v1814 = vunpack.c.h.b16 %v477
    %v1815 = vunpack.c.l.b16 %v478
    %v1816 = vunpack.c.h.b16 %v478
    %v1817 = vunpack.c.l.b16 %v479
    %v1818 = vunpack.c.h.b16 %v479
    %v1819 = vunpack.c.l.b16 %v480
    %v1820 = vunpack.c.h.b16 %v480
    %v1821 = vunpack.c.l.b16 %v481
    %v1822 = vunpack.c.h.b16 %v481
    %v1823 = vunpack.c.l.b16 %v482
    %v1824 = vunpack.c.h.b16 %v482
    %v1825 = vunpack.c.l.b16 %v483
    %v1826 = vunpack.c.h.b16 %v483
    %v1827 = vunpack.c.l.b16 %v484
    %v1828 = vunpack.c.h.b16 %v484
    %v1829 = vunpack.c.l.b16 %v485
    %v1830 = vunpack.c.h.b16 %v485
    %v1831 = vunpack.c.l.b16 %v486
    %v1832 = vunpack.c.h.b16 %v486
    %v1833 = vunpack.c.l.b16 %v487
    %v1834 = vunpack.c.h.b16 %v487
    %v1835 = vunpack.c.l.b16 %v488
    %v1836 = vunpack.c.h.b16 %v488
    %v1837 = vunpack.c.l.b16 %v489
    %v1838 = vunpack.c.h.b16 %v489
    %v1839 = vunpack.c.l.b16 %v490
    %v1840 = vunpack.c.h.b16 %v490
    %v1841 = vunpack.c.l.b16 %v491
    %v1842 = vunpack.c.h.b16 %v491
    %v1843 = vunpack.c.l.b16 %v492
    %v1844 = vunpack.c.h.b16 %v492
    %v1845 = vunpack.c.l.b16 %v493
    %v1846 = vunpack.c.h.b16 %v493
    %v1847 = vunpack.c.l.b16 %v494
    %v1848 = vunpack.c.h.b16 %v494
    %v1849 = vunpack.c.l.b16 %v495
    %v1850 = vunpack.c.h.b16 %v495
    %v1851 = vunpack.c.l.b16 %v496
    %v1852 = vunpack.c.h.b16 %v496
    %v1853 = vunpack.c.l.b16 %v497
    %v1854 = vunpack.c.h.b16 %v497
    %v1855 = vunpack.c.l.b16 %v498
    %v1856 = vunpack.c.h.b16 %v498
    %v1857 = vunpack.c.l.b16 %v499
    %v1858 = vunpack.c.h.b16 %v499
    %v1859 = vunpack.c.l.b16 %v500
    %v1860 = vunpack.c.h.b16 %v500
    %v1861 = vunpack.c.l.b16 %v501
    %v1862 = vunpack.c.h.b16 %v501
    %v1863 = vunpack.c.l.b16 %v502
    %v1864 = vunpack.c.h.b16 %v502
    %v1865 = vunpack.c.l.b16 %v503
    %v1866 = vunpack.c.h.b16 %v503
    %v1867 = vunpack.c.l.b16 %v504
    %v1868 = vunpack.c.h.b16 %v504
    %v1869 = vunpack.c.l.b16 %v505
    %v1870 = vunpack.c.h.b16 %v505
    %v1871 = vunpack.c.l.b16 %v506
    %v1872 = vunpack.c.h.b16 %v506
    %v1873 = vunpack.c.l.b16 %v507
    %v1874 = vunpack.c.h.b16 %v507
    %v1875 = vunpack.c.l.b16 %v508
    %v1876 = vunpack.c.h.b16 %v508
    %v1877 = vunpack.c.l.b16 %v509
    %v1878 = vunpack.c.h.b16 %v509
    %v1879 = vunpack.c.l.b16 %v510
    %v1880 = vunpack.c.h.b16 %v510
    %v1881 = vunpack.c.l.b16 %v511
    %v1882 = vunpack.c.h.b16 %v511
    %v1883 = vunpack.c.l.b16 %v512
    %v1884 = vunpack.c.h.b16 %v512
    %v1885 = vunpack.c.l.b16 %v513
    %v1886 = vunpack.c.h.b16 %v513
    %v1887 = vunpack.c.l.b16 %v514
    %v1888 = vunpack.c.h.b16 %v514
    %v1889 = vunpack.c.l.b16 %v515
    %v1890 = vunpack.c.h.b16 %v515
    %v1891 = vunpack.c.l.b16 %v516
    %v1892 = vunpack.c.h.b16 %v516
    %v1893 = vunpack.c.l.b16 %v517
    %v1894 = vunpack.c.h.b16 %v517
    %v1895 = vunpack.c.l.b16 %v518
    %v1896 = vunpack.c.h.b16 %v518
    %v1897 = vunpack.c.l.b16 %v519
    %v1898 = vunpack.c.h.b16 %v519
    %v1899 = vunpack.c.l.b16 %v520
    %v1900 = vunpack.c.h.b16 %v520
    %v1901 = vunpack.c.l.b16 %v521
    %v1902 = vunpack.c.h.b16 %v521
    %v1903 = vunpack.c.l.b16 %v522
    %v1904 = vunpack.c.h.b16 %v522
    %v1905 = vunpack.c.l.b16 %v523
    %v1906 = vunpack.c.h.b16 %v523
    %v1907 = vunpack.c.l.b16 %v524
    %v1908 = vunpack.c.h.b16 %v524
    %v1909 = vunpack.c.l.b16 %v525
    %v1910 = vunpack.c.h.b16 %v525
    %v1911 = vunpack.c.l.b16 %v526
    %v1912 = vunpack.c.h.b16 %v526
    %v1913 = vunpack.c.l.b16 %v527
    %v1914 = vunpack.c.h.b16 %v527
    %v1915 = vunpack.c.l.b16 %v528
    %v1916 = vunpack.c.h.b16 %v528
    %v1917 = vunpack.c.l.b16 %v529
    %v1918 = vunpack.c.h.b16 %v529
    %v1919 = vunpack.c.l.b16 %v530
    %v1920 = vunpack.c.h.b16 %v530
    %v1921 = vunpack.c.l.b16 %v531
    %v1922 = vunpack.c.h.b16 %v531
    %v1923 = vunpack.c.l.b16 %v532
    %v1924 = vunpack.c.h.b16 %v532
    %v1925 = vunpack.c.l.b16 %v533
    %v1926 = vunpack.c.h.b16 %v533
    %v1927 = vunpack.c.l.b16 %v534
    %v1928 = vunpack.c.h.b16 %v534
    %v1929 = vunpack.c.l.b16 %v535
    %v1930 = vunpack.c.h.b16 %v535
    %v1931 = vunpack.c.l.b16 %v536
    %v1932 = vunpack.c.h.b16 %v536
    %v1933 = vunpack.c.l.b16 %v537
    %v1934 = vunpack.c.h.b16 %v537
    %v1935 = vunpack.c.l.b16 %v538
    %v1936 = vunpack.c.h.b16 %v538
    %v1937 = vunpack.c.l.b16 %v539
    %v1938 = vunpack.c.h.b16 %v539
    %v1939 = vunpack.c.l.b16 %v540
    %v1940 = vunpack.c.h.b16 %v540
    %v1941 = vunpack.c.l.b16 %v541
    %v1942 = vunpack.c.h.b16 %v541
    %v1943 = vunpack.c.l.b16 %v542
    %v1944 = vunpack.c.h.b16 %v542
    %v1945 = vunpack.c.l.b16 %v543
    %v1946 = vunpack.c.h.b16 %v543
    %v1947 = vunpack.c.l.b16 %v544
    %v1948 = vunpack.c.h.b16 %v544
    %v1949 = vunpack.c.l.b16 %v545
    %v1950 = vunpack.c.h.b16 %v545
    %v1951 = vunpack.c.l.b16 %v546
    %v1952 = vunpack.c.h.b16 %v546
    %v1953 = vunpack.c.l.b16 %v547
    %v1954 = vunpack.c.h.b16 %v547
    %v1955 = vunpack.c.l.b16 %v548
    %v1956 = vunpack.c.h.b16 %v548
    %v1957 = vunpack.c.l.b16 %v549
    %v1958 = vunpack.c.h.b16 %v549
    %v1959 = vunpack.c.l.b16 %v550
    %v1960 = vunpack.c.h.b16 %v550
    %v1961 = vunpack.c.l.b16 %v551
    %v1962 = vunpack.c.h.b16 %v551
    %v1963 = vunpack.c.l.b16 %v552
    %v1964 = vunpack.c.h.b16 %v552
    %v1965 = vunpack.c.l.b16 %v553
    %v1966 = vunpack.c.h.b16 %v553
    %v1967 = vunpack.c.l.b16 %v554
    %v1968 = vunpack.c.h.b16 %v554
    %v1969 = vunpack.c.l.b16 %v555
    %v1970 = vunpack.c.h.b16 %v555
    %v1971 = vunpack.c.l.b16 %v556
    %v1972 = vunpack.c.h.b16 %v556
    %v1973 = vunpack.c.l.b16 %v557
    %v1974 = vunpack.c.h.b16 %v557
    %v1975 = vunpack.c.l.b16 %v558
    %v1976 = vunpack.c.h.b16 %v558
    %v1977 = vunpack.c.l.b16 %v559
    %v1978 = vunpack.c.h.b16 %v559
    %v1979 = vunpack.c.l.b16 %v560
    %v1980 = vunpack.c.h.b16 %v560
    %v1981 = vunpack.c.l.b16 %v561
    %v1982 = vunpack.c.h.b16 %v561
    %v1983 = vunpack.c.l.b16 %v562
    %v1984 = vunpack.c.h.b16 %v562
    %v1985 = vunpack.c.l.b16 %v563
    %v1986 = vunpack.c.h.b16 %v563
    %v1987 = vunpack.c.l.b16 %v564
    %v1988 = vunpack.c.h.b16 %v564
    %v1989 = vunpack.c.l.b16 %v565
    %v1990 = vunpack.c.h.b16 %v565
    %v1991 = vunpack.c.l.b16 %v566
    %v1992 = vunpack.c.h.b16 %v566
    %v1993 = vunpack.c.l.b16 %v567
    %v1994 = vunpack.c.h.b16 %v567
    %v1995 = vunpack.c.l.b16 %v568
    %v1996 = vunpack.c.h.b16 %v568
    %v1997 = vunpack.c.l.b16 %v569
    %v1998 = vunpack.c.h.b16 %v569
    %v1999 = vunpack.c.l.b16 %v570
    %v2000 = vunpack.c.h.b16 %v570
    %v2001 = vunpack.c.l.b16 %v571
    %v2002 = vunpack.c.h.b16 %v571
    %v2003 = vunpack.c.l.b16 %v572
    %v2004 = vunpack.c.h.b16 %v572
    %v2005 = vunpack.c.l.b16 %v573
    %v2006 = vunpack.c.h.b16 %v573
    %v2007 = vunpack.c.l.b16 %v574
    %v2008 = vunpack.c.h.b16 %v574
    %v2009 = vunpack.c.l.b16 %v575
    %v2010 = vunpack.c.h.b16 %v575
    %v2011 = vunpack.c.l.b16 %v576
    %v2012 = vunpack.c.h.b16 %v576
    %v2013 = vunpack.c.l.b16 %v577
    %v2014 = vunpack.c.h.b16 %v577
    %v2015 = vunpack.c.l.b16 %v578
    %v2016 = vunpack.c.h.b16 %v578
    %v2017 = vunpack.c.l.b16 %v579
    %v2018 = vunpack.c.h.b16 %v579
    %v2019 = vunpack.c.l.b16 %v580
    %v2020 = vunpack.c.h.b16 %v580
    %v2021 = vunpack.c.l.b16 %v581
    %v2022 = vunpack.c.h.b16 %v581
    %v2023 = vunpack.c.l.b16 %v582
    %v2024 = vunpack.c.h.b16 %v582
    %v2025 = vunpack.c.l.b16 %v583
    %v2026 = vunpack.c.h.b16 %v583
    %v2027 = vunpack.c.l.b16 %v584
    %v2028 = vunpack.c.h.b16 %v584
    %v2029 = vunpack.c.l.b16 %v585
    %v2030 = vunpack.c.h.b16 %v585
    %v2031 = vunpack.c.l.b16 %v586
    %v2032 = vunpack.c.h.b16 %v586
    %v2033 = vunpack.c.l.b16 %v587
    %v2034 = vunpack.c.h.b16 %v587
    %v2035 = vunpack.c.l.b16 %v588
    %v2036 = vunpack.c.h.b16 %v588
    %v2037 = vunpack.c.l.b16 %v589
    %v2038 = vunpack.c.h.b16 %v589
    %v2039 = vunpack.c.l.b16 %v590
    %v2040 = vunpack.c.h.b16 %v590
    %v2041 = vunpack.c.l.b16 %v591
    %v2042 = vunpack.c.h.b16 %v591
    %v2043 = vunpack.c.l.b16 %v592
    %v2044 = vunpack.c.h.b16 %v592
    %v2045 = vunpack.c.l.b16 %v593
    %v2046 = vunpack.c.h.b16 %v593
    %v2047 = vunpack.c.l.b16 %v594
    %v2048 = vunpack.c.h.b16 %v594
    %v2049 = vunpack.c.l.b16 %v595
    %v2050 = vunpack.c.h.b16 %v595
    %v2051 = vunpack.c.l.b16 %v596
    %v2052 = vunpack.c.h.b16 %v596
    %v2053 = vunpack.c.l.b16 %v597
    %v2054 = vunpack.c.h.b16 %v597
    %v2055 = vunpack.c.l.b16 %v598
    %v2056 = vunpack.c.h.b16 %v598
    %v2057 = vunpack.c.l.b16 %v599
    %v2058 = vunpack.c.h.b16 %v599
    %v2059 = vunpack.c.l.b16 %v600
    %v2060 = vunpack.c.h.b16 %v600
    %v2061 = vunpack.c.l.b16 %v601
    %v2062 = vunpack.c.h.b16 %v601
    %v2063 = vunpack.c.l.b16 %v602
    %v2064 = vunpack.c.h.b16 %v602
    %v2065 = vunpack.c.l.b16 %v603
    %v2066 = vunpack.c.h.b16 %v603
    %v2067 = vunpack.c.l.b16 %v604
    %v2068 = vunpack.c.h.b16 %v604
    %v2069 = vunpack.c.l.b16 %v605
    %v2070 = vunpack.c.h.b16 %v605
    %v2071 = vunpack.c.l.b16 %v606
    %v2072 = vunpack.c.h.b16 %v606
    %v2073 = vunpack.c.l.b16 %v607
    %v2074 = vunpack.c.h.b16 %v607
    %v2075 = vunpack.c.l.b16 %v608
    %v2076 = vunpack.c.h.b16 %v608
    %v2077 = vunpack.c.l.b16 %v609
    %v2078 = vunpack.c.h.b16 %v609
    %v2079 = vunpack.c.l.b16 %v610
    %v2080 = vunpack.c.h.b16 %v610
    %v2081 = vunpack.c.l.b16 %v611
    %v2082 = vunpack.c.h.b16 %v611
    %v2083 = vunpack.c.l.b16 %v612
    %v2084 = vunpack.c.h.b16 %v612
    %v2085 = vunpack.c.l.b16 %v613
    %v2086 = vunpack.c.h.b16 %v613
    %v2087 = vunpack.c.l.b16 %v614
    %v2088 = vunpack.c.h.b16 %v614
    %v2089 = vunpack.c.l.b16 %v615
    %v2090 = vunpack.c.h.b16 %v615
    %v2091 = vunpack.c.l.b16 %v616
    %v2092 = vunpack.c.h.b16 %v616
    %v2093 = vunpack.c.l.b16 %v617
    %v2094 = vunpack.c.h.b16 %v617
    %v2095 = vunpack.c.l.b16 %v618
    %v2096 = vunpack.c.h.b16 %v618
    %v2097 = vunpack.c.l.b16 %v619
    %v2098 = vunpack.c.h.b16 %v619
    %v2099 = vunpack.c.l.b16 %v620
    %v2100 = vunpack.c.h.b16 %v620
    %v2101 = vunpack.c.l.b16 %v621
    %v2102 = vunpack.c.h.b16 %v621
    %v2103 = vunpack.c.l.b16 %v622
    %v2104 = vunpack.c.h.b16 %v622
    %v2105 = vunpack.c.l.b16 %v623
    %v2106 = vunpack.c.h.b16 %v623
    %v2107 = vunpack.c.l.b16 %v624
    %v2108 = vunpack.c.h.b16 %v624
    %v2109 = vunpack.c.l.b16 %v625
    %v2110 = vunpack.c.h.b16 %v625
    %v2111 = vunpack.c.l.b16 %v626
    %v2112 = vunpack.c.h.b16 %v626
    %v2113 = vunpack.c.l.b16 %v627
    %v2114 = vunpack.c.h.b16 %v627
    %v2115 = vunpack.c.l.b16 %v628
    %v2116 = vunpack.c.h.b16 %v628
    %v2117 = vunpack.c.l.b16 %v629
    %v2118 = vunpack.c.h.b16 %v629
    %v2119 = vunpack.c.l.b16 %v630
    %v2120 = vunpack.c.h.b16 %v630
    %v2121 = vunpack.c.l.b16 %v631
    %v2122 = vunpack.c.h.b16 %v631
    %v2123 = vunpack.c.l.b16 %v632
    %v2124 = vunpack.c.h.b16 %v632
    %v2125 = vunpack.c.l.b16 %v633
    %v2126 = vunpack.c.h.b16 %v633
    %v2127 = vunpack.c.l.b16 %v634
    %v2128 = vunpack.c.h.b16 %v634
    %v2129 = vunpack.c.l.b16 %v635
    %v2130 = vunpack.c.h.b16 %v635
    %v2131 = vunpack.c.l.b16 %v636
    %v2132 = vunpack.c.h.b16 %v636
    %v2133 = vunpack.c.l.b16 %v637
    %v2134 = vunpack.c.h.b16 %v637
    %v2135 = vunpack.c.l.b16 %v638
    %v2136 = vunpack.c.h.b16 %v638
    %v2137 = vunpack.c.l.b16 %v639
    %v2138 = vunpack.c.h.b16 %v639
    %v2139 = vunpack.c.l.b16 %v640
    %v2140 = vunpack.c.h.b16 %v640
    %v2141 = vunpack.c.l.b16 %v641
    %v2142 = vunpack.c.h.b16 %v641
    %v2143 = vunpack.c.l.b16 %v642
    %v2144 = vunpack.c.h.b16 %v642
    %v2145 = vunpack.c.l.b16 %v643
    %v2146 = vunpack.c.h.b16 %v643
    %v2147 = vunpack.c.l.b16 %v644
    %v2148 = vunpack.c.h.b16 %v644
    %v2149 = vunpack.c.l.b16 %v645
    %v2150 = vunpack.c.h.b16 %v645
    %v2151 = vunpack.c.l.b16 %v646
    %v2152 = vunpack.c.h.b16 %v646
    %v2153 = vunpack.c.l.b16 %v647
    %v2154 = vunpack.c.h.b16 %v647
    %v2155 = vunpack.c.l.b16 %v648
    %v2156 = vunpack.c.h.b16 %v648
    %v2157 = vunpack.c.l.b16 %v649
    %v2158 = vunpack.c.h.b16 %v649
    %v2159 = vunpack.c.l.b16 %v650
    %v2160 = vunpack.c.h.b16 %v650
    %v2161 = vunpack.c.l.b16 %v651
    %v2162 = vunpack.c.h.b16 %v651
    %v2163 = vunpack.c.l.b16 %v652
    %v2164 = vunpack.c.h.b16 %v652
    %v2165 = vunpack.c.l.b16 %v653
    %v2166 = vunpack.c.h.b16 %v653
    %v2167 = vunpack.c.l.b16 %v654
    %v2168 = vunpack.c.h.b16 %v654
    %v2169 = vunpack.c.l.b16 %v655
    %v2170 = vunpack.c.h.b16 %v655
    %v2171 = vunpack.c.l.b16 %v656
    %v2172 = vunpack.c.h.b16 %v656
    %v2173 = vunpack.c.l.b16 %v657
    %v2174 = vunpack.c.h.b16 %v657
    %v2175 = vunpack.c.l.b16 %v658
    %v2176 = vunpack.c.h.b16 %v658
    %v2177 = vunpack.c.l.b16 %v659
    %v2178 = vunpack.c.h.b16 %v659
    %v2179 = vunpack.c.l.b16 %v660
    %v2180 = vunpack.c.h.b16 %v660
    %v2181 = vunpack.c.l.b16 %v661
    %v2182 = vunpack.c.h.b16 %v661
    %v2183 = vunpack.c.l.b16 %v662
    %v2184 = vunpack.c.h.b16 %v662
    %v2185 = vunpack.c.l.b16 %v663
    %v2186 = vunpack.c.h.b16 %v663
    %v2187 = vunpack.c.l.b16 %v664
    %v2188 = vunpack.c.h.b16 %v664
    %v2189 = vunpack.c.l.b16 %v665
    %v2190 = vunpack.c.h.b16 %v665
    %v2191 = vunpack.c.l.b16 %v666
    %v2192 = vunpack.c.h.b16 %v666
    %v2193 = vunpack.c.l.b16 %v667
    %v2194 = vunpack.c.h.b16 %v667
    %v2195 = vunpack.c.l.b16 %v668
    %v2196 = vunpack.c.h.b16 %v668
    %v2197 = vunpack.c.l.b16 %v669
    %v2198 = vunpack.c.h.b16 %v669
    %v2199 = vunpack.c.l.b16 %v670
    %v2200 = vunpack.c.h.b16 %v670
    %v2201 = vunpack.c.l.b16 %v671
    %v2202 = vunpack.c.h.b16 %v671
    %v2203 = vunpack.c.l.b16 %v672
    %v2204 = vunpack.c.h.b16 %v672
    %v2205 = vunpack.c.l.b16 %v673
    %v2206 = vunpack.c.h.b16 %v673
    %v2207 = vunpack.c.l.b16 %v674
    %v2208 = vunpack.c.h.b16 %v674
    %v2209 = vunpack.c.l.b16 %v675
    %v2210 = vunpack.c.h.b16 %v675
    %v2211 = vunpack.c.l.b16 %v676
    %v2212 = vunpack.c.h.b16 %v676
    %v2213 = vpack.c.b16 %v1197, %v1189
    %v2214 = vpack.c.b16 %v1198, %v1190
    %v2215 = vpack.c.b16 %v1199, %v1191
    %v2216 = vpack.c.b16 %v1200, %v1192
    %v2217 = vpack.c.b16 %v1201, %v1193
    %v2218 = vpack.c.b16 %v1202, %v1194
    %v2219 = vpack.c.b16 %v1203, %v1195
    %v2220 = vpack.c.b16 %v1204, %v1196
    %v2221 = vpack.c.b16 %v1213, %v1205
    %v2222 = vpack.c.b16 %v1214, %v1206
    %v2223 = vpack.c.b16 %v1215, %v1207
    %v2224 = vpack.c.b16 %v1216, %v1208
    %v2225 = vpack.c.b16 %v1217, %v1209
    %v2226 = vpack.c.b16 %v1218, %v1210
    %v2227 = vpack.c.b16 %v1219, %v1211
    %v2228 = vpack.c.b16 %v1220, %v1212
    %v2229 = vpack.c.b16 %v1229, %v1221
    %v2230 = vpack.c.b16 %v1230, %v1222
    %v2231 = vpack.c.b16 %v1231, %v1223
    %v2232 = vpack.c.b16 %v1232, %v1224
    %v2233 = vpack.c.b16 %v1233, %v1225
    %v2234 = vpack.c.b16 %v1234, %v1226
    %v2235 = vpack.c.b16 %v1235, %v1227
    %v2236 = vpack.c.b16 %v1236, %v1228
    %v2237 = vpack.c.b16 %v1245, %v1237
    %v2238 = vpack.c.b16 %v1246, %v1238
    %v2239 = vpack.c.b16 %v1247, %v1239
    %v2240 = vpack.c.b16 %v1248, %v1240
    %v2241 = vpack.c.b16 %v1249, %v1241
    %v2242 = vpack.c.b16 %v1250, %v1242
    %v2243 = vpack.c.b16 %v1251, %v1243
    %v2244 = vpack.c.b16 %v1252, %v1244
    %v2245 = vpack.c.b16 %v1261, %v1253
    %v2246 = vpack.c.b16 %v1262, %v1254
    %v2247 = vpack.c.b16 %v1263, %v1255
    %v2248 = vpack.c.b16 %v1264, %v1256
    %v2249 = vpack.c.b16 %v1265, %v1257
    %v2250 = vpack.c.b16 %v1266, %v1258
    %v2251 = vpack.c.b16 %v1267, %v1259
    %v2252 = vpack.c.b16 %v1268, %v1260
    %v2253 = vpack.c.b16 %v1277, %v1269
    %v2254 = vpack.c.b16 %v1278, %v1270
    %v2255 = vpack.c.b16 %v1279, %v1271
    %v2256 = vpack.c.b16 %v1280, %v1272
    %v2257 = vpack.c.b16 %v1281, %v1273
    %v2258 = vpack.c.b16 %v1282, %v1274
    %v2259 = vpack.c.b16 %v1283, %v1275
    %v2260 = vpack.c.b16 %v1284, %v1276
    %v2261 = vpack.c.b16 %v1293, %v1285
    %v2262 = vpack.c.b16 %v1294, %v1286
    %v2263 = vpack.c.b16 %v1295, %v1287
    %v2264 = vpack.c.b16 %v1296, %v1288
    %v2265 = vpack.c.b16 %v1297, %v1289
    %v2266 = vpack.c.b16 %v1298, %v1290
    %v2267 = vpack.c.b16 %v1299, %v1291
    %v2268 = vpack.c.b16 %v1300, %v1292
    %v2269 = vpack.c.b16 %v1309, %v1301
    %v2270 = vpack.c.b16 %v1310, %v1302
    %v2271 = vpack.c.b16 %v1311, %v1303
    %v2272 = vpack.c.b16 %v1312, %v1304
    %v2273 = vpack.c.b16 %v1313, %v1305
    %v2274 = vpack.c.b16 %v1314, %v1306
    %v2275 = vpack.c.b16 %v1315, %v1307
    %v2276 = vpack.c.b16 %v1316, %v1308
    %v2277 = vpack.c.b16 %v1325, %v1317
    %v2278 = vpack.c.b16 %v1326, %v1318
    %v2279 = vpack.c.b16 %v1327, %v1319
    %v2280 = vpack.c.b16 %v1328, %v1320
    %v2281 = vpack.c.b16 %v1329, %v1321
    %v2282 = vpack.c.b16 %v1330, %v1322
    %v2283 = vpack.c.b16 %v1331, %v1323
    %v2284 = vpack.c.b16 %v1332, %v1324
    %v2285 = vpack.c.b16 %v1341, %v1333
    %v2286 = vpack.c.b16 %v1342, %v1334
    %v2287 = vpack.c.b16 %v1343, %v1335
    %v2288 = vpack.c.b16 %v1344, %v1336
    %v2289 = vpack.c.b16 %v1345, %v1337
    %v2290 = vpack.c.b16 %v1346, %v1338
    %v2291 = vpack.c.b16 %v1347, %v1339
    %v2292 = vpack.c.b16 %v1348, %v1340
    %v2293 = vpack.c.b16 %v1357, %v1349
    %v2294 = vpack.c.b16 %v1358, %v1350
    %v2295 = vpack.c.b16 %v1359, %v1351
    %v2296 = vpack.c.b16 %v1360, %v1352
    %v2297 = vpack.c.b16 %v1361, %v1353
    %v2298 = vpack.c.b16 %v1362, %v1354
    %v2299 = vpack.c.b16 %v1363, %v1355
    %v2300 = vpack.c.b16 %v1364, %v1356
    %v2301 = vpack.c.b16 %v1373, %v1365
    %v2302 = vpack.c.b16 %v1374, %v1366
    %v2303 = vpack.c.b16 %v1375, %v1367
    %v2304 = vpack.c.b16 %v1376, %v1368
    %v2305 = vpack.c.b16 %v1377, %v1369
    %v2306 = vpack.c.b16 %v1378, %v1370
    %v2307 = vpack.c.b16 %v1379, %v1371
    %v2308 = vpack.c.b16 %v1380, %v1372
    %v2309 = vpack.c.b16 %v1389, %v1381
    %v2310 = vpack.c.b16 %v1390, %v1382
    %v2311 = vpack.c.b16 %v1391, %v1383
    %v2312 = vpack.c.b16 %v1392, %v1384
    %v2313 = vpack.c.b16 %v1393, %v1385
    %v2314 = vpack.c.b16 %v1394, %v1386
    %v2315 = vpack.c.b16 %v1395, %v1387
    %v2316 = vpack.c.b16 %v1396, %v1388
    %v2317 = vpack.c.b16 %v1405, %v1397
    %v2318 = vpack.c.b16 %v1406, %v1398
    %v2319 = vpack.c.b16 %v1407, %v1399
    %v2320 = vpack.c.b16 %v1408, %v1400
    %v2321 = vpack.c.b16 %v1409, %v1401
    %v2322 = vpack.c.b16 %v1410, %v1402
    %v2323 = vpack.c.b16 %v1411, %v1403
    %v2324 = vpack.c.b16 %v1412, %v1404
    %v2325 = vpack.c.b16 %v1421, %v1413
    %v2326 = vpack.c.b16 %v1422, %v1414
    %v2327 = vpack.c.b16 %v1423, %v1415
    %v2328 = vpack.c.b16 %v1424, %v1416
    %v2329 = vpack.c.b16 %v1425, %v1417
    %v2330 = vpack.c.b16 %v1426, %v1418
    %v2331 = vpack.c.b16 %v1427, %v1419
    %v2332 = vpack.c.b16 %v1428, %v1420
    %v2333 = vpack.c.b16 %v1437, %v1429
    %v2334 = vpack.c.b16 %v1438, %v1430
    %v2335 = vpack.c.b16 %v1439, %v1431
    %v2336 = vpack.c.b16 %v1440, %v1432
    %v2337 = vpack.c.b16 %v1441, %v1433
    %v2338 = vpack.c.b16 %v1442, %v1434
    %v2339 = vpack.c.b16 %v1443, %v1435
    %v2340 = vpack.c.b16 %v1444, %v1436
    %v2341 = vpack.c.b16 %v1453, %v1445
    %v2342 = vpack.c.b16 %v1454, %v1446
    %v2343 = vpack.c.b16 %v1455, %v1447
    %v2344 = vpack.c.b16 %v1456, %v1448
    %v2345 = vpack.c.b16 %v1457, %v1449
    %v2346 = vpack.c.b16 %v1458, %v1450
    %v2347 = vpack.c.b16 %v1459, %v1451
    %v2348 = vpack.c.b16 %v1460, %v1452
    %v2349 = vpack.c.b16 %v1469, %v1461
    %v2350 = vpack.c.b16 %v1470, %v1462
    %v2351 = vpack.c.b16 %v1471, %v1463
    %v2352 = vpack.c.b16 %v1472, %v1464
    %v2353 = vpack.c.b16 %v1473, %v1465
    %v2354 = vpack.c.b16 %v1474, %v1466
    %v2355 = vpack.c.b16 %v1475, %v1467
    %v2356 = vpack.c.b16 %v1476, %v1468
    %v2357 = vpack.c.b16 %v1485, %v1477
    %v2358 = vpack.c.b16 %v1486, %v1478
    %v2359 = vpack.c.b16 %v1487, %v1479
    %v2360 = vpack.c.b16 %v1488, %v1480
    %v2361 = vpack.c.b16 %v1489, %v1481
    %v2362 = vpack.c.b16 %v1490, %v1482
    %v2363 = vpack.c.b16 %v1491, %v1483
    %v2364 = vpack.c.b16 %v1492, %v1484
    %v2365 = vpack.c.b16 %v1501, %v1493
    %v2366 = vpack.c.b16 %v1502, %v1494
    %v2367 = vpack.c.b16 %v1503, %v1495
    %v2368 = vpack.c.b16 %v1504, %v1496
    %v2369 = vpack.c.b16 %v1505, %v1497
    %v2370 = vpack.c.b16 %v1506, %v1498
    %v2371 = vpack.c.b16 %v1507, %v1499
    %v2372 = vpack.c.b16 %v1508, %v1500
    %v2373 = vpack.c.b16 %v1517, %v1509
    %v2374 = vpack.c.b16 %v1518, %v1510
    %v2375 = vpack.c.b16 %v1519, %v1511
    %v2376 = vpack.c.b16 %v1520, %v1512
    %v2377 = vpack.c.b16 %v1521, %v1513
    %v2378 = vpack.c.b16 %v1522, %v1514
    %v2379 = vpack.c.b16 %v1523, %v1515
    %v2380 = vpack.c.b16 %v1524, %v1516
    %v2381 = vpack.c.b16 %v1533, %v1525
    %v2382 = vpack.c.b16 %v1534, %v1526
    %v2383 = vpack.c.b16 %v1535, %v1527
    %v2384 = vpack.c.b16 %v1536, %v1528
    %v2385 = vpack.c.b16 %v1537, %v1529
    %v2386 = vpack.c.b16 %v1538, %v1530
    %v2387 = vpack.c.b16 %v1539, %v1531
    %v2388 = vpack.c.b16 %v1540, %v1532
    %v2389 = vpack.c.b16 %v1549, %v1541
    %v2390 = vpack.c.b16 %v1550, %v1542
    %v2391 = vpack.c.b16 %v1551, %v1543
    %v2392 = vpack.c.b16 %v1552, %v1544
    %v2393 = vpack.c.b16 %v1553, %v1545
    %v2394 = vpack.c.b16 %v1554, %v1546
    %v2395 = vpack.c.b16 %v1555, %v1547
    %v2396 = vpack.c.b16 %v1556, %v1548
    %v2397 = vpack.c.b16 %v1565, %v1557
    %v2398 = vpack.c.b16 %v1566, %v1558
    %v2399 = vpack.c.b16 %v1567, %v1559
    %v2400 = vpack.c.b16 %v1568, %v1560
    %v2401 = vpack.c.b16 %v1569, %v1561
    %v2402 = vpack.c.b16 %v1570, %v1562
    %v2403 = vpack.c.b16 %v1571, %v1563
    %v2404 = vpack.c.b16 %v1572, %v1564
    %v2405 = vpack.c.b16 %v1581, %v1573
    %v2406 = vpack.c.b16 %v1582, %v1574
    %v2407 = vpack.c.b16 %v1583, %v1575
    %v2408 = vpack.c.b16 %v1584, %v1576
    %v2409 = vpack.c.b16 %v1585, %v1577
    %v2410 = vpack.c.b16 %v1586, %v1578
    %v2411 = vpack.c.b16 %v1587, %v1579
    %v2412 = vpack.c.b16 %v1588, %v1580
    %v2413 = vpack.c.b16 %v1597, %v1589
    %v2414 = vpack.c.b16 %v1598, %v1590
    %v2415 = vpack.c.b16 %v1599, %v1591
    %v2416 = vpack.c.b16 %v1600, %v1592
    %v2417 = vpack.c.b16 %v1601, %v1593
    %v2418 = vpack.c.b16 %v1602, %v1594
    %v2419 = vpack.c.b16 %v1603, %v1595
    %v2420 = vpack.c.b16 %v1604, %v1596
    %v2421 = vpack.c.b16 %v1613, %v1605
    %v2422 = vpack.c.b16 %v1614, %v1606
    %v2423 = vpack.c.b16 %v1615, %v1607
    %v2424 = vpack.c.b16 %v1616, %v1608
    %v2425 = vpack.c.b16 %v1617, %v1609
    %v2426 = vpack.c.b16 %v1618, %v1610
    %v2427 = vpack.c.b16 %v1619, %v1611
    %v2428 = vpack.c.b16 %v1620, %v1612
    %v2429 = vpack.c.b16 %v1629, %v1621
    %v2430 = vpack.c.b16 %v1630, %v1622
    %v2431 = vpack.c.b16 %v1631, %v1623
    %v2432 = vpack.c.b16 %v1632, %v1624
    %v2433 = vpack.c.b16 %v1633, %v1625
    %v2434 = vpack.c.b16 %v1634, %v1626
    %v2435 = vpack.c.b16 %v1635, %v1627
    %v2436 = vpack.c.b16 %v1636, %v1628
    %v2437 = vpack.c.b16 %v1645, %v1637
    %v2438 = vpack.c.b16 %v1646, %v1638
    %v2439 = vpack.c.b16 %v1647, %v1639
    %v2440 = vpack.c.b16 %v1648, %v1640
    %v2441 = vpack.c.b16 %v1649, %v1641
    %v2442 = vpack.c.b16 %v1650, %v1642
    %v2443 = vpack.c.b16 %v1651, %v1643
    %v2444 = vpack.c.b16 %v1652, %v1644
    %v2445 = vpack.c.b16 %v1661, %v1653
    %v2446 = vpack.c.b16 %v1662, %v1654
    %v2447 = vpack.c.b16 %v1663, %v1655
    %v2448 = vpack.c.b16 %v1664, %v1656
    %v2449 = vpack.c.b16 %v1665, %v1657
    %v2450 = vpack.c.b16 %v1666, %v1658
    %v2451 = vpack.c.b16 %v1667, %v1659
    %v2452 = vpack.c.b16 %v1668, %v1660
    %v2453 = vpack.c.b16 %v1677, %v1669
    %v2454 = vpack.c.b16 %v1678, %v1670
    %v2455 = vpack.c.b16 %v1679, %v1671
    %v2456 = vpack.c.b16 %v1680, %v1672
    %v2457 = vpack.c.b16 %v1681, %v1673
    %v2458 = vpack.c.b16 %v1682, %v1674
    %v2459 = vpack.c.b16 %v1683, %v1675
    %v2460 = vpack.c.b16 %v1684, %v1676
    %v2461 = vpack.c.b16 %v1693, %v1685
    %v2462 = vpack.c.b16 %v1694, %v1686
    %v2463 = vpack.c.b16 %v1695, %v1687
    %v2464 = vpack.c.b16 %v1696, %v1688
    %v2465 = vpack.c.b16 %v1697, %v1689
    %v2466 = vpack.c.b16 %v1698, %v1690
    %v2467 = vpack.c.b16 %v1699, %v1691
    %v2468 = vpack.c.b16 %v1700, %v1692
    %v2469 = vpack.c.b16 %v1709, %v1701
    %v2470 = vpack.c.b16 %v1710, %v1702
    %v2471 = vpack.c.b16 %v1711, %v1703
    %v2472 = vpack.c.b16 %v1712, %v1704
    %v2473 = vpack.c.b16 %v1713, %v1705
    %v2474 = vpack.c.b16 %v1714, %v1706
    %v2475 = vpack.c.b16 %v1715, %v1707
    %v2476 = vpack.c.b16 %v1716, %v1708
    %v2477 = vpack.c.b16 %v1725, %v1717
    %v2478 = vpack.c.b16 %v1726, %v1718
    %v2479 = vpack.c.b16 %v1727, %v1719
    %v2480 = vpack.c.b16 %v1728, %v1720
    %v2481 = vpack.c.b16 %v1729, %v1721
    %v2482 = vpack.c.b16 %v1730, %v1722
    %v2483 = vpack.c.b16 %v1731, %v1723
    %v2484 = vpack.c.b16 %v1732, %v1724
    %v2485 = vpack.c.b16 %v1741, %v1733
    %v2486 = vpack.c.b16 %v1742, %v1734
    %v2487 = vpack.c.b16 %v1743, %v1735
    %v2488 = vpack.c.b16 %v1744, %v1736
    %v2489 = vpack.c.b16 %v1745, %v1737
    %v2490 = vpack.c.b16 %v1746, %v1738
    %v2491 = vpack.c.b16 %v1747, %v1739
    %v2492 = vpack.c.b16 %v1748, %v1740
    %v2493 = vpack.c.b16 %v1757, %v1749
    %v2494 = vpack.c.b16 %v1758, %v1750
    %v2495 = vpack.c.b16 %v1759, %v1751
    %v2496 = vpack.c.b16 %v1760, %v1752
    %v2497 = vpack.c.b16 %v1761, %v1753
    %v2498 = vpack.c.b16 %v1762, %v1754
    %v2499 = vpack.c.b16 %v1763, %v1755
    %v2500 = vpack.c.b16 %v1764, %v1756
    %v2501 = vpack.c.b16 %v1773, %v1765
    %v2502 = vpack.c.b16 %v1774, %v1766
    %v2503 = vpack.c.b16 %v1775, %v1767
    %v2504 = vpack.c.b16 %v1776, %v1768
    %v2505 = vpack.c.b16 %v1777, %v1769
    %v2506 = vpack.c.b16 %v1778, %v1770
    %v2507 = vpack.c.b16 %v1779, %v1771
    %v2508 = vpack.c.b16 %v1780, %v1772
    %v2509 = vpack.c.b16 %v1789, %v1781
    %v2510 = vpack.c.b16 %v1790, %v1782
    %v2511 = vpack.c.b16 %v1791, %v1783
    %v2512 = vpack.c.b16 %v1792, %v1784
    %v2513 = vpack.c.b16 %v1793, %v1785
    %v2514 = vpack.c.b16 %v1794, %v1786
    %v2515 = vpack.c.b16 %v1795, %v1787
    %v2516 = vpack.c.b16 %v1796, %v1788
    %v2517 = vpack.c.b16 %v1805, %v1797
    %v2518 = vpack.c.b16 %v1806, %v1798
    %v2519 = vpack.c.b16 %v1807, %v1799
    %v2520 = vpack.c.b16 %v1808, %v1800
    %v2521 = vpack.c.b16 %v1809, %v1801
    %v2522 = vpack.c.b16 %v1810, %v1802
    %v2523 = vpack.c.b16 %v1811, %v1803
    %v2524 = vpack.c.b16 %v1812, %v1804
    %v2525 = vpack.c.b16 %v1821, %v1813
    %v2526 = vpack.c.b16 %v1822, %v1814
    %v2527 = vpack.c.b16 %v1823, %v1815
    %v2528 = vpack.c.b16 %v1824, %v1816
    %v2529 = vpack.c.b16 %v1825, %v1817
    %v2530 = vpack.c.b16 %v1826, %v1818
    %v2531 = vpack.c.b16 %v1827, %v1819
    %v2532 = vpack.c.b16 %v1828, %v1820
    %v2533 = vpack.c.b16 %v1837, %v1829
    %v2534 = vpack.c.b16 %v1838, %v1830
    %v2535 = vpack.c.b16 %v1839, %v1831
    %v2536 = vpack.c.b16 %v1840, %v1832
    %v2537 = vpack.c.b16 %v1841, %v1833
    %v2538 = vpack.c.b16 %v1842, %v1834
    %v2539 = vpack.c.b16 %v1843, %v1835
    %v2540 = vpack.c.b16 %v1844, %v1836
    %v2541 = vpack.c.b16 %v1853, %v1845
    %v2542 = vpack.c.b16 %v1854, %v1846
    %v2543 = vpack.c.b16 %v1855, %v1847
    %v2544 = vpack.c.b16 %v1856, %v1848
    %v2545 = vpack.c.b16 %v1857, %v1849
    %v2546 = vpack.c.b16 %v1858, %v1850
    %v2547 = vpack.c.b16 %v1859, %v1851
    %v2548 = vpack.c.b16 %v1860, %v1852
    %v2549 = vpack.c.b16 %v1869, %v1861
    %v2550 = vpack.c.b16 %v1870, %v1862
    %v2551 = vpack.c.b16 %v1871, %v1863
    %v2552 = vpack.c.b16 %v1872, %v1864
    %v2553 = vpack.c.b16 %v1873, %v1865
    %v2554 = vpack.c.b16 %v1874, %v1866
    %v2555 = vpack.c.b16 %v1875, %v1867
    %v2556 = vpack.c.b16 %v1876, %v1868
    %v2557 = vpack.c.b16 %v1885, %v1877
    %v2558 = vpack.c.b16 %v1886, %v1878
    %v2559 = vpack.c.b16 %v1887, %v1879
    %v2560 = vpack.c.b16 %v1888, %v1880
    %v2561 = vpack.c.b16 %v1889, %v1881
    %v2562 = vpack.c.b16 %v1890, %v1882
    %v2563 = vpack.c.b16 %v1891, %v1883
    %v2564 = vpack.c.b16 %v1892, %v1884
    %v2565 = vpack.c.b16 %v1901, %v1893
    %v2566 = vpack.c.b16 %v1902, %v1894
    %v2567 = vpack.c.b16 %v1903, %v1895
    %v2568 = vpack.c.b16 %v1904, %v1896
    %v2569 = vpack.c.b16 %v1905, %v1897
    %v2570 = vpack.c.b16 %v1906, %v1898
    %v2571 = vpack.c.b16 %v1907, %v1899
    %v2572 = vpack.c.b16 %v1908, %v1900
    %v2573 = vpack.c.b16 %v1917, %v1909
    %v2574 = vpack.c.b16 %v1918, %v1910
    %v2575 = vpack.c.b16 %v1919, %v1911
    %v2576 = vpack.c.b16 %v1920, %v1912
    %v2577 = vpack.c.b16 %v1921, %v1913
    %v2578 = vpack.c.b16 %v1922, %v1914
    %v2579 = vpack.c.b16 %v1923, %v1915
    %v2580 = vpack.c.b16 %v1924, %v1916
    %v2581 = vpack.c.b16 %v1933, %v1925
    %v2582 = vpack.c.b16 %v1934, %v1926
    %v2583 = vpack.c.b16 %v1935, %v1927
    %v2584 = vpack.c.b16 %v1936, %v1928
    %v2585 = vpack.c.b16 %v1937, %v1929
    %v2586 = vpack.c.b16 %v1938, %v1930
    %v2587 = vpack.c.b16 %v1939, %v1931
    %v2588 = vpack.c.b16 %v1940, %v1932
    %v2589 = vpack.c.b16 %v1949, %v1941
    %v2590 = vpack.c.b16 %v1950, %v1942
    %v2591 = vpack.c.b16 %v1951, %v1943
    %v2592 = vpack.c.b16 %v1952, %v1944
    %v2593 = vpack.c.b16 %v1953, %v1945
    %v2594 = vpack.c.b16 %v1954, %v1946
    %v2595 = vpack.c.b16 %v1955, %v1947
    %v2596 = vpack.c.b16 %v1956, %v1948
    %v2597 = vpack.c.b16 %v1965, %v1957
    %v2598 = vpack.c.b16 %v1966, %v1958
    %v2599 = vpack.c.b16 %v1967, %v1959
    %v2600 = vpack.c.b16 %v1968, %v1960
    %v2601 = vpack.c.b16 %v1969, %v1961
    %v2602 = vpack.c.b16 %v1970, %v1962
    %v2603 = vpack.c.b16 %v1971, %v1963
    %v2604 = vpack.c.b16 %v1972, %v1964
    %v2605 = vpack.c.b16 %v1981, %v1973
    %v2606 = vpack.c.b16 %v1982, %v1974
    %v2607 = vpack.c.b16 %v1983, %v1975
    %v2608 = vpack.c.b16 %v1984, %v1976
    %v2609 = vpack.c.b16 %v1985, %v1977
    %v2610 = vpack.c.b16 %v1986, %v1978
    %v2611 = vpack.c.b16 %v1987, %v1979
    %v2612 = vpack.c.b16 %v1988, %v1980
    %v2613 = vpack.c.b16 %v1997, %v1989
    %v2614 = vpack.c.b16 %v1998, %v1990
    %v2615 = vpack.c.b16 %v1999, %v1991
    %v2616 = vpack.c.b16 %v2000, %v1992
    %v2617 = vpack.c.b16 %v2001, %v1993
    %v2618 = vpack.c.b16 %v2002, %v1994
    %v2619 = vpack.c.b16 %v2003, %v1995
    %v2620 = vpack.c.b16 %v2004, %v1996
    %v2621 = vpack.c.b16 %v2013, %v2005
    %v2622 = vpack.c.b16 %v2014, %v2006
    %v2623 = vpack.c.b16 %v2015, %v2007
    %v2624 = vpack.c.b16 %v2016, %v2008
    %v2625 = vpack.c.b16 %v2017, %v2009
    %v2626 = vpack.c.b16 %v2018, %v2010
    %v2627 = vpack.c.b16 %v2019, %v2011
    %v2628 = vpack.c.b16 %v2020, %v2012
    %v2629 = vpack.c.b16 %v2029, %v2021
    %v2630 = vpack.c.b16 %v2030, %v2022
    %v2631 = vpack.c.b16 %v2031, %v2023
    %v2632 = vpack.c.b16 %v2032, %v2024
    %v2633 = vpack.c.b16 %v2033, %v2025
    %v2634 = vpack.c.b16 %v2034, %v2026
    %v2635 = vpack.c.b16 %v2035, %v2027
    %v2636 = vpack.c.b16 %v2036, %v2028
    %v2637 = vpack.c.b16 %v2045, %v2037
    %v2638 = vpack.c.b16 %v2046, %v2038
    %v2639 = vpack.c.b16 %v2047, %v2039
    %v2640 = vpack.c.b16 %v2048, %v2040
    %v2641 = vpack.c.b16 %v2049, %v2041
    %v2642 = vpack.c.b16 %v2050, %v2042
    %v2643 = vpack.c.b16 %v2051, %v2043
    %v2644 = vpack.c.b16 %v2052, %v2044
    %v2645 = vpack.c.b16 %v2061, %v2053
    %v2646 = vpack.c.b16 %v2062, %v2054
    %v2647 = vpack.c.b16 %v2063, %v2055
    %v2648 = vpack.c.b16 %v2064, %v2056
    %v2649 = vpack.c.b16 %v2065, %v2057
    %v2650 = vpack.c.b16 %v2066, %v2058
    %v2651 = vpack.c.b16 %v2067, %v2059
    %v2652 = vpack.c.b16 %v2068, %v2060
    %v2653 = vpack.c.b16 %v2077, %v2069
    %v2654 = vpack.c.b16 %v2078, %v2070
    %v2655 = vpack.c.b16 %v2079, %v2071
    %v2656 = vpack.c.b16 %v2080, %v2072
    %v2657 = vpack.c.b16 %v2081, %v2073
    %v2658 = vpack.c.b16 %v2082, %v2074
    %v2659 = vpack.c.b16 %v2083, %v2075
    %v2660 = vpack.c.b16 %v2084, %v2076
    %v2661 = vpack.c.b16 %v2093, %v2085
    %v2662 = vpack.c.b16 %v2094, %v2086
    %v2663 = vpack.c.b16 %v2095, %v2087
    %v2664 = vpack.c.b16 %v2096, %v2088
    %v2665 = vpack.c.b16 %v2097, %v2089
    %v2666 = vpack.c.b16 %v2098, %v2090
    %v2667 = vpack.c.b16 %v2099, %v2091
    %v2668 = vpack.c.b16 %v2100, %v2092
    %v2669 = vpack.c.b16 %v2109, %v2101
    %v2670 = vpack.c.b16 %v2110, %v2102
    %v2671 = vpack.c.b16 %v2111, %v2103
    %v2672 = vpack.c.b16 %v2112, %v2104
    %v2673 = vpack.c.b16 %v2113, %v2105
    %v2674 = vpack.c.b16 %v2114, %v2106
    %v2675 = vpack.c.b16 %v2115, %v2107
    %v2676 = vpack.c.b16 %v2116, %v2108
    %v2677 = vpack.c.b16 %v2125, %v2117
    %v2678 = vpack.c.b16 %v2126, %v2118
    %v2679 = vpack.c.b16 %v2127, %v2119
    %v2680 = vpack.c.b16 %v2128, %v2120
    %v2681 = vpack.c.b16 %v2129, %v2121
    %v2682 = vpack.c.b16 %v2130, %v2122
    %v2683 = vpack.c.b16 %v2131, %v2123
    %v2684 = vpack.c.b16 %v2132, %v2124
    %v2685 = vpack.c.b16 %v2141, %v2133
    %v2686 = vpack.c.b16 %v2142, %v2134
    %v2687 = vpack.c.b16 %v2143, %v2135
    %v2688 = vpack.c.b16 %v2144, %v2136
    %v2689 = vpack.c.b16 %v2145, %v2137
    %v2690 = vpack.c.b16 %v2146, %v2138
    %v2691 = vpack.c.b16 %v2147, %v2139
    %v2692 = vpack.c.b16 %v2148, %v2140
    %v2693 = vpack.c.b16 %v2157, %v2149
    %v2694 = vpack.c.b16 %v2158, %v2150
    %v2695 = vpack.c.b16 %v2159, %v2151
    %v2696 = vpack.c.b16 %v2160, %v2152
    %v2697 = vpack.c.b16 %v2161, %v2153
    %v2698 = vpack.c.b16 %v2162, %v2154
    %v2699 = vpack.c.b16 %v2163, %v2155
    %v2700 = vpack.c.b16 %v2164, %v2156
    %v2701 = vpack.c.b16 %v2173, %v2165
    %v2702 = vpack.c.b16 %v2174, %v2166
    %v2703 = vpack.c.b16 %v2175, %v2167
    %v2704 = vpack.c.b16 %v2176, %v2168
    %v2705 = vpack.c.b16 %v2177, %v2169
    %v2706 = vpack.c.b16 %v2178, %v2170
    %v2707 = vpack.c.b16 %v2179, %v2171
    %v2708 = vpack.c.b16 %v2180, %v2172
    %v2709 = vpack.c.b16 %v2189, %v2181
    %v2710 = vpack.c.b16 %v2190, %v2182
    %v2711 = vpack.c.b16 %v2191, %v2183
    %v2712 = vpack.c.b16 %v2192, %v2184
    %v2713 = vpack.c.b16 %v2193, %v2185
    %v2714 = vpack.c.b16 %v2194, %v2186
    %v2715 = vpack.c.b16 %v2195, %v2187
    %v2716 = vpack.c.b16 %v2196, %v2188
    %v2717 = vpack.c.b16 %v2205, %v2197
    %v2718 = vpack.c.b16 %v2206, %v2198
    %v2719 = vpack.c.b16 %v2207, %v2199
    %v2720 = vpack.c.b16 %v2208, %v2200
    %v2721 = vpack.c.b16 %v2209, %v2201
    %v2722 = vpack.c.b16 %v2210, %v2202
    %v2723 = vpack.c.b16 %v2211, %v2203
    %v2724 = vpack.c.b16 %v2212, %v2204
    %3237 = vmatprep.subr.bf16.mxu0 %v2270
    %3238 = vmatpush1.bf16.msra.mxu0 %v2269
    %3239 = vmatprep.subr.bf16.mxu0 %v2262
    %3240 = vmatpush1.bf16.msra.mxu0 %v2261
    %3241 = vmatprep.subr.bf16.mxu0 %v2254
    %3242 = vmatpush1.bf16.msra.mxu0 %v2253
    %3243 = vmatprep.subr.bf16.mxu0 %v2246
    %3244 = vmatpush1.bf16.msra.mxu0 %v2245
    %3245 = vmatprep.subr.bf16.mxu0 %v2238
    %3246 = vmatpush1.bf16.msra.mxu0 %v2237
    %3247 = vmatprep.subr.bf16.mxu0 %v2230
    %3248 = vmatpush1.bf16.msra.mxu0 %v2229
    %3249 = vmatprep.subr.bf16.mxu0 %v2222
    %3250 = vmatpush1.bf16.msra.mxu0 %v2221
    %3251 = vmatprep.subr.bf16.mxu0 %v2214
    %3252 = vmatpush1.bf16.msra.mxu0 %v2213
    %3253 = vmatprep.subr.bf16.mxu0 %v2334
    %3254 = vmatpush2.bf16.msra.mxu0 %v2333
    %3255 = vmatprep.subr.bf16.mxu0 %v2326
    %3256 = vmatpush2.bf16.msra.mxu0 %v2325
    %3257 = vmatprep.subr.bf16.mxu0 %v2318
    %3258 = vmatpush2.bf16.msra.mxu0 %v2317
    %3259 = vmatprep.subr.bf16.mxu0 %v2310
    %3260 = vmatpush2.bf16.msra.mxu0 %v2309
    %3261 = vmatprep.subr.bf16.mxu0 %v2302
    %3262 = vmatpush2.bf16.msra.mxu0 %v2301
    %3263 = vmatprep.subr.bf16.mxu0 %v2294
    %3264 = vmatpush2.bf16.msra.mxu0 %v2293
    %3265 = vmatprep.subr.bf16.mxu0 %v2286
    %3266 = vmatpush2.bf16.msra.mxu0 %v2285
    %3267 = vmatprep.subr.bf16.mxu0 %v2278
    %3268 = vmatpush2.bf16.msra.mxu0 %v2277
    %3269 = vmatprep.mubr.bf16.mxu0 %v158
    %3270 = vmatmul.mubr.bf16.gmra.mxu0 %v157
    %v3271 = vpop.f32.mrf.mxu0
    %v3272 = vadd.f32 0.0, %v3271
    %v3273 = vpop.f32.mrf.mxu0
    %v3274 = vadd.f32 0.0, %v3273
    %v3275 = vpop.f32.mrf.mxu0
    %v3276 = vadd.f32 0.0, %v3275
    %v3277 = vpop.f32.mrf.mxu0
    %v3278 = vadd.f32 0.0, %v3277
    %3279 = vdwg.mxu0
    %3280 = vmatprep.subr.bf16.mxu0 %v2398
    %3281 = vmatpush1.bf16.msra.mxu0 %v2397
    %3282 = vmatprep.subr.bf16.mxu0 %v2390
    %3283 = vmatpush1.bf16.msra.mxu0 %v2389
    %3284 = vmatprep.subr.bf16.mxu0 %v2382
    %3285 = vmatpush1.bf16.msra.mxu0 %v2381
    %3286 = vmatprep.subr.bf16.mxu0 %v2374
    %3287 = vmatpush1.bf16.msra.mxu0 %v2373
    %3288 = vmatprep.subr.bf16.mxu0 %v2366
    %3289 = vmatpush1.bf16.msra.mxu0 %v2365
    %3290 = vmatprep.subr.bf16.mxu0 %v2358
    %3291 = vmatpush1.bf16.msra.mxu0 %v2357
    %3292 = vmatprep.subr.bf16.mxu0 %v2350
    %3293 = vmatpush1.bf16.msra.mxu0 %v2349
    %3294 = vmatprep.subr.bf16.mxu0 %v2342
    %3295 = vmatpush1.bf16.msra.mxu0 %v2341
    %3296 = vmatprep.subr.bf16.mxu0 %v2462
    %3297 = vmatpush2.bf16.msra.mxu0 %v2461
    %3298 = vmatprep.subr.bf16.mxu0 %v2454
    %3299 = vmatpush2.bf16.msra.mxu0 %v2453
    %3300 = vmatprep.subr.bf16.mxu0 %v2446
    %3301 = vmatpush2.bf16.msra.mxu0 %v2445
    %3302 = vmatprep.subr.bf16.mxu0 %v2438
    %3303 = vmatpush2.bf16.msra.mxu0 %v2437
    %3304 = vmatprep.subr.bf16.mxu0 %v2430
    %3305 = vmatpush2.bf16.msra.mxu0 %v2429
    %3306 = vmatprep.subr.bf16.mxu0 %v2422
    %3307 = vmatpush2.bf16.msra.mxu0 %v2421
    %3308 = vmatprep.subr.bf16.mxu0 %v2414
    %3309 = vmatpush2.bf16.msra.mxu0 %v2413
    %3310 = vmatprep.subr.bf16.mxu0 %v2406
    %3311 = vmatpush2.bf16.msra.mxu0 %v2405
    %3312 = vmatprep.mubr.bf16.mxu0 %v160
    %3313 = vmatmul.mubr.bf16.gmra.mxu0 %v159
    %v3314 = vpop.f32.mrf.mxu0
    %v3315 = vadd.f32 %v3272, %v3314
    %v3316 = vpop.f32.mrf.mxu0
    %v3317 = vadd.f32 %v3274, %v3316
    %v3318 = vpop.f32.mrf.mxu0
    %v3319 = vadd.f32 %v3276, %v3318
    %v3320 = vpop.f32.mrf.mxu0
    %v3321 = vadd.f32 %v3278, %v3320
    %3322 = vdwg.mxu0
    %3323 = vmatprep.subr.bf16.mxu0 %v2526
    %3324 = vmatpush1.bf16.msra.mxu0 %v2525
    %3325 = vmatprep.subr.bf16.mxu0 %v2518
    %3326 = vmatpush1.bf16.msra.mxu0 %v2517
    %3327 = vmatprep.subr.bf16.mxu0 %v2510
    %3328 = vmatpush1.bf16.msra.mxu0 %v2509
    %3329 = vmatprep.subr.bf16.mxu0 %v2502
    %3330 = vmatpush1.bf16.msra.mxu0 %v2501
    %3331 = vmatprep.subr.bf16.mxu0 %v2494
    %3332 = vmatpush1.bf16.msra.mxu0 %v2493
    %3333 = vmatprep.subr.bf16.mxu0 %v2486
    %3334 = vmatpush1.bf16.msra.mxu0 %v2485
    %3335 = vmatprep.subr.bf16.mxu0 %v2478
    %3336 = vmatpush1.bf16.msra.mxu0 %v2477
    %3337 = vmatprep.subr.bf16.mxu0 %v2470
    %3338 = vmatpush1.bf16.msra.mxu0 %v2469
    %3339 = vmatprep.subr.bf16.mxu0 %v2590
    %3340 = vmatpush2.bf16.msra.mxu0 %v2589
    %3341 = vmatprep.subr.bf16.mxu0 %v2582
    %3342 = vmatpush2.bf16.msra.mxu0 %v2581
    %3343 = vmatprep.subr.bf16.mxu0 %v2574
    %3344 = vmatpush2.bf16.msra.mxu0 %v2573
    %3345 = vmatprep.subr.bf16.mxu0 %v2566
    %3346 = vmatpush2.bf16.msra.mxu0 %v2565
    %3347 = vmatprep.subr.bf16.mxu0 %v2558
    %3348 = vmatpush2.bf16.msra.mxu0 %v2557
    %3349 = vmatprep.subr.bf16.mxu0 %v2550
    %3350 = vmatpush2.bf16.msra.mxu0 %v2549
    %3351 = vmatprep.subr.bf16.mxu0 %v2542
    %3352 = vmatpush2.bf16.msra.mxu0 %v2541
    %3353 = vmatprep.subr.bf16.mxu0 %v2534
    %3354 = vmatpush2.bf16.msra.mxu0 %v2533
    %3355 = vmatprep.mubr.bf16.mxu0 %v162
    %3356 = vmatmul.mubr.bf16.gmra.mxu0 %v161
    %v3357 = vpop.f32.mrf.mxu0
    %v3358 = vadd.f32 %v3315, %v3357
    %v3359 = vpop.f32.mrf.mxu0
    %v3360 = vadd.f32 %v3317, %v3359
    %v3361 = vpop.f32.mrf.mxu0
    %v3362 = vadd.f32 %v3319, %v3361
    %v3363 = vpop.f32.mrf.mxu0
    %v3364 = vadd.f32 %v3321, %v3363
    %3365 = vdwg.mxu0
    %3366 = vmatprep.subr.bf16.mxu0 %v2654
    %3367 = vmatpush1.bf16.msra.mxu0 %v2653
    %3368 = vmatprep.subr.bf16.mxu0 %v2646
    %3369 = vmatpush1.bf16.msra.mxu0 %v2645
    %3370 = vmatprep.subr.bf16.mxu0 %v2638
    %3371 = vmatpush1.bf16.msra.mxu0 %v2637
    %3372 = vmatprep.subr.bf16.mxu0 %v2630
    %3373 = vmatpush1.bf16.msra.mxu0 %v2629
    %3374 = vmatprep.subr.bf16.mxu0 %v2622
    %3375 = vmatpush1.bf16.msra.mxu0 %v2621
    %3376 = vmatprep.subr.bf16.mxu0 %v2614
    %3377 = vmatpush1.bf16.msra.mxu0 %v2613
    %3378 = vmatprep.subr.bf16.mxu0 %v2606
    %3379 = vmatpush1.bf16.msra.mxu0 %v2605
    %3380 = vmatprep.subr.bf16.mxu0 %v2598
    %3381 = vmatpush1.bf16.msra.mxu0 %v2597
    %3382 = vmatprep.subr.bf16.mxu0 %v2718
    %3383 = vmatpush2.bf16.msra.mxu0 %v2717
    %3384 = vmatprep.subr.bf16.mxu0 %v2710
    %3385 = vmatpush2.bf16.msra.mxu0 %v2709
    %3386 = vmatprep.subr.bf16.mxu0 %v2702
    %3387 = vmatpush2.bf16.msra.mxu0 %v2701
    %3388 = vmatprep.subr.bf16.mxu0 %v2694
    %3389 = vmatpush2.bf16.msra.mxu0 %v2693
    %3390 = vmatprep.subr.bf16.mxu0 %v2686
    %3391 = vmatpush2.bf16.msra.mxu0 %v2685
    %3392 = vmatprep.subr.bf16.mxu0 %v2678
    %3393 = vmatpush2.bf16.msra.mxu0 %v2677
    %3394 = vmatprep.subr.bf16.mxu0 %v2670
    %3395 = vmatpush2.bf16.msra.mxu0 %v2669
    %3396 = vmatprep.subr.bf16.mxu0 %v2662
    %3397 = vmatpush2.bf16.msra.mxu0 %v2661
    %3398 = vmatprep.mubr.bf16.mxu0 %v164
    %3399 = vmatmul.mubr.bf16.gmra.mxu0 %v163
    %v3400 = vpop.f32.mrf.mxu0
    %v3401 = vadd.f32 %v3358, %v3400
    %v3402 = vpop.f32.mrf.mxu0
    %v3403 = vadd.f32 %v3360, %v3402
    %v3404 = vpop.f32.mrf.mxu0
    %v3405 = vadd.f32 %v3362, %v3404
    %v3406 = vpop.f32.mrf.mxu0
    %v3407 = vadd.f32 %v3364, %v3406
    %3408 = vdwg.mxu0
    %3409 = vmatprep.subr.bf16.mxu0 %v2272
    %3410 = vmatpush1.bf16.msra.mxu0 %v2271
    %3411 = vmatprep.subr.bf16.mxu0 %v2264
    %3412 = vmatpush1.bf16.msra.mxu0 %v2263
    %3413 = vmatprep.subr.bf16.mxu0 %v2256
    %3414 = vmatpush1.bf16.msra.mxu0 %v2255
    %3415 = vmatprep.subr.bf16.mxu0 %v2248
    %3416 = vmatpush1.bf16.msra.mxu0 %v2247
    %3417 = vmatprep.subr.bf16.mxu0 %v2240
    %3418 = vmatpush1.bf16.msra.mxu0 %v2239
    %3419 = vmatprep.subr.bf16.mxu0 %v2232
    %3420 = vmatpush1.bf16.msra.mxu0 %v2231
    %3421 = vmatprep.subr.bf16.mxu0 %v2224
    %3422 = vmatpush1.bf16.msra.mxu0 %v2223
    %3423 = vmatprep.subr.bf16.mxu0 %v2216
    %3424 = vmatpush1.bf16.msra.mxu0 %v2215
    %3425 = vmatprep.subr.bf16.mxu0 %v2336
    %3426 = vmatpush2.bf16.msra.mxu0 %v2335
    %3427 = vmatprep.subr.bf16.mxu0 %v2328
    %3428 = vmatpush2.bf16.msra.mxu0 %v2327
    %3429 = vmatprep.subr.bf16.mxu0 %v2320
    %3430 = vmatpush2.bf16.msra.mxu0 %v2319
    %3431 = vmatprep.subr.bf16.mxu0 %v2312
    %3432 = vmatpush2.bf16.msra.mxu0 %v2311
    %3433 = vmatprep.subr.bf16.mxu0 %v2304
    %3434 = vmatpush2.bf16.msra.mxu0 %v2303
    %3435 = vmatprep.subr.bf16.mxu0 %v2296
    %3436 = vmatpush2.bf16.msra.mxu0 %v2295
    %3437 = vmatprep.subr.bf16.mxu0 %v2288
    %3438 = vmatpush2.bf16.msra.mxu0 %v2287
    %3439 = vmatprep.subr.bf16.mxu0 %v2280
    %3440 = vmatpush2.bf16.msra.mxu0 %v2279
    %3441 = vmatprep.mubr.bf16.mxu0 %v158
    %3442 = vmatmul.mubr.bf16.gmra.mxu0 %v157
    %v3443 = vpop.f32.mrf.mxu0
    %v3444 = vadd.f32 0.0, %v3443
    %v3445 = vpop.f32.mrf.mxu0
    %v3446 = vadd.f32 0.0, %v3445
    %v3447 = vpop.f32.mrf.mxu0
    %v3448 = vadd.f32 0.0, %v3447
    %v3449 = vpop.f32.mrf.mxu0
    %v3450 = vadd.f32 0.0, %v3449
    %3451 = vdwg.mxu0
    %3452 = vmatprep.subr.bf16.mxu0 %v2400
    %3453 = vmatpush1.bf16.msra.mxu0 %v2399
    %3454 = vmatprep.subr.bf16.mxu0 %v2392
    %3455 = vmatpush1.bf16.msra.mxu0 %v2391
    %3456 = vmatprep.subr.bf16.mxu0 %v2384
    %3457 = vmatpush1.bf16.msra.mxu0 %v2383
    %3458 = vmatprep.subr.bf16.mxu0 %v2376
    %3459 = vmatpush1.bf16.msra.mxu0 %v2375
    %3460 = vmatprep.subr.bf16.mxu0 %v2368
    %3461 = vmatpush1.bf16.msra.mxu0 %v2367
    %3462 = vmatprep.subr.bf16.mxu0 %v2360
    %3463 = vmatpush1.bf16.msra.mxu0 %v2359
    %3464 = vmatprep.subr.bf16.mxu0 %v2352
    %3465 = vmatpush1.bf16.msra.mxu0 %v2351
    %3466 = vmatprep.subr.bf16.mxu0 %v2344
    %3467 = vmatpush1.bf16.msra.mxu0 %v2343
    %3468 = vmatprep.subr.bf16.mxu0 %v2464
    %3469 = vmatpush2.bf16.msra.mxu0 %v2463
    %3470 = vmatprep.subr.bf16.mxu0 %v2456
    %3471 = vmatpush2.bf16.msra.mxu0 %v2455
    %3472 = vmatprep.subr.bf16.mxu0 %v2448
    %3473 = vmatpush2.bf16.msra.mxu0 %v2447
    %3474 = vmatprep.subr.bf16.mxu0 %v2440
    %3475 = vmatpush2.bf16.msra.mxu0 %v2439
    %3476 = vmatprep.subr.bf16.mxu0 %v2432
    %3477 = vmatpush2.bf16.msra.mxu0 %v2431
    %3478 = vmatprep.subr.bf16.mxu0 %v2424
    %3479 = vmatpush2.bf16.msra.mxu0 %v2423
    %3480 = vmatprep.subr.bf16.mxu0 %v2416
    %3481 = vmatpush2.bf16.msra.mxu0 %v2415
    %3482 = vmatprep.subr.bf16.mxu0 %v2408
    %3483 = vmatpush2.bf16.msra.mxu0 %v2407
    %3484 = vmatprep.mubr.bf16.mxu0 %v160
    %3485 = vmatmul.mubr.bf16.gmra.mxu0 %v159
    %v3486 = vpop.f32.mrf.mxu0
    %v3487 = vadd.f32 %v3444, %v3486
    %v3488 = vpop.f32.mrf.mxu0
    %v3489 = vadd.f32 %v3446, %v3488
    %v3490 = vpop.f32.mrf.mxu0
    %v3491 = vadd.f32 %v3448, %v3490
    %v3492 = vpop.f32.mrf.mxu0
    %v3493 = vadd.f32 %v3450, %v3492
    %3494 = vdwg.mxu0
    %3495 = vmatprep.subr.bf16.mxu0 %v2528
    %3496 = vmatpush1.bf16.msra.mxu0 %v2527
    %3497 = vmatprep.subr.bf16.mxu0 %v2520
    %3498 = vmatpush1.bf16.msra.mxu0 %v2519
    %3499 = vmatprep.subr.bf16.mxu0 %v2512
    %3500 = vmatpush1.bf16.msra.mxu0 %v2511
    %3501 = vmatprep.subr.bf16.mxu0 %v2504
    %3502 = vmatpush1.bf16.msra.mxu0 %v2503
    %3503 = vmatprep.subr.bf16.mxu0 %v2496
    %3504 = vmatpush1.bf16.msra.mxu0 %v2495
    %3505 = vmatprep.subr.bf16.mxu0 %v2488
    %3506 = vmatpush1.bf16.msra.mxu0 %v2487
    %3507 = vmatprep.subr.bf16.mxu0 %v2480
    %3508 = vmatpush1.bf16.msra.mxu0 %v2479
    %3509 = vmatprep.subr.bf16.mxu0 %v2472
    %3510 = vmatpush1.bf16.msra.mxu0 %v2471
    %3511 = vmatprep.subr.bf16.mxu0 %v2592
    %3512 = vmatpush2.bf16.msra.mxu0 %v2591
    %3513 = vmatprep.subr.bf16.mxu0 %v2584
    %3514 = vmatpush2.bf16.msra.mxu0 %v2583
    %3515 = vmatprep.subr.bf16.mxu0 %v2576
    %3516 = vmatpush2.bf16.msra.mxu0 %v2575
    %3517 = vmatprep.subr.bf16.mxu0 %v2568
    %3518 = vmatpush2.bf16.msra.mxu0 %v2567
    %3519 = vmatprep.subr.bf16.mxu0 %v2560
    %3520 = vmatpush2.bf16.msra.mxu0 %v2559
    %3521 = vmatprep.subr.bf16.mxu0 %v2552
    %3522 = vmatpush2.bf16.msra.mxu0 %v2551
    %3523 = vmatprep.subr.bf16.mxu0 %v2544
    %3524 = vmatpush2.bf16.msra.mxu0 %v2543
    %3525 = vmatprep.subr.bf16.mxu0 %v2536
    %3526 = vmatpush2.bf16.msra.mxu0 %v2535
    %3527 = vmatprep.mubr.bf16.mxu0 %v162
    %3528 = vmatmul.mubr.bf16.gmra.mxu0 %v161
    %v3529 = vpop.f32.mrf.mxu0
    %v3530 = vadd.f32 %v3487, %v3529
    %v3531 = vpop.f32.mrf.mxu0
    %v3532 = vadd.f32 %v3489, %v3531
    %v3533 = vpop.f32.mrf.mxu0
    %v3534 = vadd.f32 %v3491, %v3533
    %v3535 = vpop.f32.mrf.mxu0
    %v3536 = vadd.f32 %v3493, %v3535
    %3537 = vdwg.mxu0
    %3538 = vmatprep.subr.bf16.mxu0 %v2656
    %3539 = vmatpush1.bf16.msra.mxu0 %v2655
    %3540 = vmatprep.subr.bf16.mxu0 %v2648
    %3541 = vmatpush1.bf16.msra.mxu0 %v2647
    %3542 = vmatprep.subr.bf16.mxu0 %v2640
    %3543 = vmatpush1.bf16.msra.mxu0 %v2639
    %3544 = vmatprep.subr.bf16.mxu0 %v2632
    %3545 = vmatpush1.bf16.msra.mxu0 %v2631
    %3546 = vmatprep.subr.bf16.mxu0 %v2624
    %3547 = vmatpush1.bf16.msra.mxu0 %v2623
    %3548 = vmatprep.subr.bf16.mxu0 %v2616
    %3549 = vmatpush1.bf16.msra.mxu0 %v2615
    %3550 = vmatprep.subr.bf16.mxu0 %v2608
    %3551 = vmatpush1.bf16.msra.mxu0 %v2607
    %3552 = vmatprep.subr.bf16.mxu0 %v2600
    %3553 = vmatpush1.bf16.msra.mxu0 %v2599
    %3554 = vmatprep.subr.bf16.mxu0 %v2720
    %3555 = vmatpush2.bf16.msra.mxu0 %v2719
    %3556 = vmatprep.subr.bf16.mxu0 %v2712
    %3557 = vmatpush2.bf16.msra.mxu0 %v2711
    %3558 = vmatprep.subr.bf16.mxu0 %v2704
    %3559 = vmatpush2.bf16.msra.mxu0 %v2703
    %3560 = vmatprep.subr.bf16.mxu0 %v2696
    %3561 = vmatpush2.bf16.msra.mxu0 %v2695
    %3562 = vmatprep.subr.bf16.mxu0 %v2688
    %3563 = vmatpush2.bf16.msra.mxu0 %v2687
    %3564 = vmatprep.subr.bf16.mxu0 %v2680
    %3565 = vmatpush2.bf16.msra.mxu0 %v2679
    %3566 = vmatprep.subr.bf16.mxu0 %v2672
    %3567 = vmatpush2.bf16.msra.mxu0 %v2671
    %3568 = vmatprep.subr.bf16.mxu0 %v2664
    %3569 = vmatpush2.bf16.msra.mxu0 %v2663
    %3570 = vmatprep.mubr.bf16.mxu0 %v164
    %3571 = vmatmul.mubr.bf16.gmra.mxu0 %v163
    %v3572 = vpop.f32.mrf.mxu0
    %v3573 = vadd.f32 %v3530, %v3572
    %v3574 = vpop.f32.mrf.mxu0
    %v3575 = vadd.f32 %v3532, %v3574
    %v3576 = vpop.f32.mrf.mxu0
    %v3577 = vadd.f32 %v3534, %v3576
    %v3578 = vpop.f32.mrf.mxu0
    %v3579 = vadd.f32 %v3536, %v3578
    %3580 = vdwg.mxu0
    %3581 = vmatprep.subr.bf16.mxu0 %v2274
    %3582 = vmatpush1.bf16.msra.mxu0 %v2273
    %3583 = vmatprep.subr.bf16.mxu0 %v2266
    %3584 = vmatpush1.bf16.msra.mxu0 %v2265
    %3585 = vmatprep.subr.bf16.mxu0 %v2258
    %3586 = vmatpush1.bf16.msra.mxu0 %v2257
    %3587 = vmatprep.subr.bf16.mxu0 %v2250
    %3588 = vmatpush1.bf16.msra.mxu0 %v2249
    %3589 = vmatprep.subr.bf16.mxu0 %v2242
    %3590 = vmatpush1.bf16.msra.mxu0 %v2241
    %3591 = vmatprep.subr.bf16.mxu0 %v2234
    %3592 = vmatpush1.bf16.msra.mxu0 %v2233
    %3593 = vmatprep.subr.bf16.mxu0 %v2226
    %3594 = vmatpush1.bf16.msra.mxu0 %v2225
    %3595 = vmatprep.subr.bf16.mxu0 %v2218
    %3596 = vmatpush1.bf16.msra.mxu0 %v2217
    %3597 = vmatprep.subr.bf16.mxu0 %v2338
    %3598 = vmatpush2.bf16.msra.mxu0 %v2337
    %3599 = vmatprep.subr.bf16.mxu0 %v2330
    %3600 = vmatpush2.bf16.msra.mxu0 %v2329
    %3601 = vmatprep.subr.bf16.mxu0 %v2322
    %3602 = vmatpush2.bf16.msra.mxu0 %v2321
    %3603 = vmatprep.subr.bf16.mxu0 %v2314
    %3604 = vmatpush2.bf16.msra.mxu0 %v2313
    %3605 = vmatprep.subr.bf16.mxu0 %v2306
    %3606 = vmatpush2.bf16.msra.mxu0 %v2305
    %3607 = vmatprep.subr.bf16.mxu0 %v2298
    %3608 = vmatpush2.bf16.msra.mxu0 %v2297
    %3609 = vmatprep.subr.bf16.mxu0 %v2290
    %3610 = vmatpush2.bf16.msra.mxu0 %v2289
    %3611 = vmatprep.subr.bf16.mxu0 %v2282
    %3612 = vmatpush2.bf16.msra.mxu0 %v2281
    %3613 = vmatprep.mubr.bf16.mxu0 %v158
    %3614 = vmatmul.mubr.bf16.gmra.mxu0 %v157
    %v3615 = vpop.f32.mrf.mxu0
    %v3616 = vadd.f32 0.0, %v3615
    %v3617 = vpop.f32.mrf.mxu0
    %v3618 = vadd.f32 0.0, %v3617
    %v3619 = vpop.f32.mrf.mxu0
    %v3620 = vadd.f32 0.0, %v3619
    %v3621 = vpop.f32.mrf.mxu0
    %v3622 = vadd.f32 0.0, %v3621
    %3623 = vdwg.mxu0
    %3624 = vmatprep.subr.bf16.mxu0 %v2402
    %3625 = vmatpush1.bf16.msra.mxu0 %v2401
    %3626 = vmatprep.subr.bf16.mxu0 %v2394
    %3627 = vmatpush1.bf16.msra.mxu0 %v2393
    %3628 = vmatprep.subr.bf16.mxu0 %v2386
    %3629 = vmatpush1.bf16.msra.mxu0 %v2385
    %3630 = vmatprep.subr.bf16.mxu0 %v2378
    %3631 = vmatpush1.bf16.msra.mxu0 %v2377
    %3632 = vmatprep.subr.bf16.mxu0 %v2370
    %3633 = vmatpush1.bf16.msra.mxu0 %v2369
    %3634 = vmatprep.subr.bf16.mxu0 %v2362
    %3635 = vmatpush1.bf16.msra.mxu0 %v2361
    %3636 = vmatprep.subr.bf16.mxu0 %v2354
    %3637 = vmatpush1.bf16.msra.mxu0 %v2353
    %3638 = vmatprep.subr.bf16.mxu0 %v2346
    %3639 = vmatpush1.bf16.msra.mxu0 %v2345
    %3640 = vmatprep.subr.bf16.mxu0 %v2466
    %3641 = vmatpush2.bf16.msra.mxu0 %v2465
    %3642 = vmatprep.subr.bf16.mxu0 %v2458
    %3643 = vmatpush2.bf16.msra.mxu0 %v2457
    %3644 = vmatprep.subr.bf16.mxu0 %v2450
    %3645 = vmatpush2.bf16.msra.mxu0 %v2449
    %3646 = vmatprep.subr.bf16.mxu0 %v2442
    %3647 = vmatpush2.bf16.msra.mxu0 %v2441
    %3648 = vmatprep.subr.bf16.mxu0 %v2434
    %3649 = vmatpush2.bf16.msra.mxu0 %v2433
    %3650 = vmatprep.subr.bf16.mxu0 %v2426
    %3651 = vmatpush2.bf16.msra.mxu0 %v2425
    %3652 = vmatprep.subr.bf16.mxu0 %v2418
    %3653 = vmatpush2.bf16.msra.mxu0 %v2417
    %3654 = vmatprep.subr.bf16.mxu0 %v2410
    %3655 = vmatpush2.bf16.msra.mxu0 %v2409
    %3656 = vmatprep.mubr.bf16.mxu0 %v160
    %3657 = vmatmul.mubr.bf16.gmra.mxu0 %v159
    %v3658 = vpop.f32.mrf.mxu0
    %v3659 = vadd.f32 %v3616, %v3658
    %v3660 = vpop.f32.mrf.mxu0
    %v3661 = vadd.f32 %v3618, %v3660
    %v3662 = vpop.f32.mrf.mxu0
    %v3663 = vadd.f32 %v3620, %v3662
    %v3664 = vpop.f32.mrf.mxu0
    %v3665 = vadd.f32 %v3622, %v3664
    %3666 = vdwg.mxu0
    %3667 = vmatprep.subr.bf16.mxu0 %v2530
    %3668 = vmatpush1.bf16.msra.mxu0 %v2529
    %3669 = vmatprep.subr.bf16.mxu0 %v2522
    %3670 = vmatpush1.bf16.msra.mxu0 %v2521
    %3671 = vmatprep.subr.bf16.mxu0 %v2514
    %3672 = vmatpush1.bf16.msra.mxu0 %v2513
    %3673 = vmatprep.subr.bf16.mxu0 %v2506
    %3674 = vmatpush1.bf16.msra.mxu0 %v2505
    %3675 = vmatprep.subr.bf16.mxu0 %v2498
    %3676 = vmatpush1.bf16.msra.mxu0 %v2497
    %3677 = vmatprep.subr.bf16.mxu0 %v2490
    %3678 = vmatpush1.bf16.msra.mxu0 %v2489
    %3679 = vmatprep.subr.bf16.mxu0 %v2482
    %3680 = vmatpush1.bf16.msra.mxu0 %v2481
    %3681 = vmatprep.subr.bf16.mxu0 %v2474
    %3682 = vmatpush1.bf16.msra.mxu0 %v2473
    %3683 = vmatprep.subr.bf16.mxu0 %v2594
    %3684 = vmatpush2.bf16.msra.mxu0 %v2593
    %3685 = vmatprep.subr.bf16.mxu0 %v2586
    %3686 = vmatpush2.bf16.msra.mxu0 %v2585
    %3687 = vmatprep.subr.bf16.mxu0 %v2578
    %3688 = vmatpush2.bf16.msra.mxu0 %v2577
    %3689 = vmatprep.subr.bf16.mxu0 %v2570
    %3690 = vmatpush2.bf16.msra.mxu0 %v2569
    %3691 = vmatprep.subr.bf16.mxu0 %v2562
    %3692 = vmatpush2.bf16.msra.mxu0 %v2561
    %3693 = vmatprep.subr.bf16.mxu0 %v2554
    %3694 = vmatpush2.bf16.msra.mxu0 %v2553
    %3695 = vmatprep.subr.bf16.mxu0 %v2546
    %3696 = vmatpush2.bf16.msra.mxu0 %v2545
    %3697 = vmatprep.subr.bf16.mxu0 %v2538
    %3698 = vmatpush2.bf16.msra.mxu0 %v2537
    %3699 = vmatprep.mubr.bf16.mxu0 %v162
    %3700 = vmatmul.mubr.bf16.gmra.mxu0 %v161
    %v3701 = vpop.f32.mrf.mxu0
    %v3702 = vadd.f32 %v3659, %v3701
    %v3703 = vpop.f32.mrf.mxu0
    %v3704 = vadd.f32 %v3661, %v3703
    %v3705 = vpop.f32.mrf.mxu0
    %v3706 = vadd.f32 %v3663, %v3705
    %v3707 = vpop.f32.mrf.mxu0
    %v3708 = vadd.f32 %v3665, %v3707
    %3709 = vdwg.mxu0
    %3710 = vmatprep.subr.bf16.mxu0 %v2658
    %3711 = vmatpush1.bf16.msra.mxu0 %v2657
    %3712 = vmatprep.subr.bf16.mxu0 %v2650
    %3713 = vmatpush1.bf16.msra.mxu0 %v2649
    %3714 = vmatprep.subr.bf16.mxu0 %v2642
    %3715 = vmatpush1.bf16.msra.mxu0 %v2641
    %3716 = vmatprep.subr.bf16.mxu0 %v2634
    %3717 = vmatpush1.bf16.msra.mxu0 %v2633
    %3718 = vmatprep.subr.bf16.mxu0 %v2626
    %3719 = vmatpush1.bf16.msra.mxu0 %v2625
    %3720 = vmatprep.subr.bf16.mxu0 %v2618
    %3721 = vmatpush1.bf16.msra.mxu0 %v2617
    %3722 = vmatprep.subr.bf16.mxu0 %v2610
    %3723 = vmatpush1.bf16.msra.mxu0 %v2609
    %3724 = vmatprep.subr.bf16.mxu0 %v2602
    %3725 = vmatpush1.bf16.msra.mxu0 %v2601
    %3726 = vmatprep.subr.bf16.mxu0 %v2722
    %3727 = vmatpush2.bf16.msra.mxu0 %v2721
    %3728 = vmatprep.subr.bf16.mxu0 %v2714
    %3729 = vmatpush2.bf16.msra.mxu0 %v2713
    %3730 = vmatprep.subr.bf16.mxu0 %v2706
    %3731 = vmatpush2.bf16.msra.mxu0 %v2705
    %3732 = vmatprep.subr.bf16.mxu0 %v2698
    %3733 = vmatpush2.bf16.msra.mxu0 %v2697
    %3734 = vmatprep.subr.bf16.mxu0 %v2690
    %3735 = vmatpush2.bf16.msra.mxu0 %v2689
    %3736 = vmatprep.subr.bf16.mxu0 %v2682
    %3737 = vmatpush2.bf16.msra.mxu0 %v2681
    %3738 = vmatprep.subr.bf16.mxu0 %v2674
    %3739 = vmatpush2.bf16.msra.mxu0 %v2673
    %3740 = vmatprep.subr.bf16.mxu0 %v2666
    %3741 = vmatpush2.bf16.msra.mxu0 %v2665
    %3742 = vmatprep.mubr.bf16.mxu0 %v164
    %3743 = vmatmul.mubr.bf16.gmra.mxu0 %v163
    %v3744 = vpop.f32.mrf.mxu0
    %v3745 = vadd.f32 %v3702, %v3744
    %v3746 = vpop.f32.mrf.mxu0
    %v3747 = vadd.f32 %v3704, %v3746
    %v3748 = vpop.f32.mrf.mxu0
    %v3749 = vadd.f32 %v3706, %v3748
    %v3750 = vpop.f32.mrf.mxu0
    %v3751 = vadd.f32 %v3708, %v3750
    %3752 = vdwg.mxu0
    %3753 = vmatprep.subr.bf16.mxu0 %v2276
    %3754 = vmatpush1.bf16.msra.mxu0 %v2275
    %3755 = vmatprep.subr.bf16.mxu0 %v2268
    %3756 = vmatpush1.bf16.msra.mxu0 %v2267
    %3757 = vmatprep.subr.bf16.mxu0 %v2260
    %3758 = vmatpush1.bf16.msra.mxu0 %v2259
    %3759 = vmatprep.subr.bf16.mxu0 %v2252
    %3760 = vmatpush1.bf16.msra.mxu0 %v2251
    %3761 = vmatprep.subr.bf16.mxu0 %v2244
    %3762 = vmatpush1.bf16.msra.mxu0 %v2243
    %3763 = vmatprep.subr.bf16.mxu0 %v2236
    %3764 = vmatpush1.bf16.msra.mxu0 %v2235
    %3765 = vmatprep.subr.bf16.mxu0 %v2228
    %3766 = vmatpush1.bf16.msra.mxu0 %v2227
    %3767 = vmatprep.subr.bf16.mxu0 %v2220
    %3768 = vmatpush1.bf16.msra.mxu0 %v2219
    %3769 = vmatprep.subr.bf16.mxu0 %v2340
    %3770 = vmatpush2.bf16.msra.mxu0 %v2339
    %3771 = vmatprep.subr.bf16.mxu0 %v2332
    %3772 = vmatpush2.bf16.msra.mxu0 %v2331
    %3773 = vmatprep.subr.bf16.mxu0 %v2324
    %3774 = vmatpush2.bf16.msra.mxu0 %v2323
    %3775 = vmatprep.subr.bf16.mxu0 %v2316
    %3776 = vmatpush2.bf16.msra.mxu0 %v2315
    %3777 = vmatprep.subr.bf16.mxu0 %v2308
    %3778 = vmatpush2.bf16.msra.mxu0 %v2307
    %3779 = vmatprep.subr.bf16.mxu0 %v2300
    %3780 = vmatpush2.bf16.msra.mxu0 %v2299
    %3781 = vmatprep.subr.bf16.mxu0 %v2292
    %3782 = vmatpush2.bf16.msra.mxu0 %v2291
    %3783 = vmatprep.subr.bf16.mxu0 %v2284
    %3784 = vmatpush2.bf16.msra.mxu0 %v2283
    %3785 = vmatprep.mubr.bf16.mxu0 %v158
    %3786 = vmatmul.mubr.bf16.gmra.mxu0 %v157
    %v3787 = vpop.f32.mrf.mxu0
    %v3788 = vadd.f32 0.0, %v3787
    %v3789 = vpop.f32.mrf.mxu0
    %v3790 = vadd.f32 0.0, %v3789
    %v3791 = vpop.f32.mrf.mxu0
    %v3792 = vadd.f32 0.0, %v3791
    %v3793 = vpop.f32.mrf.mxu0
    %v3794 = vadd.f32 0.0, %v3793
    %3795 = vdwg.mxu0
    %3796 = vmatprep.subr.bf16.mxu0 %v2404
    %3797 = vmatpush1.bf16.msra.mxu0 %v2403
    %3798 = vmatprep.subr.bf16.mxu0 %v2396
    %3799 = vmatpush1.bf16.msra.mxu0 %v2395
    %3800 = vmatprep.subr.bf16.mxu0 %v2388
    %3801 = vmatpush1.bf16.msra.mxu0 %v2387
    %3802 = vmatprep.subr.bf16.mxu0 %v2380
    %3803 = vmatpush1.bf16.msra.mxu0 %v2379
    %3804 = vmatprep.subr.bf16.mxu0 %v2372
    %3805 = vmatpush1.bf16.msra.mxu0 %v2371
    %3806 = vmatprep.subr.bf16.mxu0 %v2364
    %3807 = vmatpush1.bf16.msra.mxu0 %v2363
    %3808 = vmatprep.subr.bf16.mxu0 %v2356
    %3809 = vmatpush1.bf16.msra.mxu0 %v2355
    %3810 = vmatprep.subr.bf16.mxu0 %v2348
    %3811 = vmatpush1.bf16.msra.mxu0 %v2347
    %3812 = vmatprep.subr.bf16.mxu0 %v2468
    %3813 = vmatpush2.bf16.msra.mxu0 %v2467
    %3814 = vmatprep.subr.bf16.mxu0 %v2460
    %3815 = vmatpush2.bf16.msra.mxu0 %v2459
    %3816 = vmatprep.subr.bf16.mxu0 %v2452
    %3817 = vmatpush2.bf16.msra.mxu0 %v2451
    %3818 = vmatprep.subr.bf16.mxu0 %v2444
    %3819 = vmatpush2.bf16.msra.mxu0 %v2443
    %3820 = vmatprep.subr.bf16.mxu0 %v2436
    %3821 = vmatpush2.bf16.msra.mxu0 %v2435
    %3822 = vmatprep.subr.bf16.mxu0 %v2428
    %3823 = vmatpush2.bf16.msra.mxu0 %v2427
    %3824 = vmatprep.subr.bf16.mxu0 %v2420
    %3825 = vmatpush2.bf16.msra.mxu0 %v2419
    %3826 = vmatprep.subr.bf16.mxu0 %v2412
    %3827 = vmatpush2.bf16.msra.mxu0 %v2411
    %3828 = vmatprep.mubr.bf16.mxu0 %v160
    %3829 = vmatmul.mubr.bf16.gmra.mxu0 %v159
    %v3830 = vpop.f32.mrf.mxu0
    %v3831 = vadd.f32 %v3788, %v3830
    %v3832 = vpop.f32.mrf.mxu0
    %v3833 = vadd.f32 %v3790, %v3832
    %v3834 = vpop.f32.mrf.mxu0
    %v3835 = vadd.f32 %v3792, %v3834
    %v3836 = vpop.f32.mrf.mxu0
    %v3837 = vadd.f32 %v3794, %v3836
    %3838 = vdwg.mxu0
    %3839 = vmatprep.subr.bf16.mxu0 %v2532
    %3840 = vmatpush1.bf16.msra.mxu0 %v2531
    %3841 = vmatprep.subr.bf16.mxu0 %v2524
    %3842 = vmatpush1.bf16.msra.mxu0 %v2523
    %3843 = vmatprep.subr.bf16.mxu0 %v2516
    %3844 = vmatpush1.bf16.msra.mxu0 %v2515
    %3845 = vmatprep.subr.bf16.mxu0 %v2508
    %3846 = vmatpush1.bf16.msra.mxu0 %v2507
    %3847 = vmatprep.subr.bf16.mxu0 %v2500
    %3848 = vmatpush1.bf16.msra.mxu0 %v2499
    %3849 = vmatprep.subr.bf16.mxu0 %v2492
    %3850 = vmatpush1.bf16.msra.mxu0 %v2491
    %3851 = vmatprep.subr.bf16.mxu0 %v2484
    %3852 = vmatpush1.bf16.msra.mxu0 %v2483
    %3853 = vmatprep.subr.bf16.mxu0 %v2476
    %3854 = vmatpush1.bf16.msra.mxu0 %v2475
    %3855 = vmatprep.subr.bf16.mxu0 %v2596
    %3856 = vmatpush2.bf16.msra.mxu0 %v2595
    %3857 = vmatprep.subr.bf16.mxu0 %v2588
    %3858 = vmatpush2.bf16.msra.mxu0 %v2587
    %3859 = vmatprep.subr.bf16.mxu0 %v2580
    %3860 = vmatpush2.bf16.msra.mxu0 %v2579
    %3861 = vmatprep.subr.bf16.mxu0 %v2572
    %3862 = vmatpush2.bf16.msra.mxu0 %v2571
    %3863 = vmatprep.subr.bf16.mxu0 %v2564
    %3864 = vmatpush2.bf16.msra.mxu0 %v2563
    %3865 = vmatprep.subr.bf16.mxu0 %v2556
    %3866 = vmatpush2.bf16.msra.mxu0 %v2555
    %3867 = vmatprep.subr.bf16.mxu0 %v2548
    %3868 = vmatpush2.bf16.msra.mxu0 %v2547
    %3869 = vmatprep.subr.bf16.mxu0 %v2540
    %3870 = vmatpush2.bf16.msra.mxu0 %v2539
    %3871 = vmatprep.mubr.bf16.mxu0 %v162
    %3872 = vmatmul.mubr.bf16.gmra.mxu0 %v161
    %v3873 = vpop.f32.mrf.mxu0
    %v3874 = vadd.f32 %v3831, %v3873
    %v3875 = vpop.f32.mrf.mxu0
    %v3876 = vadd.f32 %v3833, %v3875
    %v3877 = vpop.f32.mrf.mxu0
    %v3878 = vadd.f32 %v3835, %v3877
    %v3879 = vpop.f32.mrf.mxu0
    %v3880 = vadd.f32 %v3837, %v3879
    %3881 = vdwg.mxu0
    %3882 = vmatprep.subr.bf16.mxu0 %v2660
    %3883 = vmatpush1.bf16.msra.mxu0 %v2659
    %3884 = vmatprep.subr.bf16.mxu0 %v2652
    %3885 = vmatpush1.bf16.msra.mxu0 %v2651
    %3886 = vmatprep.subr.bf16.mxu0 %v2644
    %3887 = vmatpush1.bf16.msra.mxu0 %v2643
    %3888 = vmatprep.subr.bf16.mxu0 %v2636
    %3889 = vmatpush1.bf16.msra.mxu0 %v2635
    %3890 = vmatprep.subr.bf16.mxu0 %v2628
    %3891 = vmatpush1.bf16.msra.mxu0 %v2627
    %3892 = vmatprep.subr.bf16.mxu0 %v2620
    %3893 = vmatpush1.bf16.msra.mxu0 %v2619
    %3894 = vmatprep.subr.bf16.mxu0 %v2612
    %3895 = vmatpush1.bf16.msra.mxu0 %v2611
    %3896 = vmatprep.subr.bf16.mxu0 %v2604
    %3897 = vmatpush1.bf16.msra.mxu0 %v2603
    %3898 = vmatprep.subr.bf16.mxu0 %v2724
    %3899 = vmatpush2.bf16.msra.mxu0 %v2723
    %3900 = vmatprep.subr.bf16.mxu0 %v2716
    %3901 = vmatpush2.bf16.msra.mxu0 %v2715
    %3902 = vmatprep.subr.bf16.mxu0 %v2708
    %3903 = vmatpush2.bf16.msra.mxu0 %v2707
    %3904 = vmatprep.subr.bf16.mxu0 %v2700
    %3905 = vmatpush2.bf16.msra.mxu0 %v2699
    %3906 = vmatprep.subr.bf16.mxu0 %v2692
    %3907 = vmatpush2.bf16.msra.mxu0 %v2691
    %3908 = vmatprep.subr.bf16.mxu0 %v2684
    %3909 = vmatpush2.bf16.msra.mxu0 %v2683
    %3910 = vmatprep.subr.bf16.mxu0 %v2676
    %3911 = vmatpush2.bf16.msra.mxu0 %v2675
    %3912 = vmatprep.subr.bf16.mxu0 %v2668
    %3913 = vmatpush2.bf16.msra.mxu0 %v2667
    %3914 = vmatprep.mubr.bf16.mxu0 %v164
    %3915 = vmatmul.mubr.bf16.gmra.mxu0 %v163
    %v3916 = vpop.f32.mrf.mxu0
    %v3917 = vadd.f32 %v3874, %v3916
    %v3918 = vpop.f32.mrf.mxu0
    %v3919 = vadd.f32 %v3876, %v3918
    %v3920 = vpop.f32.mrf.mxu0
    %v3921 = vadd.f32 %v3878, %v3920
    %v3922 = vpop.f32.mrf.mxu0
    %v3923 = vadd.f32 %v3880, %v3922
    %3924 = vdwg.mxu0
    %v3925 = vadd.f32 %v125, %v3401
    %v3926 = vadd.f32 %v126, %v3403
    %v3927 = vadd.f32 %v127, %v3573
    %v3928 = vadd.f32 %v128, %v3575
    %v3929 = vadd.f32 %v129, %v3745
    %v3930 = vadd.f32 %v130, %v3747
    %v3931 = vadd.f32 %v131, %v3917
    %v3932 = vadd.f32 %v132, %v3919
    %v3933 = vadd.f32 %v133, %v3405
    %v3934 = vadd.f32 %v134, %v3407
    %v3935 = vadd.f32 %v135, %v3577
    %v3936 = vadd.f32 %v136, %v3579
    %v3937 = vadd.f32 %v137, %v3749
    %v3938 = vadd.f32 %v138, %v3751
    %v3939 = vadd.f32 %v139, %v3921
    %v3940 = vadd.f32 %v140, %v3923
    %3941 = vst [vmem:[#allocation2] sm:$0xff] %v3925
    %3942 = vst [vmem:[#allocation2 + $0x8] sm:$0xff] %v3926
    %3943 = vst [vmem:[#allocation2 + $0x10] sm:$0xff] %v3927
    %3944 = vst [vmem:[#allocation2 + $0x18] sm:$0xff] %v3928
    %3945 = vst [vmem:[#allocation2 + $0x20] sm:$0xff] %v3929
    %3946 = vst [vmem:[#allocation2 + $0x28] sm:$0xff] %v3930
    %3947 = vst [vmem:[#allocation2 + $0x30] sm:$0xff] %v3931
    %3948 = vst [vmem:[#allocation2 + $0x38] sm:$0xff] %v3932
    %3949 = vst [vmem:[#allocation2 + $0x40] sm:$0xff] %v3933
    %3950 = vst [vmem:[#allocation2 + $0x48] sm:$0xff] %v3934
    %3951 = vst [vmem:[#allocation2 + $0x50] sm:$0xff] %v3935
    %3952 = vst [vmem:[#allocation2 + $0x58] sm:$0xff] %v3936
    %3953 = vst [vmem:[#allocation2 + $0x60] sm:$0xff] %v3937
    %3954 = vst [vmem:[#allocation2 + $0x68] sm:$0xff] %v3938
    %3955 = vst [vmem:[#allocation2 + $0x70] sm:$0xff] %v3939
    %3956 = vst [vmem:[#allocation2 + $0x78] sm:$0xff] %v3940
    // Predicated region
    $region58: #{tpu_custom_call.1} parent=1 // pred_check
      %p3957 = pneg %p105
    $region59: #{tpu_custom_call.1} parent=1 // pred_check_branch
      %3959 = sbr.rel (%p3957) target = $region61
    $region60: #{tpu_custom_call.1} parent=1 // pred_region
      %v3960 = vld [vmem:[#allocation2] sm:$0xff]
      %v3961 = vld [vmem:[#allocation2 + $0x8] sm:$0xff]
      %v3962 = vld [vmem:[#allocation2 + $0x10] sm:$0xff]
      %v3963 = vld [vmem:[#allocation2 + $0x18] sm:$0xff]
      %v3964 = vld [vmem:[#allocation2 + $0x20] sm:$0xff]
      %v3965 = vld [vmem:[#allocation2 + $0x28] sm:$0xff]
      %v3966 = vld [vmem:[#allocation2 + $0x30] sm:$0xff]
      %v3967 = vld [vmem:[#allocation2 + $0x38] sm:$0xff]
      %v3968 = vld [vmem:[#allocation2 + $0x40] sm:$0xff]
      %v3969 = vld [vmem:[#allocation2 + $0x48] sm:$0xff]
      %v3970 = vld [vmem:[#allocation2 + $0x50] sm:$0xff]
      %v3971 = vld [vmem:[#allocation2 + $0x58] sm:$0xff]
      %v3972 = vld [vmem:[#allocation2 + $0x60] sm:$0xff]
      %v3973 = vld [vmem:[#allocation2 + $0x68] sm:$0xff]
      %v3974 = vld [vmem:[#allocation2 + $0x70] sm:$0xff]
      %v3975 = vld [vmem:[#allocation2 + $0x78] sm:$0xff]
      %v3976 = vld [vmem:[#allocation9] sm:$0xff]
      %v3978 = vlaneseq
      %v3979 = vshrl.u32 %v3978, 7
      %v3980 = vsub.s32 0, %v3979
      %v3981 = vrot.slane %v3976, %v3980
      %v3982 = vlaneseq
      %v3983 = vshrl.u32 %v3982, 7
      %v3984 = vsub.s32 1, %v3983
      %v3985 = vrot.slane %v3976, %v3984
      %v3986 = vlaneseq
      %v3987 = vshrl.u32 %v3986, 7
      %v3988 = vsub.s32 2, %v3987
      %v3989 = vrot.slane %v3976, %v3988
      %v3990 = vlaneseq
      %v3991 = vshrl.u32 %v3990, 7
      %v3992 = vsub.s32 3, %v3991
      %v3993 = vrot.slane %v3976, %v3992
      %v3994 = vlaneseq
      %v3995 = vshrl.u32 %v3994, 7
      %v3996 = vsub.s32 4, %v3995
      %v3997 = vrot.slane %v3976, %v3996
      %v3998 = vlaneseq
      %v3999 = vshrl.u32 %v3998, 7
      %v4000 = vsub.s32 5, %v3999
      %v4001 = vrot.slane %v3976, %v4000
      %v4002 = vlaneseq
      %v4003 = vshrl.u32 %v4002, 7
      %v4004 = vsub.s32 6, %v4003
      %v4005 = vrot.slane %v3976, %v4004
      %v4006 = vlaneseq
      %v4007 = vshrl.u32 %v4006, 7
      %v4008 = vsub.s32 7, %v4007
      %v4009 = vrot.slane %v3976, %v4008
      %v4018 = vadd.f32 %v3960, %v3981
      %v4019 = vadd.f32 %v3961, %v3985
      %v4020 = vadd.f32 %v3962, %v3989
      %v4021 = vadd.f32 %v3963, %v3993
      %v4022 = vadd.f32 %v3964, %v3997
      %v4023 = vadd.f32 %v3965, %v4001
      %v4024 = vadd.f32 %v3966, %v4005
      %v4025 = vadd.f32 %v3967, %v4009
      %v4026 = vadd.f32 %v3968, %v3981
      %v4027 = vadd.f32 %v3969, %v3985
      %v4028 = vadd.f32 %v3970, %v3989
      %v4029 = vadd.f32 %v3971, %v3993
      %v4030 = vadd.f32 %v3972, %v3997
      %v4031 = vadd.f32 %v3973, %v4001
      %v4032 = vadd.f32 %v3974, %v4005
      %v4033 = vadd.f32 %v3975, %v4009
      %vm4034 = vcmp.ge.f32.partialorder %v4018, 0.0
      %vm4035 = vcmp.ge.f32.partialorder %v4019, 0.0
      %vm4036 = vcmp.ge.f32.partialorder %v4020, 0.0
      %vm4037 = vcmp.ge.f32.partialorder %v4021, 0.0
      %vm4038 = vcmp.ge.f32.partialorder %v4022, 0.0
      %vm4039 = vcmp.ge.f32.partialorder %v4023, 0.0
      %vm4040 = vcmp.ge.f32.partialorder %v4024, 0.0
      %vm4041 = vcmp.ge.f32.partialorder %v4025, 0.0
      %vm4042 = vcmp.ge.f32.partialorder %v4026, 0.0
      %vm4043 = vcmp.ge.f32.partialorder %v4027, 0.0
      %vm4044 = vcmp.ge.f32.partialorder %v4028, 0.0
      %vm4045 = vcmp.ge.f32.partialorder %v4029, 0.0
      %vm4046 = vcmp.ge.f32.partialorder %v4030, 0.0
      %vm4047 = vcmp.ge.f32.partialorder %v4031, 0.0
      %vm4048 = vcmp.ge.f32.partialorder %v4032, 0.0
      %vm4049 = vcmp.ge.f32.partialorder %v4033, 0.0
      %v4050 = vmul.f32 %v4018, 0.2
      %v4051 = vmul.f32 %v4019, 0.2
      %v4052 = vmul.f32 %v4020, 0.2
      %v4053 = vmul.f32 %v4021, 0.2
      %v4054 = vmul.f32 %v4022, 0.2
      %v4055 = vmul.f32 %v4023, 0.2
      %v4056 = vmul.f32 %v4024, 0.2
      %v4057 = vmul.f32 %v4025, 0.2
      %v4058 = vmul.f32 %v4026, 0.2
      %v4059 = vmul.f32 %v4027, 0.2
      %v4060 = vmul.f32 %v4028, 0.2
      %v4061 = vmul.f32 %v4029, 0.2
      %v4062 = vmul.f32 %v4030, 0.2
      %v4063 = vmul.f32 %v4031, 0.2
      %v4064 = vmul.f32 %v4032, 0.2
      %v4065 = vmul.f32 %v4033, 0.2
      %v4066 = vsel %vm4034, %v4018, %v4050
      %v4067 = vsel %vm4035, %v4019, %v4051
      %v4068 = vsel %vm4036, %v4020, %v4052
      %v4069 = vsel %vm4037, %v4021, %v4053
      %v4070 = vsel %vm4038, %v4022, %v4054
      %v4071 = vsel %vm4039, %v4023, %v4055
      %v4072 = vsel %vm4040, %v4024, %v4056
      %v4073 = vsel %vm4041, %v4025, %v4057
      %v4074 = vsel %vm4042, %v4026, %v4058
      %v4075 = vsel %vm4043, %v4027, %v4059
      %v4076 = vsel %vm4044, %v4028, %v4060
      %v4077 = vsel %vm4045, %v4029, %v4061
      %v4078 = vsel %vm4046, %v4030, %v4062
      %v4079 = vsel %vm4047, %v4031, %v4063
      %v4080 = vsel %vm4048, %v4032, %v4064
      %v4081 = vsel %vm4049, %v4033, %v4065
      %v4082 = vpack.c.bf16 %v4074, %v4066
      %v4083 = vpack.c.bf16 %v4075, %v4067
      %v4084 = vpack.c.bf16 %v4076, %v4068
      %v4085 = vpack.c.bf16 %v4077, %v4069
      %v4086 = vpack.c.bf16 %v4078, %v4070
      %v4087 = vpack.c.bf16 %v4079, %v4071
      %v4088 = vpack.c.bf16 %v4080, %v4072
      %v4089 = vpack.c.bf16 %v4081, %v4073
      %v4090 = vld [vmem:[#allocation10] sm:$0xff]
      %v4091 = vld [vmem:[#allocation10 + $0x8] sm:$0xff]
      %v4092 = vld [vmem:[#allocation10 + $0x10] sm:$0xff]
      %v4093 = vld [vmem:[#allocation10 + $0x18] sm:$0xff]
      %v4094 = vld [vmem:[#allocation10 + $0x20] sm:$0xff]
      %v4095 = vld [vmem:[#allocation10 + $0x28] sm:$0xff]
      %v4096 = vld [vmem:[#allocation10 + $0x30] sm:$0xff]
      %v4097 = vld [vmem:[#allocation10 + $0x38] sm:$0xff]
      %v4098 = vld [vmem:[#allocation10 + $0x40] sm:$0xff]
      %v4099 = vld [vmem:[#allocation10 + $0x48] sm:$0xff]
      %v4100 = vld [vmem:[#allocation10 + $0x50] sm:$0xff]
      %v4101 = vld [vmem:[#allocation10 + $0x58] sm:$0xff]
      %v4102 = vld [vmem:[#allocation10 + $0x60] sm:$0xff]
      %v4103 = vld [vmem:[#allocation10 + $0x68] sm:$0xff]
      %v4104 = vld [vmem:[#allocation10 + $0x70] sm:$0xff]
      %v4105 = vld [vmem:[#allocation10 + $0x78] sm:$0xff]
      %v4106 = vld [vmem:[#allocation10 + $0x80] sm:$0xff]
      %v4107 = vld [vmem:[#allocation10 + $0x88] sm:$0xff]
      %v4108 = vld [vmem:[#allocation10 + $0x90] sm:$0xff]
      %v4109 = vld [vmem:[#allocation10 + $0x98] sm:$0xff]
      %v4110 = vld [vmem:[#allocation10 + $0xa0] sm:$0xff]
      %v4111 = vld [vmem:[#allocation10 + $0xa8] sm:$0xff]
      %v4112 = vld [vmem:[#allocation10 + $0xb0] sm:$0xff]
      %v4113 = vld [vmem:[#allocation10 + $0xb8] sm:$0xff]
      %v4114 = vld [vmem:[#allocation10 + $0xc0] sm:$0xff]
      %v4115 = vld [vmem:[#allocation10 + $0xc8] sm:$0xff]
      %v4116 = vld [vmem:[#allocation10 + $0xd0] sm:$0xff]
      %v4117 = vld [vmem:[#allocation10 + $0xd8] sm:$0xff]
      %v4118 = vld [vmem:[#allocation10 + $0xe0] sm:$0xff]
      %v4119 = vld [vmem:[#allocation10 + $0xe8] sm:$0xff]
      %v4120 = vld [vmem:[#allocation10 + $0xf0] sm:$0xff]
      %v4121 = vld [vmem:[#allocation10 + $0xf8] sm:$0xff]
      %v4122 = vld [vmem:[#allocation10 + $0x100] sm:$0xff]
      %v4123 = vld [vmem:[#allocation10 + $0x108] sm:$0xff]
      %v4124 = vld [vmem:[#allocation10 + $0x110] sm:$0xff]
      %v4125 = vld [vmem:[#allocation10 + $0x118] sm:$0xff]
      %v4126 = vld [vmem:[#allocation10 + $0x120] sm:$0xff]
      %v4127 = vld [vmem:[#allocation10 + $0x128] sm:$0xff]
      %v4128 = vld [vmem:[#allocation10 + $0x130] sm:$0xff]
      %v4129 = vld [vmem:[#allocation10 + $0x138] sm:$0xff]
      %v4130 = vld [vmem:[#allocation10 + $0x140] sm:$0xff]
      %v4131 = vld [vmem:[#allocation10 + $0x148] sm:$0xff]
      %v4132 = vld [vmem:[#allocation10 + $0x150] sm:$0xff]
      %v4133 = vld [vmem:[#allocation10 + $0x158] sm:$0xff]
      %v4134 = vld [vmem:[#allocation10 + $0x160] sm:$0xff]
      %v4135 = vld [vmem:[#allocation10 + $0x168] sm:$0xff]
      %v4136 = vld [vmem:[#allocation10 + $0x170] sm:$0xff]
      %v4137 = vld [vmem:[#allocation10 + $0x178] sm:$0xff]
      %v4138 = vld [vmem:[#allocation10 + $0x180] sm:$0xff]
      %v4139 = vld [vmem:[#allocation10 + $0x188] sm:$0xff]
      %v4140 = vld [vmem:[#allocation10 + $0x190] sm:$0xff]
      %v4141 = vld [vmem:[#allocation10 + $0x198] sm:$0xff]
      %v4142 = vld [vmem:[#allocation10 + $0x1a0] sm:$0xff]
      %v4143 = vld [vmem:[#allocation10 + $0x1a8] sm:$0xff]
      %v4144 = vld [vmem:[#allocation10 + $0x1b0] sm:$0xff]
      %v4145 = vld [vmem:[#allocation10 + $0x1b8] sm:$0xff]
      %v4146 = vld [vmem:[#allocation10 + $0x1c0] sm:$0xff]
      %v4147 = vld [vmem:[#allocation10 + $0x1c8] sm:$0xff]
      %v4148 = vld [vmem:[#allocation10 + $0x1d0] sm:$0xff]
      %v4149 = vld [vmem:[#allocation10 + $0x1d8] sm:$0xff]
      %v4150 = vld [vmem:[#allocation10 + $0x1e0] sm:$0xff]
      %v4151 = vld [vmem:[#allocation10 + $0x1e8] sm:$0xff]
      %v4152 = vld [vmem:[#allocation10 + $0x1f0] sm:$0xff]
      %v4153 = vld [vmem:[#allocation10 + $0x1f8] sm:$0xff]
      %v4154 = vld [vmem:[#allocation10 + $0x200] sm:$0xff]
      %v4155 = vld [vmem:[#allocation10 + $0x208] sm:$0xff]
      %v4156 = vld [vmem:[#allocation10 + $0x210] sm:$0xff]
      %v4157 = vld [vmem:[#allocation10 + $0x218] sm:$0xff]
      %v4158 = vld [vmem:[#allocation10 + $0x220] sm:$0xff]
      %v4159 = vld [vmem:[#allocation10 + $0x228] sm:$0xff]
      %v4160 = vld [vmem:[#allocation10 + $0x230] sm:$0xff]
      %v4161 = vld [vmem:[#allocation10 + $0x238] sm:$0xff]
      %v4162 = vld [vmem:[#allocation10 + $0x240] sm:$0xff]
      %v4163 = vld [vmem:[#allocation10 + $0x248] sm:$0xff]
      %v4164 = vld [vmem:[#allocation10 + $0x250] sm:$0xff]
      %v4165 = vld [vmem:[#allocation10 + $0x258] sm:$0xff]
      %v4166 = vld [vmem:[#allocation10 + $0x260] sm:$0xff]
      %v4167 = vld [vmem:[#allocation10 + $0x268] sm:$0xff]
      %v4168 = vld [vmem:[#allocation10 + $0x270] sm:$0xff]
      %v4169 = vld [vmem:[#allocation10 + $0x278] sm:$0xff]
      %v4170 = vld [vmem:[#allocation10 + $0x280] sm:$0xff]
      %v4171 = vld [vmem:[#allocation10 + $0x288] sm:$0xff]
      %v4172 = vld [vmem:[#allocation10 + $0x290] sm:$0xff]
      %v4173 = vld [vmem:[#allocation10 + $0x298] sm:$0xff]
      %v4174 = vld [vmem:[#allocation10 + $0x2a0] sm:$0xff]
      %v4175 = vld [vmem:[#allocation10 + $0x2a8] sm:$0xff]
      %v4176 = vld [vmem:[#allocation10 + $0x2b0] sm:$0xff]
      %v4177 = vld [vmem:[#allocation10 + $0x2b8] sm:$0xff]
      %v4178 = vld [vmem:[#allocation10 + $0x2c0] sm:$0xff]
      %v4179 = vld [vmem:[#allocation10 + $0x2c8] sm:$0xff]
      %v4180 = vld [vmem:[#allocation10 + $0x2d0] sm:$0xff]
      %v4181 = vld [vmem:[#allocation10 + $0x2d8] sm:$0xff]
      %v4182 = vld [vmem:[#allocation10 + $0x2e0] sm:$0xff]
      %v4183 = vld [vmem:[#allocation10 + $0x2e8] sm:$0xff]
      %v4184 = vld [vmem:[#allocation10 + $0x2f0] sm:$0xff]
      %v4185 = vld [vmem:[#allocation10 + $0x2f8] sm:$0xff]
      %v4186 = vld [vmem:[#allocation10 + $0x300] sm:$0xff]
      %v4187 = vld [vmem:[#allocation10 + $0x308] sm:$0xff]
      %v4188 = vld [vmem:[#allocation10 + $0x310] sm:$0xff]
      %v4189 = vld [vmem:[#allocation10 + $0x318] sm:$0xff]
      %v4190 = vld [vmem:[#allocation10 + $0x320] sm:$0xff]
      %v4191 = vld [vmem:[#allocation10 + $0x328] sm:$0xff]
      %v4192 = vld [vmem:[#allocation10 + $0x330] sm:$0xff]
      %v4193 = vld [vmem:[#allocation10 + $0x338] sm:$0xff]
      %v4194 = vld [vmem:[#allocation10 + $0x340] sm:$0xff]
      %v4195 = vld [vmem:[#allocation10 + $0x348] sm:$0xff]
      %v4196 = vld [vmem:[#allocation10 + $0x350] sm:$0xff]
      %v4197 = vld [vmem:[#allocation10 + $0x358] sm:$0xff]
      %v4198 = vld [vmem:[#allocation10 + $0x360] sm:$0xff]
      %v4199 = vld [vmem:[#allocation10 + $0x368] sm:$0xff]
      %v4200 = vld [vmem:[#allocation10 + $0x370] sm:$0xff]
      %v4201 = vld [vmem:[#allocation10 + $0x378] sm:$0xff]
      %v4202 = vld [vmem:[#allocation10 + $0x380] sm:$0xff]
      %v4203 = vld [vmem:[#allocation10 + $0x388] sm:$0xff]
      %v4204 = vld [vmem:[#allocation10 + $0x390] sm:$0xff]
      %v4205 = vld [vmem:[#allocation10 + $0x398] sm:$0xff]
      %v4206 = vld [vmem:[#allocation10 + $0x3a0] sm:$0xff]
      %v4207 = vld [vmem:[#allocation10 + $0x3a8] sm:$0xff]
      %v4208 = vld [vmem:[#allocation10 + $0x3b0] sm:$0xff]
      %v4209 = vld [vmem:[#allocation10 + $0x3b8] sm:$0xff]
      %v4210 = vld [vmem:[#allocation10 + $0x3c0] sm:$0xff]
      %v4211 = vld [vmem:[#allocation10 + $0x3c8] sm:$0xff]
      %v4212 = vld [vmem:[#allocation10 + $0x3d0] sm:$0xff]
      %v4213 = vld [vmem:[#allocation10 + $0x3d8] sm:$0xff]
      %v4214 = vld [vmem:[#allocation10 + $0x3e0] sm:$0xff]
      %v4215 = vld [vmem:[#allocation10 + $0x3e8] sm:$0xff]
      %v4216 = vld [vmem:[#allocation10 + $0x3f0] sm:$0xff]
      %v4217 = vld [vmem:[#allocation10 + $0x3f8] sm:$0xff]
      %v4218 = vld [vmem:[#allocation10 + $0x400] sm:$0xff]
      %v4219 = vld [vmem:[#allocation10 + $0x408] sm:$0xff]
      %v4220 = vld [vmem:[#allocation10 + $0x410] sm:$0xff]
      %v4221 = vld [vmem:[#allocation10 + $0x418] sm:$0xff]
      %v4222 = vld [vmem:[#allocation10 + $0x420] sm:$0xff]
      %v4223 = vld [vmem:[#allocation10 + $0x428] sm:$0xff]
      %v4224 = vld [vmem:[#allocation10 + $0x430] sm:$0xff]
      %v4225 = vld [vmem:[#allocation10 + $0x438] sm:$0xff]
      %v4226 = vld [vmem:[#allocation10 + $0x440] sm:$0xff]
      %v4227 = vld [vmem:[#allocation10 + $0x448] sm:$0xff]
      %v4228 = vld [vmem:[#allocation10 + $0x450] sm:$0xff]
      %v4229 = vld [vmem:[#allocation10 + $0x458] sm:$0xff]
      %v4230 = vld [vmem:[#allocation10 + $0x460] sm:$0xff]
      %v4231 = vld [vmem:[#allocation10 + $0x468] sm:$0xff]
      %v4232 = vld [vmem:[#allocation10 + $0x470] sm:$0xff]
      %v4233 = vld [vmem:[#allocation10 + $0x478] sm:$0xff]
      %v4234 = vld [vmem:[#allocation10 + $0x480] sm:$0xff]
      %v4235 = vld [vmem:[#allocation10 + $0x488] sm:$0xff]
      %v4236 = vld [vmem:[#allocation10 + $0x490] sm:$0xff]
      %v4237 = vld [vmem:[#allocation10 + $0x498] sm:$0xff]
      %v4238 = vld [vmem:[#allocation10 + $0x4a0] sm:$0xff]
      %v4239 = vld [vmem:[#allocation10 + $0x4a8] sm:$0xff]
      %v4240 = vld [vmem:[#allocation10 + $0x4b0] sm:$0xff]
      %v4241 = vld [vmem:[#allocation10 + $0x4b8] sm:$0xff]
      %v4242 = vld [vmem:[#allocation10 + $0x4c0] sm:$0xff]
      %v4243 = vld [vmem:[#allocation10 + $0x4c8] sm:$0xff]
      %v4244 = vld [vmem:[#allocation10 + $0x4d0] sm:$0xff]
      %v4245 = vld [vmem:[#allocation10 + $0x4d8] sm:$0xff]
      %v4246 = vld [vmem:[#allocation10 + $0x4e0] sm:$0xff]
      %v4247 = vld [vmem:[#allocation10 + $0x4e8] sm:$0xff]
      %v4248 = vld [vmem:[#allocation10 + $0x4f0] sm:$0xff]
      %v4249 = vld [vmem:[#allocation10 + $0x4f8] sm:$0xff]
      %v4250 = vld [vmem:[#allocation10 + $0x500] sm:$0xff]
      %v4251 = vld [vmem:[#allocation10 + $0x508] sm:$0xff]
      %v4252 = vld [vmem:[#allocation10 + $0x510] sm:$0xff]
      %v4253 = vld [vmem:[#allocation10 + $0x518] sm:$0xff]
      %v4254 = vld [vmem:[#allocation10 + $0x520] sm:$0xff]
      %v4255 = vld [vmem:[#allocation10 + $0x528] sm:$0xff]
      %v4256 = vld [vmem:[#allocation10 + $0x530] sm:$0xff]
      %v4257 = vld [vmem:[#allocation10 + $0x538] sm:$0xff]
      %v4258 = vld [vmem:[#allocation10 + $0x540] sm:$0xff]
      %v4259 = vld [vmem:[#allocation10 + $0x548] sm:$0xff]
      %v4260 = vld [vmem:[#allocation10 + $0x550] sm:$0xff]
      %v4261 = vld [vmem:[#allocation10 + $0x558] sm:$0xff]
      %v4262 = vld [vmem:[#allocation10 + $0x560] sm:$0xff]
      %v4263 = vld [vmem:[#allocation10 + $0x568] sm:$0xff]
      %v4264 = vld [vmem:[#allocation10 + $0x570] sm:$0xff]
      %v4265 = vld [vmem:[#allocation10 + $0x578] sm:$0xff]
      %v4266 = vld [vmem:[#allocation10 + $0x580] sm:$0xff]
      %v4267 = vld [vmem:[#allocation10 + $0x588] sm:$0xff]
      %v4268 = vld [vmem:[#allocation10 + $0x590] sm:$0xff]
      %v4269 = vld [vmem:[#allocation10 + $0x598] sm:$0xff]
      %v4270 = vld [vmem:[#allocation10 + $0x5a0] sm:$0xff]
      %v4271 = vld [vmem:[#allocation10 + $0x5a8] sm:$0xff]
      %v4272 = vld [vmem:[#allocation10 + $0x5b0] sm:$0xff]
      %v4273 = vld [vmem:[#allocation10 + $0x5b8] sm:$0xff]
      %v4274 = vld [vmem:[#allocation10 + $0x5c0] sm:$0xff]
      %v4275 = vld [vmem:[#allocation10 + $0x5c8] sm:$0xff]
      %v4276 = vld [vmem:[#allocation10 + $0x5d0] sm:$0xff]
      %v4277 = vld [vmem:[#allocation10 + $0x5d8] sm:$0xff]
      %v4278 = vld [vmem:[#allocation10 + $0x5e0] sm:$0xff]
      %v4279 = vld [vmem:[#allocation10 + $0x5e8] sm:$0xff]
      %v4280 = vld [vmem:[#allocation10 + $0x5f0] sm:$0xff]
      %v4281 = vld [vmem:[#allocation10 + $0x5f8] sm:$0xff]
      %v4282 = vld [vmem:[#allocation10 + $0x600] sm:$0xff]
      %v4283 = vld [vmem:[#allocation10 + $0x608] sm:$0xff]
      %v4284 = vld [vmem:[#allocation10 + $0x610] sm:$0xff]
      %v4285 = vld [vmem:[#allocation10 + $0x618] sm:$0xff]
      %v4286 = vld [vmem:[#allocation10 + $0x620] sm:$0xff]
      %v4287 = vld [vmem:[#allocation10 + $0x628] sm:$0xff]
      %v4288 = vld [vmem:[#allocation10 + $0x630] sm:$0xff]
      %v4289 = vld [vmem:[#allocation10 + $0x638] sm:$0xff]
      %v4290 = vld [vmem:[#allocation10 + $0x640] sm:$0xff]
      %v4291 = vld [vmem:[#allocation10 + $0x648] sm:$0xff]
      %v4292 = vld [vmem:[#allocation10 + $0x650] sm:$0xff]
      %v4293 = vld [vmem:[#allocation10 + $0x658] sm:$0xff]
      %v4294 = vld [vmem:[#allocation10 + $0x660] sm:$0xff]
      %v4295 = vld [vmem:[#allocation10 + $0x668] sm:$0xff]
      %v4296 = vld [vmem:[#allocation10 + $0x670] sm:$0xff]
      %v4297 = vld [vmem:[#allocation10 + $0x678] sm:$0xff]
      %v4298 = vld [vmem:[#allocation10 + $0x680] sm:$0xff]
      %v4299 = vld [vmem:[#allocation10 + $0x688] sm:$0xff]
      %v4300 = vld [vmem:[#allocation10 + $0x690] sm:$0xff]
      %v4301 = vld [vmem:[#allocation10 + $0x698] sm:$0xff]
      %v4302 = vld [vmem:[#allocation10 + $0x6a0] sm:$0xff]
      %v4303 = vld [vmem:[#allocation10 + $0x6a8] sm:$0xff]
      %v4304 = vld [vmem:[#allocation10 + $0x6b0] sm:$0xff]
      %v4305 = vld [vmem:[#allocation10 + $0x6b8] sm:$0xff]
      %v4306 = vld [vmem:[#allocation10 + $0x6c0] sm:$0xff]
      %v4307 = vld [vmem:[#allocation10 + $0x6c8] sm:$0xff]
      %v4308 = vld [vmem:[#allocation10 + $0x6d0] sm:$0xff]
      %v4309 = vld [vmem:[#allocation10 + $0x6d8] sm:$0xff]
      %v4310 = vld [vmem:[#allocation10 + $0x6e0] sm:$0xff]
      %v4311 = vld [vmem:[#allocation10 + $0x6e8] sm:$0xff]
      %v4312 = vld [vmem:[#allocation10 + $0x6f0] sm:$0xff]
      %v4313 = vld [vmem:[#allocation10 + $0x6f8] sm:$0xff]
      %v4314 = vld [vmem:[#allocation10 + $0x700] sm:$0xff]
      %v4315 = vld [vmem:[#allocation10 + $0x708] sm:$0xff]
      %v4316 = vld [vmem:[#allocation10 + $0x710] sm:$0xff]
      %v4317 = vld [vmem:[#allocation10 + $0x718] sm:$0xff]
      %v4318 = vld [vmem:[#allocation10 + $0x720] sm:$0xff]
      %v4319 = vld [vmem:[#allocation10 + $0x728] sm:$0xff]
      %v4320 = vld [vmem:[#allocation10 + $0x730] sm:$0xff]
      %v4321 = vld [vmem:[#allocation10 + $0x738] sm:$0xff]
      %v4322 = vld [vmem:[#allocation10 + $0x740] sm:$0xff]
      %v4323 = vld [vmem:[#allocation10 + $0x748] sm:$0xff]
      %v4324 = vld [vmem:[#allocation10 + $0x750] sm:$0xff]
      %v4325 = vld [vmem:[#allocation10 + $0x758] sm:$0xff]
      %v4326 = vld [vmem:[#allocation10 + $0x760] sm:$0xff]
      %v4327 = vld [vmem:[#allocation10 + $0x768] sm:$0xff]
      %v4328 = vld [vmem:[#allocation10 + $0x770] sm:$0xff]
      %v4329 = vld [vmem:[#allocation10 + $0x778] sm:$0xff]
      %v4330 = vld [vmem:[#allocation10 + $0x780] sm:$0xff]
      %v4331 = vld [vmem:[#allocation10 + $0x788] sm:$0xff]
      %v4332 = vld [vmem:[#allocation10 + $0x790] sm:$0xff]
      %v4333 = vld [vmem:[#allocation10 + $0x798] sm:$0xff]
      %v4334 = vld [vmem:[#allocation10 + $0x7a0] sm:$0xff]
      %v4335 = vld [vmem:[#allocation10 + $0x7a8] sm:$0xff]
      %v4336 = vld [vmem:[#allocation10 + $0x7b0] sm:$0xff]
      %v4337 = vld [vmem:[#allocation10 + $0x7b8] sm:$0xff]
      %v4338 = vld [vmem:[#allocation10 + $0x7c0] sm:$0xff]
      %v4339 = vld [vmem:[#allocation10 + $0x7c8] sm:$0xff]
      %v4340 = vld [vmem:[#allocation10 + $0x7d0] sm:$0xff]
      %v4341 = vld [vmem:[#allocation10 + $0x7d8] sm:$0xff]
      %v4342 = vld [vmem:[#allocation10 + $0x7e0] sm:$0xff]
      %v4343 = vld [vmem:[#allocation10 + $0x7e8] sm:$0xff]
      %v4344 = vld [vmem:[#allocation10 + $0x7f0] sm:$0xff]
      %v4345 = vld [vmem:[#allocation10 + $0x7f8] sm:$0xff]
      %v4346 = vld [vmem:[#allocation12] sm:$0xf]
      %v4348 = vlaneseq
      %v4349 = vshrl.u32 %v4348, 7
      %v4350 = vsub.s32 0, %v4349
      %v4351 = vrot.slane %v4346, %v4350
      %v4352 = vlaneseq
      %v4353 = vshrl.u32 %v4352, 7
      %v4354 = vsub.s32 1, %v4353
      %v4355 = vrot.slane %v4346, %v4354
      %v4356 = vlaneseq
      %v4357 = vshrl.u32 %v4356, 7
      %v4358 = vsub.s32 2, %v4357
      %v4359 = vrot.slane %v4346, %v4358
      %v4360 = vlaneseq
      %v4361 = vshrl.u32 %v4360, 7
      %v4362 = vsub.s32 3, %v4361
      %v4363 = vrot.slane %v4346, %v4362
      %v4624 = vunpack.c.l.b16 %v4090
      %v4625 = vunpack.c.h.b16 %v4090
      %v4626 = vunpack.c.l.b16 %v4091
      %v4627 = vunpack.c.h.b16 %v4091
      %v4628 = vunpack.c.l.b16 %v4092
      %v4629 = vunpack.c.h.b16 %v4092
      %v4630 = vunpack.c.l.b16 %v4093
      %v4631 = vunpack.c.h.b16 %v4093
      %v4632 = vunpack.c.l.b16 %v4094
      %v4633 = vunpack.c.h.b16 %v4094
      %v4634 = vunpack.c.l.b16 %v4095
      %v4635 = vunpack.c.h.b16 %v4095
      %v4636 = vunpack.c.l.b16 %v4096
      %v4637 = vunpack.c.h.b16 %v4096
      %v4638 = vunpack.c.l.b16 %v4097
      %v4639 = vunpack.c.h.b16 %v4097
      %v4640 = vunpack.c.l.b16 %v4098
      %v4641 = vunpack.c.h.b16 %v4098
      %v4642 = vunpack.c.l.b16 %v4099
      %v4643 = vunpack.c.h.b16 %v4099
      %v4644 = vunpack.c.l.b16 %v4100
      %v4645 = vunpack.c.h.b16 %v4100
      %v4646 = vunpack.c.l.b16 %v4101
      %v4647 = vunpack.c.h.b16 %v4101
      %v4648 = vunpack.c.l.b16 %v4102
      %v4649 = vunpack.c.h.b16 %v4102
      %v4650 = vunpack.c.l.b16 %v4103
      %v4651 = vunpack.c.h.b16 %v4103
      %v4652 = vunpack.c.l.b16 %v4104
      %v4653 = vunpack.c.h.b16 %v4104
      %v4654 = vunpack.c.l.b16 %v4105
      %v4655 = vunpack.c.h.b16 %v4105
      %v4656 = vunpack.c.l.b16 %v4106
      %v4657 = vunpack.c.h.b16 %v4106
      %v4658 = vunpack.c.l.b16 %v4107
      %v4659 = vunpack.c.h.b16 %v4107
      %v4660 = vunpack.c.l.b16 %v4108
      %v4661 = vunpack.c.h.b16 %v4108
      %v4662 = vunpack.c.l.b16 %v4109
      %v4663 = vunpack.c.h.b16 %v4109
      %v4664 = vunpack.c.l.b16 %v4110
      %v4665 = vunpack.c.h.b16 %v4110
      %v4666 = vunpack.c.l.b16 %v4111
      %v4667 = vunpack.c.h.b16 %v4111
      %v4668 = vunpack.c.l.b16 %v4112
      %v4669 = vunpack.c.h.b16 %v4112
      %v4670 = vunpack.c.l.b16 %v4113
      %v4671 = vunpack.c.h.b16 %v4113
      %v4672 = vunpack.c.l.b16 %v4114
      %v4673 = vunpack.c.h.b16 %v4114
      %v4674 = vunpack.c.l.b16 %v4115
      %v4675 = vunpack.c.h.b16 %v4115
      %v4676 = vunpack.c.l.b16 %v4116
      %v4677 = vunpack.c.h.b16 %v4116
      %v4678 = vunpack.c.l.b16 %v4117
      %v4679 = vunpack.c.h.b16 %v4117
      %v4680 = vunpack.c.l.b16 %v4118
      %v4681 = vunpack.c.h.b16 %v4118
      %v4682 = vunpack.c.l.b16 %v4119
      %v4683 = vunpack.c.h.b16 %v4119
      %v4684 = vunpack.c.l.b16 %v4120
      %v4685 = vunpack.c.h.b16 %v4120
      %v4686 = vunpack.c.l.b16 %v4121
      %v4687 = vunpack.c.h.b16 %v4121
      %v4688 = vunpack.c.l.b16 %v4122
      %v4689 = vunpack.c.h.b16 %v4122
      %v4690 = vunpack.c.l.b16 %v4123
      %v4691 = vunpack.c.h.b16 %v4123
      %v4692 = vunpack.c.l.b16 %v4124
      %v4693 = vunpack.c.h.b16 %v4124
      %v4694 = vunpack.c.l.b16 %v4125
      %v4695 = vunpack.c.h.b16 %v4125
      %v4696 = vunpack.c.l.b16 %v4126
      %v4697 = vunpack.c.h.b16 %v4126
      %v4698 = vunpack.c.l.b16 %v4127
      %v4699 = vunpack.c.h.b16 %v4127
      %v4700 = vunpack.c.l.b16 %v4128
      %v4701 = vunpack.c.h.b16 %v4128
      %v4702 = vunpack.c.l.b16 %v4129
      %v4703 = vunpack.c.h.b16 %v4129
      %v4704 = vunpack.c.l.b16 %v4130
      %v4705 = vunpack.c.h.b16 %v4130
      %v4706 = vunpack.c.l.b16 %v4131
      %v4707 = vunpack.c.h.b16 %v4131
      %v4708 = vunpack.c.l.b16 %v4132
      %v4709 = vunpack.c.h.b16 %v4132
      %v4710 = vunpack.c.l.b16 %v4133
      %v4711 = vunpack.c.h.b16 %v4133
      %v4712 = vunpack.c.l.b16 %v4134
      %v4713 = vunpack.c.h.b16 %v4134
      %v4714 = vunpack.c.l.b16 %v4135
      %v4715 = vunpack.c.h.b16 %v4135
      %v4716 = vunpack.c.l.b16 %v4136
      %v4717 = vunpack.c.h.b16 %v4136
      %v4718 = vunpack.c.l.b16 %v4137
      %v4719 = vunpack.c.h.b16 %v4137
      %v4720 = vunpack.c.l.b16 %v4138
      %v4721 = vunpack.c.h.b16 %v4138
      %v4722 = vunpack.c.l.b16 %v4139
      %v4723 = vunpack.c.h.b16 %v4139
      %v4724 = vunpack.c.l.b16 %v4140
      %v4725 = vunpack.c.h.b16 %v4140
      %v4726 = vunpack.c.l.b16 %v4141
      %v4727 = vunpack.c.h.b16 %v4141
      %v4728 = vunpack.c.l.b16 %v4142
      %v4729 = vunpack.c.h.b16 %v4142
      %v4730 = vunpack.c.l.b16 %v4143
      %v4731 = vunpack.c.h.b16 %v4143
      %v4732 = vunpack.c.l.b16 %v4144
      %v4733 = vunpack.c.h.b16 %v4144
      %v4734 = vunpack.c.l.b16 %v4145
      %v4735 = vunpack.c.h.b16 %v4145
      %v4736 = vunpack.c.l.b16 %v4146
      %v4737 = vunpack.c.h.b16 %v4146
      %v4738 = vunpack.c.l.b16 %v4147
      %v4739 = vunpack.c.h.b16 %v4147
      %v4740 = vunpack.c.l.b16 %v4148
      %v4741 = vunpack.c.h.b16 %v4148
      %v4742 = vunpack.c.l.b16 %v4149
      %v4743 = vunpack.c.h.b16 %v4149
      %v4744 = vunpack.c.l.b16 %v4150
      %v4745 = vunpack.c.h.b16 %v4150
      %v4746 = vunpack.c.l.b16 %v4151
      %v4747 = vunpack.c.h.b16 %v4151
      %v4748 = vunpack.c.l.b16 %v4152
      %v4749 = vunpack.c.h.b16 %v4152
      %v4750 = vunpack.c.l.b16 %v4153
      %v4751 = vunpack.c.h.b16 %v4153
      %v4752 = vunpack.c.l.b16 %v4154
      %v4753 = vunpack.c.h.b16 %v4154
      %v4754 = vunpack.c.l.b16 %v4155
      %v4755 = vunpack.c.h.b16 %v4155
      %v4756 = vunpack.c.l.b16 %v4156
      %v4757 = vunpack.c.h.b16 %v4156
      %v4758 = vunpack.c.l.b16 %v4157
      %v4759 = vunpack.c.h.b16 %v4157
      %v4760 = vunpack.c.l.b16 %v4158
      %v4761 = vunpack.c.h.b16 %v4158
      %v4762 = vunpack.c.l.b16 %v4159
      %v4763 = vunpack.c.h.b16 %v4159
      %v4764 = vunpack.c.l.b16 %v4160
      %v4765 = vunpack.c.h.b16 %v4160
      %v4766 = vunpack.c.l.b16 %v4161
      %v4767 = vunpack.c.h.b16 %v4161
      %v4768 = vunpack.c.l.b16 %v4162
      %v4769 = vunpack.c.h.b16 %v4162
      %v4770 = vunpack.c.l.b16 %v4163
      %v4771 = vunpack.c.h.b16 %v4163
      %v4772 = vunpack.c.l.b16 %v4164
      %v4773 = vunpack.c.h.b16 %v4164
      %v4774 = vunpack.c.l.b16 %v4165
      %v4775 = vunpack.c.h.b16 %v4165
      %v4776 = vunpack.c.l.b16 %v4166
      %v4777 = vunpack.c.h.b16 %v4166
      %v4778 = vunpack.c.l.b16 %v4167
      %v4779 = vunpack.c.h.b16 %v4167
      %v4780 = vunpack.c.l.b16 %v4168
      %v4781 = vunpack.c.h.b16 %v4168
      %v4782 = vunpack.c.l.b16 %v4169
      %v4783 = vunpack.c.h.b16 %v4169
      %v4784 = vunpack.c.l.b16 %v4170
      %v4785 = vunpack.c.h.b16 %v4170
      %v4786 = vunpack.c.l.b16 %v4171
      %v4787 = vunpack.c.h.b16 %v4171
      %v4788 = vunpack.c.l.b16 %v4172
      %v4789 = vunpack.c.h.b16 %v4172
      %v4790 = vunpack.c.l.b16 %v4173
      %v4791 = vunpack.c.h.b16 %v4173
      %v4792 = vunpack.c.l.b16 %v4174
      %v4793 = vunpack.c.h.b16 %v4174
      %v4794 = vunpack.c.l.b16 %v4175
      %v4795 = vunpack.c.h.b16 %v4175
      %v4796 = vunpack.c.l.b16 %v4176
      %v4797 = vunpack.c.h.b16 %v4176
      %v4798 = vunpack.c.l.b16 %v4177
      %v4799 = vunpack.c.h.b16 %v4177
      %v4800 = vunpack.c.l.b16 %v4178
      %v4801 = vunpack.c.h.b16 %v4178
      %v4802 = vunpack.c.l.b16 %v4179
      %v4803 = vunpack.c.h.b16 %v4179
      %v4804 = vunpack.c.l.b16 %v4180
      %v4805 = vunpack.c.h.b16 %v4180
      %v4806 = vunpack.c.l.b16 %v4181
      %v4807 = vunpack.c.h.b16 %v4181
      %v4808 = vunpack.c.l.b16 %v4182
      %v4809 = vunpack.c.h.b16 %v4182
      %v4810 = vunpack.c.l.b16 %v4183
      %v4811 = vunpack.c.h.b16 %v4183
      %v4812 = vunpack.c.l.b16 %v4184
      %v4813 = vunpack.c.h.b16 %v4184
      %v4814 = vunpack.c.l.b16 %v4185
      %v4815 = vunpack.c.h.b16 %v4185
      %v4816 = vunpack.c.l.b16 %v4186
      %v4817 = vunpack.c.h.b16 %v4186
      %v4818 = vunpack.c.l.b16 %v4187
      %v4819 = vunpack.c.h.b16 %v4187
      %v4820 = vunpack.c.l.b16 %v4188
      %v4821 = vunpack.c.h.b16 %v4188
      %v4822 = vunpack.c.l.b16 %v4189
      %v4823 = vunpack.c.h.b16 %v4189
      %v4824 = vunpack.c.l.b16 %v4190
      %v4825 = vunpack.c.h.b16 %v4190
      %v4826 = vunpack.c.l.b16 %v4191
      %v4827 = vunpack.c.h.b16 %v4191
      %v4828 = vunpack.c.l.b16 %v4192
      %v4829 = vunpack.c.h.b16 %v4192
      %v4830 = vunpack.c.l.b16 %v4193
      %v4831 = vunpack.c.h.b16 %v4193
      %v4832 = vunpack.c.l.b16 %v4194
      %v4833 = vunpack.c.h.b16 %v4194
      %v4834 = vunpack.c.l.b16 %v4195
      %v4835 = vunpack.c.h.b16 %v4195
      %v4836 = vunpack.c.l.b16 %v4196
      %v4837 = vunpack.c.h.b16 %v4196
      %v4838 = vunpack.c.l.b16 %v4197
      %v4839 = vunpack.c.h.b16 %v4197
      %v4840 = vunpack.c.l.b16 %v4198
      %v4841 = vunpack.c.h.b16 %v4198
      %v4842 = vunpack.c.l.b16 %v4199
      %v4843 = vunpack.c.h.b16 %v4199
      %v4844 = vunpack.c.l.b16 %v4200
      %v4845 = vunpack.c.h.b16 %v4200
      %v4846 = vunpack.c.l.b16 %v4201
      %v4847 = vunpack.c.h.b16 %v4201
      %v4848 = vunpack.c.l.b16 %v4202
      %v4849 = vunpack.c.h.b16 %v4202
      %v4850 = vunpack.c.l.b16 %v4203
      %v4851 = vunpack.c.h.b16 %v4203
      %v4852 = vunpack.c.l.b16 %v4204
      %v4853 = vunpack.c.h.b16 %v4204
      %v4854 = vunpack.c.l.b16 %v4205
      %v4855 = vunpack.c.h.b16 %v4205
      %v4856 = vunpack.c.l.b16 %v4206
      %v4857 = vunpack.c.h.b16 %v4206
      %v4858 = vunpack.c.l.b16 %v4207
      %v4859 = vunpack.c.h.b16 %v4207
      %v4860 = vunpack.c.l.b16 %v4208
      %v4861 = vunpack.c.h.b16 %v4208
      %v4862 = vunpack.c.l.b16 %v4209
      %v4863 = vunpack.c.h.b16 %v4209
      %v4864 = vunpack.c.l.b16 %v4210
      %v4865 = vunpack.c.h.b16 %v4210
      %v4866 = vunpack.c.l.b16 %v4211
      %v4867 = vunpack.c.h.b16 %v4211
      %v4868 = vunpack.c.l.b16 %v4212
      %v4869 = vunpack.c.h.b16 %v4212
      %v4870 = vunpack.c.l.b16 %v4213
      %v4871 = vunpack.c.h.b16 %v4213
      %v4872 = vunpack.c.l.b16 %v4214
      %v4873 = vunpack.c.h.b16 %v4214
      %v4874 = vunpack.c.l.b16 %v4215
      %v4875 = vunpack.c.h.b16 %v4215
      %v4876 = vunpack.c.l.b16 %v4216
      %v4877 = vunpack.c.h.b16 %v4216
      %v4878 = vunpack.c.l.b16 %v4217
      %v4879 = vunpack.c.h.b16 %v4217
      %v4880 = vunpack.c.l.b16 %v4218
      %v4881 = vunpack.c.h.b16 %v4218
      %v4882 = vunpack.c.l.b16 %v4219
      %v4883 = vunpack.c.h.b16 %v4219
      %v4884 = vunpack.c.l.b16 %v4220
      %v4885 = vunpack.c.h.b16 %v4220
      %v4886 = vunpack.c.l.b16 %v4221
      %v4887 = vunpack.c.h.b16 %v4221
      %v4888 = vunpack.c.l.b16 %v4222
      %v4889 = vunpack.c.h.b16 %v4222
      %v4890 = vunpack.c.l.b16 %v4223
      %v4891 = vunpack.c.h.b16 %v4223
      %v4892 = vunpack.c.l.b16 %v4224
      %v4893 = vunpack.c.h.b16 %v4224
      %v4894 = vunpack.c.l.b16 %v4225
      %v4895 = vunpack.c.h.b16 %v4225
      %v4896 = vunpack.c.l.b16 %v4226
      %v4897 = vunpack.c.h.b16 %v4226
      %v4898 = vunpack.c.l.b16 %v4227
      %v4899 = vunpack.c.h.b16 %v4227
      %v4900 = vunpack.c.l.b16 %v4228
      %v4901 = vunpack.c.h.b16 %v4228
      %v4902 = vunpack.c.l.b16 %v4229
      %v4903 = vunpack.c.h.b16 %v4229
      %v4904 = vunpack.c.l.b16 %v4230
      %v4905 = vunpack.c.h.b16 %v4230
      %v4906 = vunpack.c.l.b16 %v4231
      %v4907 = vunpack.c.h.b16 %v4231
      %v4908 = vunpack.c.l.b16 %v4232
      %v4909 = vunpack.c.h.b16 %v4232
      %v4910 = vunpack.c.l.b16 %v4233
      %v4911 = vunpack.c.h.b16 %v4233
      %v4912 = vunpack.c.l.b16 %v4234
      %v4913 = vunpack.c.h.b16 %v4234
      %v4914 = vunpack.c.l.b16 %v4235
      %v4915 = vunpack.c.h.b16 %v4235
      %v4916 = vunpack.c.l.b16 %v4236
      %v4917 = vunpack.c.h.b16 %v4236
      %v4918 = vunpack.c.l.b16 %v4237
      %v4919 = vunpack.c.h.b16 %v4237
      %v4920 = vunpack.c.l.b16 %v4238
      %v4921 = vunpack.c.h.b16 %v4238
      %v4922 = vunpack.c.l.b16 %v4239
      %v4923 = vunpack.c.h.b16 %v4239
      %v4924 = vunpack.c.l.b16 %v4240
      %v4925 = vunpack.c.h.b16 %v4240
      %v4926 = vunpack.c.l.b16 %v4241
      %v4927 = vunpack.c.h.b16 %v4241
      %v4928 = vunpack.c.l.b16 %v4242
      %v4929 = vunpack.c.h.b16 %v4242
      %v4930 = vunpack.c.l.b16 %v4243
      %v4931 = vunpack.c.h.b16 %v4243
      %v4932 = vunpack.c.l.b16 %v4244
      %v4933 = vunpack.c.h.b16 %v4244
      %v4934 = vunpack.c.l.b16 %v4245
      %v4935 = vunpack.c.h.b16 %v4245
      %v4936 = vunpack.c.l.b16 %v4246
      %v4937 = vunpack.c.h.b16 %v4246
      %v4938 = vunpack.c.l.b16 %v4247
      %v4939 = vunpack.c.h.b16 %v4247
      %v4940 = vunpack.c.l.b16 %v4248
      %v4941 = vunpack.c.h.b16 %v4248
      %v4942 = vunpack.c.l.b16 %v4249
      %v4943 = vunpack.c.h.b16 %v4249
      %v4944 = vunpack.c.l.b16 %v4250
      %v4945 = vunpack.c.h.b16 %v4250
      %v4946 = vunpack.c.l.b16 %v4251
      %v4947 = vunpack.c.h.b16 %v4251
      %v4948 = vunpack.c.l.b16 %v4252
      %v4949 = vunpack.c.h.b16 %v4252
      %v4950 = vunpack.c.l.b16 %v4253
      %v4951 = vunpack.c.h.b16 %v4253
      %v4952 = vunpack.c.l.b16 %v4254
      %v4953 = vunpack.c.h.b16 %v4254
      %v4954 = vunpack.c.l.b16 %v4255
      %v4955 = vunpack.c.h.b16 %v4255
      %v4956 = vunpack.c.l.b16 %v4256
      %v4957 = vunpack.c.h.b16 %v4256
      %v4958 = vunpack.c.l.b16 %v4257
      %v4959 = vunpack.c.h.b16 %v4257
      %v4960 = vunpack.c.l.b16 %v4258
      %v4961 = vunpack.c.h.b16 %v4258
      %v4962 = vunpack.c.l.b16 %v4259
      %v4963 = vunpack.c.h.b16 %v4259
      %v4964 = vunpack.c.l.b16 %v4260
      %v4965 = vunpack.c.h.b16 %v4260
      %v4966 = vunpack.c.l.b16 %v4261
      %v4967 = vunpack.c.h.b16 %v4261
      %v4968 = vunpack.c.l.b16 %v4262
      %v4969 = vunpack.c.h.b16 %v4262
      %v4970 = vunpack.c.l.b16 %v4263
      %v4971 = vunpack.c.h.b16 %v4263
      %v4972 = vunpack.c.l.b16 %v4264
      %v4973 = vunpack.c.h.b16 %v4264
      %v4974 = vunpack.c.l.b16 %v4265
      %v4975 = vunpack.c.h.b16 %v4265
      %v4976 = vunpack.c.l.b16 %v4266
      %v4977 = vunpack.c.h.b16 %v4266
      %v4978 = vunpack.c.l.b16 %v4267
      %v4979 = vunpack.c.h.b16 %v4267
      %v4980 = vunpack.c.l.b16 %v4268
      %v4981 = vunpack.c.h.b16 %v4268
      %v4982 = vunpack.c.l.b16 %v4269
      %v4983 = vunpack.c.h.b16 %v4269
      %v4984 = vunpack.c.l.b16 %v4270
      %v4985 = vunpack.c.h.b16 %v4270
      %v4986 = vunpack.c.l.b16 %v4271
      %v4987 = vunpack.c.h.b16 %v4271
      %v4988 = vunpack.c.l.b16 %v4272
      %v4989 = vunpack.c.h.b16 %v4272
      %v4990 = vunpack.c.l.b16 %v4273
      %v4991 = vunpack.c.h.b16 %v4273
      %v4992 = vunpack.c.l.b16 %v4274
      %v4993 = vunpack.c.h.b16 %v4274
      %v4994 = vunpack.c.l.b16 %v4275
      %v4995 = vunpack.c.h.b16 %v4275
      %v4996 = vunpack.c.l.b16 %v4276
      %v4997 = vunpack.c.h.b16 %v4276
      %v4998 = vunpack.c.l.b16 %v4277
      %v4999 = vunpack.c.h.b16 %v4277
      %v5000 = vunpack.c.l.b16 %v4278
      %v5001 = vunpack.c.h.b16 %v4278
      %v5002 = vunpack.c.l.b16 %v4279
      %v5003 = vunpack.c.h.b16 %v4279
      %v5004 = vunpack.c.l.b16 %v4280
      %v5005 = vunpack.c.h.b16 %v4280
      %v5006 = vunpack.c.l.b16 %v4281
      %v5007 = vunpack.c.h.b16 %v4281
      %v5008 = vunpack.c.l.b16 %v4282
      %v5009 = vunpack.c.h.b16 %v4282
      %v5010 = vunpack.c.l.b16 %v4283
      %v5011 = vunpack.c.h.b16 %v4283
      %v5012 = vunpack.c.l.b16 %v4284
      %v5013 = vunpack.c.h.b16 %v4284
      %v5014 = vunpack.c.l.b16 %v4285
      %v5015 = vunpack.c.h.b16 %v4285
      %v5016 = vunpack.c.l.b16 %v4286
      %v5017 = vunpack.c.h.b16 %v4286
      %v5018 = vunpack.c.l.b16 %v4287
      %v5019 = vunpack.c.h.b16 %v4287
      %v5020 = vunpack.c.l.b16 %v4288
      %v5021 = vunpack.c.h.b16 %v4288
      %v5022 = vunpack.c.l.b16 %v4289
      %v5023 = vunpack.c.h.b16 %v4289
      %v5024 = vunpack.c.l.b16 %v4290
      %v5025 = vunpack.c.h.b16 %v4290
      %v5026 = vunpack.c.l.b16 %v4291
      %v5027 = vunpack.c.h.b16 %v4291
      %v5028 = vunpack.c.l.b16 %v4292
      %v5029 = vunpack.c.h.b16 %v4292
      %v5030 = vunpack.c.l.b16 %v4293
      %v5031 = vunpack.c.h.b16 %v4293
      %v5032 = vunpack.c.l.b16 %v4294
      %v5033 = vunpack.c.h.b16 %v4294
      %v5034 = vunpack.c.l.b16 %v4295
      %v5035 = vunpack.c.h.b16 %v4295
      %v5036 = vunpack.c.l.b16 %v4296
      %v5037 = vunpack.c.h.b16 %v4296
      %v5038 = vunpack.c.l.b16 %v4297
      %v5039 = vunpack.c.h.b16 %v4297
      %v5040 = vunpack.c.l.b16 %v4298
      %v5041 = vunpack.c.h.b16 %v4298
      %v5042 = vunpack.c.l.b16 %v4299
      %v5043 = vunpack.c.h.b16 %v4299
      %v5044 = vunpack.c.l.b16 %v4300
      %v5045 = vunpack.c.h.b16 %v4300
      %v5046 = vunpack.c.l.b16 %v4301
      %v5047 = vunpack.c.h.b16 %v4301
      %v5048 = vunpack.c.l.b16 %v4302
      %v5049 = vunpack.c.h.b16 %v4302
      %v5050 = vunpack.c.l.b16 %v4303
      %v5051 = vunpack.c.h.b16 %v4303
      %v5052 = vunpack.c.l.b16 %v4304
      %v5053 = vunpack.c.h.b16 %v4304
      %v5054 = vunpack.c.l.b16 %v4305
      %v5055 = vunpack.c.h.b16 %v4305
      %v5056 = vunpack.c.l.b16 %v4306
      %v5057 = vunpack.c.h.b16 %v4306
      %v5058 = vunpack.c.l.b16 %v4307
      %v5059 = vunpack.c.h.b16 %v4307
      %v5060 = vunpack.c.l.b16 %v4308
      %v5061 = vunpack.c.h.b16 %v4308
      %v5062 = vunpack.c.l.b16 %v4309
      %v5063 = vunpack.c.h.b16 %v4309
      %v5064 = vunpack.c.l.b16 %v4310
      %v5065 = vunpack.c.h.b16 %v4310
      %v5066 = vunpack.c.l.b16 %v4311
      %v5067 = vunpack.c.h.b16 %v4311
      %v5068 = vunpack.c.l.b16 %v4312
      %v5069 = vunpack.c.h.b16 %v4312
      %v5070 = vunpack.c.l.b16 %v4313
      %v5071 = vunpack.c.h.b16 %v4313
      %v5072 = vunpack.c.l.b16 %v4314
      %v5073 = vunpack.c.h.b16 %v4314
      %v5074 = vunpack.c.l.b16 %v4315
      %v5075 = vunpack.c.h.b16 %v4315
      %v5076 = vunpack.c.l.b16 %v4316
      %v5077 = vunpack.c.h.b16 %v4316
      %v5078 = vunpack.c.l.b16 %v4317
      %v5079 = vunpack.c.h.b16 %v4317
      %v5080 = vunpack.c.l.b16 %v4318
      %v5081 = vunpack.c.h.b16 %v4318
      %v5082 = vunpack.c.l.b16 %v4319
      %v5083 = vunpack.c.h.b16 %v4319
      %v5084 = vunpack.c.l.b16 %v4320
      %v5085 = vunpack.c.h.b16 %v4320
      %v5086 = vunpack.c.l.b16 %v4321
      %v5087 = vunpack.c.h.b16 %v4321
      %v5088 = vunpack.c.l.b16 %v4322
      %v5089 = vunpack.c.h.b16 %v4322
      %v5090 = vunpack.c.l.b16 %v4323
      %v5091 = vunpack.c.h.b16 %v4323
      %v5092 = vunpack.c.l.b16 %v4324
      %v5093 = vunpack.c.h.b16 %v4324
      %v5094 = vunpack.c.l.b16 %v4325
      %v5095 = vunpack.c.h.b16 %v4325
      %v5096 = vunpack.c.l.b16 %v4326
      %v5097 = vunpack.c.h.b16 %v4326
      %v5098 = vunpack.c.l.b16 %v4327
      %v5099 = vunpack.c.h.b16 %v4327
      %v5100 = vunpack.c.l.b16 %v4328
      %v5101 = vunpack.c.h.b16 %v4328
      %v5102 = vunpack.c.l.b16 %v4329
      %v5103 = vunpack.c.h.b16 %v4329
      %v5104 = vunpack.c.l.b16 %v4330
      %v5105 = vunpack.c.h.b16 %v4330
      %v5106 = vunpack.c.l.b16 %v4331
      %v5107 = vunpack.c.h.b16 %v4331
      %v5108 = vunpack.c.l.b16 %v4332
      %v5109 = vunpack.c.h.b16 %v4332
      %v5110 = vunpack.c.l.b16 %v4333
      %v5111 = vunpack.c.h.b16 %v4333
      %v5112 = vunpack.c.l.b16 %v4334
      %v5113 = vunpack.c.h.b16 %v4334
      %v5114 = vunpack.c.l.b16 %v4335
      %v5115 = vunpack.c.h.b16 %v4335
      %v5116 = vunpack.c.l.b16 %v4336
      %v5117 = vunpack.c.h.b16 %v4336
      %v5118 = vunpack.c.l.b16 %v4337
      %v5119 = vunpack.c.h.b16 %v4337
      %v5120 = vunpack.c.l.b16 %v4338
      %v5121 = vunpack.c.h.b16 %v4338
      %v5122 = vunpack.c.l.b16 %v4339
      %v5123 = vunpack.c.h.b16 %v4339
      %v5124 = vunpack.c.l.b16 %v4340
      %v5125 = vunpack.c.h.b16 %v4340
      %v5126 = vunpack.c.l.b16 %v4341
      %v5127 = vunpack.c.h.b16 %v4341
      %v5128 = vunpack.c.l.b16 %v4342
      %v5129 = vunpack.c.h.b16 %v4342
      %v5130 = vunpack.c.l.b16 %v4343
      %v5131 = vunpack.c.h.b16 %v4343
      %v5132 = vunpack.c.l.b16 %v4344
      %v5133 = vunpack.c.h.b16 %v4344
      %v5134 = vunpack.c.l.b16 %v4345
      %v5135 = vunpack.c.h.b16 %v4345
      %v5136 = vpack.c.b16 %v4628, %v4624
      %v5137 = vpack.c.b16 %v4629, %v4625
      %v5138 = vpack.c.b16 %v4630, %v4626
      %v5139 = vpack.c.b16 %v4631, %v4627
      %v5140 = vpack.c.b16 %v4636, %v4632
      %v5141 = vpack.c.b16 %v4637, %v4633
      %v5142 = vpack.c.b16 %v4638, %v4634
      %v5143 = vpack.c.b16 %v4639, %v4635
      %v5144 = vpack.c.b16 %v4644, %v4640
      %v5145 = vpack.c.b16 %v4645, %v4641
      %v5146 = vpack.c.b16 %v4646, %v4642
      %v5147 = vpack.c.b16 %v4647, %v4643
      %v5148 = vpack.c.b16 %v4652, %v4648
      %v5149 = vpack.c.b16 %v4653, %v4649
      %v5150 = vpack.c.b16 %v4654, %v4650
      %v5151 = vpack.c.b16 %v4655, %v4651
      %v5152 = vpack.c.b16 %v4660, %v4656
      %v5153 = vpack.c.b16 %v4661, %v4657
      %v5154 = vpack.c.b16 %v4662, %v4658
      %v5155 = vpack.c.b16 %v4663, %v4659
      %v5156 = vpack.c.b16 %v4668, %v4664
      %v5157 = vpack.c.b16 %v4669, %v4665
      %v5158 = vpack.c.b16 %v4670, %v4666
      %v5159 = vpack.c.b16 %v4671, %v4667
      %v5160 = vpack.c.b16 %v4676, %v4672
      %v5161 = vpack.c.b16 %v4677, %v4673
      %v5162 = vpack.c.b16 %v4678, %v4674
      %v5163 = vpack.c.b16 %v4679, %v4675
      %v5164 = vpack.c.b16 %v4684, %v4680
      %v5165 = vpack.c.b16 %v4685, %v4681
      %v5166 = vpack.c.b16 %v4686, %v4682
      %v5167 = vpack.c.b16 %v4687, %v4683
      %v5168 = vpack.c.b16 %v4692, %v4688
      %v5169 = vpack.c.b16 %v4693, %v4689
      %v5170 = vpack.c.b16 %v4694, %v4690
      %v5171 = vpack.c.b16 %v4695, %v4691
      %v5172 = vpack.c.b16 %v4700, %v4696
      %v5173 = vpack.c.b16 %v4701, %v4697
      %v5174 = vpack.c.b16 %v4702, %v4698
      %v5175 = vpack.c.b16 %v4703, %v4699
      %v5176 = vpack.c.b16 %v4708, %v4704
      %v5177 = vpack.c.b16 %v4709, %v4705
      %v5178 = vpack.c.b16 %v4710, %v4706
      %v5179 = vpack.c.b16 %v4711, %v4707
      %v5180 = vpack.c.b16 %v4716, %v4712
      %v5181 = vpack.c.b16 %v4717, %v4713
      %v5182 = vpack.c.b16 %v4718, %v4714
      %v5183 = vpack.c.b16 %v4719, %v4715
      %v5184 = vpack.c.b16 %v4724, %v4720
      %v5185 = vpack.c.b16 %v4725, %v4721
      %v5186 = vpack.c.b16 %v4726, %v4722
      %v5187 = vpack.c.b16 %v4727, %v4723
      %v5188 = vpack.c.b16 %v4732, %v4728
      %v5189 = vpack.c.b16 %v4733, %v4729
      %v5190 = vpack.c.b16 %v4734, %v4730
      %v5191 = vpack.c.b16 %v4735, %v4731
      %v5192 = vpack.c.b16 %v4740, %v4736
      %v5193 = vpack.c.b16 %v4741, %v4737
      %v5194 = vpack.c.b16 %v4742, %v4738
      %v5195 = vpack.c.b16 %v4743, %v4739
      %v5196 = vpack.c.b16 %v4748, %v4744
      %v5197 = vpack.c.b16 %v4749, %v4745
      %v5198 = vpack.c.b16 %v4750, %v4746
      %v5199 = vpack.c.b16 %v4751, %v4747
      %v5200 = vpack.c.b16 %v4756, %v4752
      %v5201 = vpack.c.b16 %v4757, %v4753
      %v5202 = vpack.c.b16 %v4758, %v4754
      %v5203 = vpack.c.b16 %v4759, %v4755
      %v5204 = vpack.c.b16 %v4764, %v4760
      %v5205 = vpack.c.b16 %v4765, %v4761
      %v5206 = vpack.c.b16 %v4766, %v4762
      %v5207 = vpack.c.b16 %v4767, %v4763
      %v5208 = vpack.c.b16 %v4772, %v4768
      %v5209 = vpack.c.b16 %v4773, %v4769
      %v5210 = vpack.c.b16 %v4774, %v4770
      %v5211 = vpack.c.b16 %v4775, %v4771
      %v5212 = vpack.c.b16 %v4780, %v4776
      %v5213 = vpack.c.b16 %v4781, %v4777
      %v5214 = vpack.c.b16 %v4782, %v4778
      %v5215 = vpack.c.b16 %v4783, %v4779
      %v5216 = vpack.c.b16 %v4788, %v4784
      %v5217 = vpack.c.b16 %v4789, %v4785
      %v5218 = vpack.c.b16 %v4790, %v4786
      %v5219 = vpack.c.b16 %v4791, %v4787
      %v5220 = vpack.c.b16 %v4796, %v4792
      %v5221 = vpack.c.b16 %v4797, %v4793
      %v5222 = vpack.c.b16 %v4798, %v4794
      %v5223 = vpack.c.b16 %v4799, %v4795
      %v5224 = vpack.c.b16 %v4804, %v4800
      %v5225 = vpack.c.b16 %v4805, %v4801
      %v5226 = vpack.c.b16 %v4806, %v4802
      %v5227 = vpack.c.b16 %v4807, %v4803
      %v5228 = vpack.c.b16 %v4812, %v4808
      %v5229 = vpack.c.b16 %v4813, %v4809
      %v5230 = vpack.c.b16 %v4814, %v4810
      %v5231 = vpack.c.b16 %v4815, %v4811
      %v5232 = vpack.c.b16 %v4820, %v4816
      %v5233 = vpack.c.b16 %v4821, %v4817
      %v5234 = vpack.c.b16 %v4822, %v4818
      %v5235 = vpack.c.b16 %v4823, %v4819
      %v5236 = vpack.c.b16 %v4828, %v4824
      %v5237 = vpack.c.b16 %v4829, %v4825
      %v5238 = vpack.c.b16 %v4830, %v4826
      %v5239 = vpack.c.b16 %v4831, %v4827
      %v5240 = vpack.c.b16 %v4836, %v4832
      %v5241 = vpack.c.b16 %v4837, %v4833
      %v5242 = vpack.c.b16 %v4838, %v4834
      %v5243 = vpack.c.b16 %v4839, %v4835
      %v5244 = vpack.c.b16 %v4844, %v4840
      %v5245 = vpack.c.b16 %v4845, %v4841
      %v5246 = vpack.c.b16 %v4846, %v4842
      %v5247 = vpack.c.b16 %v4847, %v4843
      %v5248 = vpack.c.b16 %v4852, %v4848
      %v5249 = vpack.c.b16 %v4853, %v4849
      %v5250 = vpack.c.b16 %v4854, %v4850
      %v5251 = vpack.c.b16 %v4855, %v4851
      %v5252 = vpack.c.b16 %v4860, %v4856
      %v5253 = vpack.c.b16 %v4861, %v4857
      %v5254 = vpack.c.b16 %v4862, %v4858
      %v5255 = vpack.c.b16 %v4863, %v4859
      %v5256 = vpack.c.b16 %v4868, %v4864
      %v5257 = vpack.c.b16 %v4869, %v4865
      %v5258 = vpack.c.b16 %v4870, %v4866
      %v5259 = vpack.c.b16 %v4871, %v4867
      %v5260 = vpack.c.b16 %v4876, %v4872
      %v5261 = vpack.c.b16 %v4877, %v4873
      %v5262 = vpack.c.b16 %v4878, %v4874
      %v5263 = vpack.c.b16 %v4879, %v4875
      %v5264 = vpack.c.b16 %v4884, %v4880
      %v5265 = vpack.c.b16 %v4885, %v4881
      %v5266 = vpack.c.b16 %v4886, %v4882
      %v5267 = vpack.c.b16 %v4887, %v4883
      %v5268 = vpack.c.b16 %v4892, %v4888
      %v5269 = vpack.c.b16 %v4893, %v4889
      %v5270 = vpack.c.b16 %v4894, %v4890
      %v5271 = vpack.c.b16 %v4895, %v4891
      %v5272 = vpack.c.b16 %v4900, %v4896
      %v5273 = vpack.c.b16 %v4901, %v4897
      %v5274 = vpack.c.b16 %v4902, %v4898
      %v5275 = vpack.c.b16 %v4903, %v4899
      %v5276 = vpack.c.b16 %v4908, %v4904
      %v5277 = vpack.c.b16 %v4909, %v4905
      %v5278 = vpack.c.b16 %v4910, %v4906
      %v5279 = vpack.c.b16 %v4911, %v4907
      %v5280 = vpack.c.b16 %v4916, %v4912
      %v5281 = vpack.c.b16 %v4917, %v4913
      %v5282 = vpack.c.b16 %v4918, %v4914
      %v5283 = vpack.c.b16 %v4919, %v4915
      %v5284 = vpack.c.b16 %v4924, %v4920
      %v5285 = vpack.c.b16 %v4925, %v4921
      %v5286 = vpack.c.b16 %v4926, %v4922
      %v5287 = vpack.c.b16 %v4927, %v4923
      %v5288 = vpack.c.b16 %v4932, %v4928
      %v5289 = vpack.c.b16 %v4933, %v4929
      %v5290 = vpack.c.b16 %v4934, %v4930
      %v5291 = vpack.c.b16 %v4935, %v4931
      %v5292 = vpack.c.b16 %v4940, %v4936
      %v5293 = vpack.c.b16 %v4941, %v4937
      %v5294 = vpack.c.b16 %v4942, %v4938
      %v5295 = vpack.c.b16 %v4943, %v4939
      %v5296 = vpack.c.b16 %v4948, %v4944
      %v5297 = vpack.c.b16 %v4949, %v4945
      %v5298 = vpack.c.b16 %v4950, %v4946
      %v5299 = vpack.c.b16 %v4951, %v4947
      %v5300 = vpack.c.b16 %v4956, %v4952
      %v5301 = vpack.c.b16 %v4957, %v4953
      %v5302 = vpack.c.b16 %v4958, %v4954
      %v5303 = vpack.c.b16 %v4959, %v4955
      %v5304 = vpack.c.b16 %v4964, %v4960
      %v5305 = vpack.c.b16 %v4965, %v4961
      %v5306 = vpack.c.b16 %v4966, %v4962
      %v5307 = vpack.c.b16 %v4967, %v4963
      %v5308 = vpack.c.b16 %v4972, %v4968
      %v5309 = vpack.c.b16 %v4973, %v4969
      %v5310 = vpack.c.b16 %v4974, %v4970
      %v5311 = vpack.c.b16 %v4975, %v4971
      %v5312 = vpack.c.b16 %v4980, %v4976
      %v5313 = vpack.c.b16 %v4981, %v4977
      %v5314 = vpack.c.b16 %v4982, %v4978
      %v5315 = vpack.c.b16 %v4983, %v4979
      %v5316 = vpack.c.b16 %v4988, %v4984
      %v5317 = vpack.c.b16 %v4989, %v4985
      %v5318 = vpack.c.b16 %v4990, %v4986
      %v5319 = vpack.c.b16 %v4991, %v4987
      %v5320 = vpack.c.b16 %v4996, %v4992
      %v5321 = vpack.c.b16 %v4997, %v4993
      %v5322 = vpack.c.b16 %v4998, %v4994
      %v5323 = vpack.c.b16 %v4999, %v4995
      %v5324 = vpack.c.b16 %v5004, %v5000
      %v5325 = vpack.c.b16 %v5005, %v5001
      %v5326 = vpack.c.b16 %v5006, %v5002
      %v5327 = vpack.c.b16 %v5007, %v5003
      %v5328 = vpack.c.b16 %v5012, %v5008
      %v5329 = vpack.c.b16 %v5013, %v5009
      %v5330 = vpack.c.b16 %v5014, %v5010
      %v5331 = vpack.c.b16 %v5015, %v5011
      %v5332 = vpack.c.b16 %v5020, %v5016
      %v5333 = vpack.c.b16 %v5021, %v5017
      %v5334 = vpack.c.b16 %v5022, %v5018
      %v5335 = vpack.c.b16 %v5023, %v5019
      %v5336 = vpack.c.b16 %v5028, %v5024
      %v5337 = vpack.c.b16 %v5029, %v5025
      %v5338 = vpack.c.b16 %v5030, %v5026
      %v5339 = vpack.c.b16 %v5031, %v5027
      %v5340 = vpack.c.b16 %v5036, %v5032
      %v5341 = vpack.c.b16 %v5037, %v5033
      %v5342 = vpack.c.b16 %v5038, %v5034
      %v5343 = vpack.c.b16 %v5039, %v5035
      %v5344 = vpack.c.b16 %v5044, %v5040
      %v5345 = vpack.c.b16 %v5045, %v5041
      %v5346 = vpack.c.b16 %v5046, %v5042
      %v5347 = vpack.c.b16 %v5047, %v5043
      %v5348 = vpack.c.b16 %v5052, %v5048
      %v5349 = vpack.c.b16 %v5053, %v5049
      %v5350 = vpack.c.b16 %v5054, %v5050
      %v5351 = vpack.c.b16 %v5055, %v5051
      %v5352 = vpack.c.b16 %v5060, %v5056
      %v5353 = vpack.c.b16 %v5061, %v5057
      %v5354 = vpack.c.b16 %v5062, %v5058
      %v5355 = vpack.c.b16 %v5063, %v5059
      %v5356 = vpack.c.b16 %v5068, %v5064
      %v5357 = vpack.c.b16 %v5069, %v5065
      %v5358 = vpack.c.b16 %v5070, %v5066
      %v5359 = vpack.c.b16 %v5071, %v5067
      %v5360 = vpack.c.b16 %v5076, %v5072
      %v5361 = vpack.c.b16 %v5077, %v5073
      %v5362 = vpack.c.b16 %v5078, %v5074
      %v5363 = vpack.c.b16 %v5079, %v5075
      %v5364 = vpack.c.b16 %v5084, %v5080
      %v5365 = vpack.c.b16 %v5085, %v5081
      %v5366 = vpack.c.b16 %v5086, %v5082
      %v5367 = vpack.c.b16 %v5087, %v5083
      %v5368 = vpack.c.b16 %v5092, %v5088
      %v5369 = vpack.c.b16 %v5093, %v5089
      %v5370 = vpack.c.b16 %v5094, %v5090
      %v5371 = vpack.c.b16 %v5095, %v5091
      %v5372 = vpack.c.b16 %v5100, %v5096
      %v5373 = vpack.c.b16 %v5101, %v5097
      %v5374 = vpack.c.b16 %v5102, %v5098
      %v5375 = vpack.c.b16 %v5103, %v5099
      %v5376 = vpack.c.b16 %v5108, %v5104
      %v5377 = vpack.c.b16 %v5109, %v5105
      %v5378 = vpack.c.b16 %v5110, %v5106
      %v5379 = vpack.c.b16 %v5111, %v5107
      %v5380 = vpack.c.b16 %v5116, %v5112
      %v5381 = vpack.c.b16 %v5117, %v5113
      %v5382 = vpack.c.b16 %v5118, %v5114
      %v5383 = vpack.c.b16 %v5119, %v5115
      %v5384 = vpack.c.b16 %v5124, %v5120
      %v5385 = vpack.c.b16 %v5125, %v5121
      %v5386 = vpack.c.b16 %v5126, %v5122
      %v5387 = vpack.c.b16 %v5127, %v5123
      %v5388 = vpack.c.b16 %v5132, %v5128
      %v5389 = vpack.c.b16 %v5133, %v5129
      %v5390 = vpack.c.b16 %v5134, %v5130
      %v5391 = vpack.c.b16 %v5135, %v5131
      %5648 = vmatprep.subr.bf16.mxu0 %v5165
      %5649 = vmatpush1.bf16.msra.mxu0 %v5164
      %5650 = vmatprep.subr.bf16.mxu0 %v5161
      %5651 = vmatpush1.bf16.msra.mxu0 %v5160
      %5652 = vmatprep.subr.bf16.mxu0 %v5157
      %5653 = vmatpush1.bf16.msra.mxu0 %v5156
      %5654 = vmatprep.subr.bf16.mxu0 %v5153
      %5655 = vmatpush1.bf16.msra.mxu0 %v5152
      %5656 = vmatprep.subr.bf16.mxu0 %v5149
      %5657 = vmatpush1.bf16.msra.mxu0 %v5148
      %5658 = vmatprep.subr.bf16.mxu0 %v5145
      %5659 = vmatpush1.bf16.msra.mxu0 %v5144
      %5660 = vmatprep.subr.bf16.mxu0 %v5141
      %5661 = vmatpush1.bf16.msra.mxu0 %v5140
      %5662 = vmatprep.subr.bf16.mxu0 %v5137
      %5663 = vmatpush1.bf16.msra.mxu0 %v5136
      %5664 = vmatprep.subr.bf16.mxu0 %v5197
      %5665 = vmatpush2.bf16.msra.mxu0 %v5196
      %5666 = vmatprep.subr.bf16.mxu0 %v5193
      %5667 = vmatpush2.bf16.msra.mxu0 %v5192
      %5668 = vmatprep.subr.bf16.mxu0 %v5189
      %5669 = vmatpush2.bf16.msra.mxu0 %v5188
      %5670 = vmatprep.subr.bf16.mxu0 %v5185
      %5671 = vmatpush2.bf16.msra.mxu0 %v5184
      %5672 = vmatprep.subr.bf16.mxu0 %v5181
      %5673 = vmatpush2.bf16.msra.mxu0 %v5180
      %5674 = vmatprep.subr.bf16.mxu0 %v5177
      %5675 = vmatpush2.bf16.msra.mxu0 %v5176
      %5676 = vmatprep.subr.bf16.mxu0 %v5173
      %5677 = vmatpush2.bf16.msra.mxu0 %v5172
      %5678 = vmatprep.subr.bf16.mxu0 %v5169
      %5679 = vmatpush2.bf16.msra.mxu0 %v5168
      %5680 = vmatprep.mubr.bf16.mxu0 %v4083
      %5681 = vmatmul.mubr.bf16.gmra.mxu0 %v4082
      %v5682 = vpop.f32.mrf.mxu0
      %v5683 = vadd.f32 %v4351, %v5682
      %v5684 = vpop.f32.mrf.mxu0
      %v5685 = vadd.f32 %v4355, %v5684
      %v5686 = vpop.f32.mrf.mxu0
      %v5687 = vadd.f32 %v4351, %v5686
      %v5688 = vpop.f32.mrf.mxu0
      %v5689 = vadd.f32 %v4355, %v5688
      %5690 = vdwg.mxu0
      %5691 = vmatprep.subr.bf16.mxu0 %v5229
      %5692 = vmatpush1.bf16.msra.mxu0 %v5228
      %5693 = vmatprep.subr.bf16.mxu0 %v5225
      %5694 = vmatpush1.bf16.msra.mxu0 %v5224
      %5695 = vmatprep.subr.bf16.mxu0 %v5221
      %5696 = vmatpush1.bf16.msra.mxu0 %v5220
      %5697 = vmatprep.subr.bf16.mxu0 %v5217
      %5698 = vmatpush1.bf16.msra.mxu0 %v5216
      %5699 = vmatprep.subr.bf16.mxu0 %v5213
      %5700 = vmatpush1.bf16.msra.mxu0 %v5212
      %5701 = vmatprep.subr.bf16.mxu0 %v5209
      %5702 = vmatpush1.bf16.msra.mxu0 %v5208
      %5703 = vmatprep.subr.bf16.mxu0 %v5205
      %5704 = vmatpush1.bf16.msra.mxu0 %v5204
      %5705 = vmatprep.subr.bf16.mxu0 %v5201
      %5706 = vmatpush1.bf16.msra.mxu0 %v5200
      %5707 = vmatprep.subr.bf16.mxu0 %v5261
      %5708 = vmatpush2.bf16.msra.mxu0 %v5260
      %5709 = vmatprep.subr.bf16.mxu0 %v5257
      %5710 = vmatpush2.bf16.msra.mxu0 %v5256
      %5711 = vmatprep.subr.bf16.mxu0 %v5253
      %5712 = vmatpush2.bf16.msra.mxu0 %v5252
      %5713 = vmatprep.subr.bf16.mxu0 %v5249
      %5714 = vmatpush2.bf16.msra.mxu0 %v5248
      %5715 = vmatprep.subr.bf16.mxu0 %v5245
      %5716 = vmatpush2.bf16.msra.mxu0 %v5244
      %5717 = vmatprep.subr.bf16.mxu0 %v5241
      %5718 = vmatpush2.bf16.msra.mxu0 %v5240
      %5719 = vmatprep.subr.bf16.mxu0 %v5237
      %5720 = vmatpush2.bf16.msra.mxu0 %v5236
      %5721 = vmatprep.subr.bf16.mxu0 %v5233
      %5722 = vmatpush2.bf16.msra.mxu0 %v5232
      %5723 = vmatprep.mubr.bf16.mxu0 %v4085
      %5724 = vmatmul.mubr.bf16.gmra.mxu0 %v4084
      %v5725 = vpop.f32.mrf.mxu0
      %v5726 = vadd.f32 %v5683, %v5725
      %v5727 = vpop.f32.mrf.mxu0
      %v5728 = vadd.f32 %v5685, %v5727
      %v5729 = vpop.f32.mrf.mxu0
      %v5730 = vadd.f32 %v5687, %v5729
      %v5731 = vpop.f32.mrf.mxu0
      %v5732 = vadd.f32 %v5689, %v5731
      %5733 = vdwg.mxu0
      %5734 = vmatprep.subr.bf16.mxu0 %v5293
      %5735 = vmatpush1.bf16.msra.mxu0 %v5292
      %5736 = vmatprep.subr.bf16.mxu0 %v5289
      %5737 = vmatpush1.bf16.msra.mxu0 %v5288
      %5738 = vmatprep.subr.bf16.mxu0 %v5285
      %5739 = vmatpush1.bf16.msra.mxu0 %v5284
      %5740 = vmatprep.subr.bf16.mxu0 %v5281
      %5741 = vmatpush1.bf16.msra.mxu0 %v5280
      %5742 = vmatprep.subr.bf16.mxu0 %v5277
      %5743 = vmatpush1.bf16.msra.mxu0 %v5276
      %5744 = vmatprep.subr.bf16.mxu0 %v5273
      %5745 = vmatpush1.bf16.msra.mxu0 %v5272
      %5746 = vmatprep.subr.bf16.mxu0 %v5269
      %5747 = vmatpush1.bf16.msra.mxu0 %v5268
      %5748 = vmatprep.subr.bf16.mxu0 %v5265
      %5749 = vmatpush1.bf16.msra.mxu0 %v5264
      %5750 = vmatprep.subr.bf16.mxu0 %v5325
      %5751 = vmatpush2.bf16.msra.mxu0 %v5324
      %5752 = vmatprep.subr.bf16.mxu0 %v5321
      %5753 = vmatpush2.bf16.msra.mxu0 %v5320
      %5754 = vmatprep.subr.bf16.mxu0 %v5317
      %5755 = vmatpush2.bf16.msra.mxu0 %v5316
      %5756 = vmatprep.subr.bf16.mxu0 %v5313
      %5757 = vmatpush2.bf16.msra.mxu0 %v5312
      %5758 = vmatprep.subr.bf16.mxu0 %v5309
      %5759 = vmatpush2.bf16.msra.mxu0 %v5308
      %5760 = vmatprep.subr.bf16.mxu0 %v5305
      %5761 = vmatpush2.bf16.msra.mxu0 %v5304
      %5762 = vmatprep.subr.bf16.mxu0 %v5301
      %5763 = vmatpush2.bf16.msra.mxu0 %v5300
      %5764 = vmatprep.subr.bf16.mxu0 %v5297
      %5765 = vmatpush2.bf16.msra.mxu0 %v5296
      %5766 = vmatprep.mubr.bf16.mxu0 %v4087
      %5767 = vmatmul.mubr.bf16.gmra.mxu0 %v4086
      %v5768 = vpop.f32.mrf.mxu0
      %v5769 = vadd.f32 %v5726, %v5768
      %v5770 = vpop.f32.mrf.mxu0
      %v5771 = vadd.f32 %v5728, %v5770
      %v5772 = vpop.f32.mrf.mxu0
      %v5773 = vadd.f32 %v5730, %v5772
      %v5774 = vpop.f32.mrf.mxu0
      %v5775 = vadd.f32 %v5732, %v5774
      %5776 = vdwg.mxu0
      %5777 = vmatprep.subr.bf16.mxu0 %v5357
      %5778 = vmatpush1.bf16.msra.mxu0 %v5356
      %5779 = vmatprep.subr.bf16.mxu0 %v5353
      %5780 = vmatpush1.bf16.msra.mxu0 %v5352
      %5781 = vmatprep.subr.bf16.mxu0 %v5349
      %5782 = vmatpush1.bf16.msra.mxu0 %v5348
      %5783 = vmatprep.subr.bf16.mxu0 %v5345
      %5784 = vmatpush1.bf16.msra.mxu0 %v5344
      %5785 = vmatprep.subr.bf16.mxu0 %v5341
      %5786 = vmatpush1.bf16.msra.mxu0 %v5340
      %5787 = vmatprep.subr.bf16.mxu0 %v5337
      %5788 = vmatpush1.bf16.msra.mxu0 %v5336
      %5789 = vmatprep.subr.bf16.mxu0 %v5333
      %5790 = vmatpush1.bf16.msra.mxu0 %v5332
      %5791 = vmatprep.subr.bf16.mxu0 %v5329
      %5792 = vmatpush1.bf16.msra.mxu0 %v5328
      %5793 = vmatprep.subr.bf16.mxu0 %v5389
      %5794 = vmatpush2.bf16.msra.mxu0 %v5388
      %5795 = vmatprep.subr.bf16.mxu0 %v5385
      %5796 = vmatpush2.bf16.msra.mxu0 %v5384
      %5797 = vmatprep.subr.bf16.mxu0 %v5381
      %5798 = vmatpush2.bf16.msra.mxu0 %v5380
      %5799 = vmatprep.subr.bf16.mxu0 %v5377
      %5800 = vmatpush2.bf16.msra.mxu0 %v5376
      %5801 = vmatprep.subr.bf16.mxu0 %v5373
      %5802 = vmatpush2.bf16.msra.mxu0 %v5372
      %5803 = vmatprep.subr.bf16.mxu0 %v5369
      %5804 = vmatpush2.bf16.msra.mxu0 %v5368
      %5805 = vmatprep.subr.bf16.mxu0 %v5365
      %5806 = vmatpush2.bf16.msra.mxu0 %v5364
      %5807 = vmatprep.subr.bf16.mxu0 %v5361
      %5808 = vmatpush2.bf16.msra.mxu0 %v5360
      %5809 = vmatprep.mubr.bf16.mxu0 %v4089
      %5810 = vmatmul.mubr.bf16.gmra.mxu0 %v4088
      %v5811 = vpop.f32.mrf.mxu0
      %v5812 = vadd.f32 %v5769, %v5811
      %v5813 = vpop.f32.mrf.mxu0
      %v5814 = vadd.f32 %v5771, %v5813
      %v5815 = vpop.f32.mrf.mxu0
      %v5816 = vadd.f32 %v5773, %v5815
      %v5817 = vpop.f32.mrf.mxu0
      %v5818 = vadd.f32 %v5775, %v5817
      %5819 = vdwg.mxu0
      %5820 = vmatprep.subr.bf16.mxu0 %v5167
      %5821 = vmatpush1.bf16.msra.mxu0 %v5166
      %5822 = vmatprep.subr.bf16.mxu0 %v5163
      %5823 = vmatpush1.bf16.msra.mxu0 %v5162
      %5824 = vmatprep.subr.bf16.mxu0 %v5159
      %5825 = vmatpush1.bf16.msra.mxu0 %v5158
      %5826 = vmatprep.subr.bf16.mxu0 %v5155
      %5827 = vmatpush1.bf16.msra.mxu0 %v5154
      %5828 = vmatprep.subr.bf16.mxu0 %v5151
      %5829 = vmatpush1.bf16.msra.mxu0 %v5150
      %5830 = vmatprep.subr.bf16.mxu0 %v5147
      %5831 = vmatpush1.bf16.msra.mxu0 %v5146
      %5832 = vmatprep.subr.bf16.mxu0 %v5143
      %5833 = vmatpush1.bf16.msra.mxu0 %v5142
      %5834 = vmatprep.subr.bf16.mxu0 %v5139
      %5835 = vmatpush1.bf16.msra.mxu0 %v5138
      %5836 = vmatprep.subr.bf16.mxu0 %v5199
      %5837 = vmatpush2.bf16.msra.mxu0 %v5198
      %5838 = vmatprep.subr.bf16.mxu0 %v5195
      %5839 = vmatpush2.bf16.msra.mxu0 %v5194
      %5840 = vmatprep.subr.bf16.mxu0 %v5191
      %5841 = vmatpush2.bf16.msra.mxu0 %v5190
      %5842 = vmatprep.subr.bf16.mxu0 %v5187
      %5843 = vmatpush2.bf16.msra.mxu0 %v5186
      %5844 = vmatprep.subr.bf16.mxu0 %v5183
      %5845 = vmatpush2.bf16.msra.mxu0 %v5182
      %5846 = vmatprep.subr.bf16.mxu0 %v5179
      %5847 = vmatpush2.bf16.msra.mxu0 %v5178
      %5848 = vmatprep.subr.bf16.mxu0 %v5175
      %5849 = vmatpush2.bf16.msra.mxu0 %v5174
      %5850 = vmatprep.subr.bf16.mxu0 %v5171
      %5851 = vmatpush2.bf16.msra.mxu0 %v5170
      %5852 = vmatprep.mubr.bf16.mxu0 %v4083
      %5853 = vmatmul.mubr.bf16.gmra.mxu0 %v4082
      %v5854 = vpop.f32.mrf.mxu0
      %v5855 = vadd.f32 %v4359, %v5854
      %v5856 = vpop.f32.mrf.mxu0
      %v5857 = vadd.f32 %v4363, %v5856
      %v5858 = vpop.f32.mrf.mxu0
      %v5859 = vadd.f32 %v4359, %v5858
      %v5860 = vpop.f32.mrf.mxu0
      %v5861 = vadd.f32 %v4363, %v5860
      %5862 = vdwg.mxu0
      %5863 = vmatprep.subr.bf16.mxu0 %v5231
      %5864 = vmatpush1.bf16.msra.mxu0 %v5230
      %5865 = vmatprep.subr.bf16.mxu0 %v5227
      %5866 = vmatpush1.bf16.msra.mxu0 %v5226
      %5867 = vmatprep.subr.bf16.mxu0 %v5223
      %5868 = vmatpush1.bf16.msra.mxu0 %v5222
      %5869 = vmatprep.subr.bf16.mxu0 %v5219
      %5870 = vmatpush1.bf16.msra.mxu0 %v5218
      %5871 = vmatprep.subr.bf16.mxu0 %v5215
      %5872 = vmatpush1.bf16.msra.mxu0 %v5214
      %5873 = vmatprep.subr.bf16.mxu0 %v5211
      %5874 = vmatpush1.bf16.msra.mxu0 %v5210
      %5875 = vmatprep.subr.bf16.mxu0 %v5207
      %5876 = vmatpush1.bf16.msra.mxu0 %v5206
      %5877 = vmatprep.subr.bf16.mxu0 %v5203
      %5878 = vmatpush1.bf16.msra.mxu0 %v5202
      %5879 = vmatprep.subr.bf16.mxu0 %v5263
      %5880 = vmatpush2.bf16.msra.mxu0 %v5262
      %5881 = vmatprep.subr.bf16.mxu0 %v5259
      %5882 = vmatpush2.bf16.msra.mxu0 %v5258
      %5883 = vmatprep.subr.bf16.mxu0 %v5255
      %5884 = vmatpush2.bf16.msra.mxu0 %v5254
      %5885 = vmatprep.subr.bf16.mxu0 %v5251
      %5886 = vmatpush2.bf16.msra.mxu0 %v5250
      %5887 = vmatprep.subr.bf16.mxu0 %v5247
      %5888 = vmatpush2.bf16.msra.mxu0 %v5246
      %5889 = vmatprep.subr.bf16.mxu0 %v5243
      %5890 = vmatpush2.bf16.msra.mxu0 %v5242
      %5891 = vmatprep.subr.bf16.mxu0 %v5239
      %5892 = vmatpush2.bf16.msra.mxu0 %v5238
      %5893 = vmatprep.subr.bf16.mxu0 %v5235
      %5894 = vmatpush2.bf16.msra.mxu0 %v5234
      %5895 = vmatprep.mubr.bf16.mxu0 %v4085
      %5896 = vmatmul.mubr.bf16.gmra.mxu0 %v4084
      %v5897 = vpop.f32.mrf.mxu0
      %v5898 = vadd.f32 %v5855, %v5897
      %v5899 = vpop.f32.mrf.mxu0
      %v5900 = vadd.f32 %v5857, %v5899
      %v5901 = vpop.f32.mrf.mxu0
      %v5902 = vadd.f32 %v5859, %v5901
      %v5903 = vpop.f32.mrf.mxu0
      %v5904 = vadd.f32 %v5861, %v5903
      %5905 = vdwg.mxu0
      %5906 = vmatprep.subr.bf16.mxu0 %v5295
      %5907 = vmatpush1.bf16.msra.mxu0 %v5294
      %5908 = vmatprep.subr.bf16.mxu0 %v5291
      %5909 = vmatpush1.bf16.msra.mxu0 %v5290
      %5910 = vmatprep.subr.bf16.mxu0 %v5287
      %5911 = vmatpush1.bf16.msra.mxu0 %v5286
      %5912 = vmatprep.subr.bf16.mxu0 %v5283
      %5913 = vmatpush1.bf16.msra.mxu0 %v5282
      %5914 = vmatprep.subr.bf16.mxu0 %v5279
      %5915 = vmatpush1.bf16.msra.mxu0 %v5278
      %5916 = vmatprep.subr.bf16.mxu0 %v5275
      %5917 = vmatpush1.bf16.msra.mxu0 %v5274
      %5918 = vmatprep.subr.bf16.mxu0 %v5271
      %5919 = vmatpush1.bf16.msra.mxu0 %v5270
      %5920 = vmatprep.subr.bf16.mxu0 %v5267
      %5921 = vmatpush1.bf16.msra.mxu0 %v5266
      %5922 = vmatprep.subr.bf16.mxu0 %v5327
      %5923 = vmatpush2.bf16.msra.mxu0 %v5326
      %5924 = vmatprep.subr.bf16.mxu0 %v5323
      %5925 = vmatpush2.bf16.msra.mxu0 %v5322
      %5926 = vmatprep.subr.bf16.mxu0 %v5319
      %5927 = vmatpush2.bf16.msra.mxu0 %v5318
      %5928 = vmatprep.subr.bf16.mxu0 %v5315
      %5929 = vmatpush2.bf16.msra.mxu0 %v5314
      %5930 = vmatprep.subr.bf16.mxu0 %v5311
      %5931 = vmatpush2.bf16.msra.mxu0 %v5310
      %5932 = vmatprep.subr.bf16.mxu0 %v5307
      %5933 = vmatpush2.bf16.msra.mxu0 %v5306
      %5934 = vmatprep.subr.bf16.mxu0 %v5303
      %5935 = vmatpush2.bf16.msra.mxu0 %v5302
      %5936 = vmatprep.subr.bf16.mxu0 %v5299
      %5937 = vmatpush2.bf16.msra.mxu0 %v5298
      %5938 = vmatprep.mubr.bf16.mxu0 %v4087
      %5939 = vmatmul.mubr.bf16.gmra.mxu0 %v4086
      %v5940 = vpop.f32.mrf.mxu0
      %v5941 = vadd.f32 %v5898, %v5940
      %v5942 = vpop.f32.mrf.mxu0
      %v5943 = vadd.f32 %v5900, %v5942
      %v5944 = vpop.f32.mrf.mxu0
      %v5945 = vadd.f32 %v5902, %v5944
      %v5946 = vpop.f32.mrf.mxu0
      %v5947 = vadd.f32 %v5904, %v5946
      %5948 = vdwg.mxu0
      %5949 = vmatprep.subr.bf16.mxu0 %v5359
      %5950 = vmatpush1.bf16.msra.mxu0 %v5358
      %5951 = vmatprep.subr.bf16.mxu0 %v5355
      %5952 = vmatpush1.bf16.msra.mxu0 %v5354
      %5953 = vmatprep.subr.bf16.mxu0 %v5351
      %5954 = vmatpush1.bf16.msra.mxu0 %v5350
      %5955 = vmatprep.subr.bf16.mxu0 %v5347
      %5956 = vmatpush1.bf16.msra.mxu0 %v5346
      %5957 = vmatprep.subr.bf16.mxu0 %v5343
      %5958 = vmatpush1.bf16.msra.mxu0 %v5342
      %5959 = vmatprep.subr.bf16.mxu0 %v5339
      %5960 = vmatpush1.bf16.msra.mxu0 %v5338
      %5961 = vmatprep.subr.bf16.mxu0 %v5335
      %5962 = vmatpush1.bf16.msra.mxu0 %v5334
      %5963 = vmatprep.subr.bf16.mxu0 %v5331
      %5964 = vmatpush1.bf16.msra.mxu0 %v5330
      %5965 = vmatprep.subr.bf16.mxu0 %v5391
      %5966 = vmatpush2.bf16.msra.mxu0 %v5390
      %5967 = vmatprep.subr.bf16.mxu0 %v5387
      %5968 = vmatpush2.bf16.msra.mxu0 %v5386
      %5969 = vmatprep.subr.bf16.mxu0 %v5383
      %5970 = vmatpush2.bf16.msra.mxu0 %v5382
      %5971 = vmatprep.subr.bf16.mxu0 %v5379
      %5972 = vmatpush2.bf16.msra.mxu0 %v5378
      %5973 = vmatprep.subr.bf16.mxu0 %v5375
      %5974 = vmatpush2.bf16.msra.mxu0 %v5374
      %5975 = vmatprep.subr.bf16.mxu0 %v5371
      %5976 = vmatpush2.bf16.msra.mxu0 %v5370
      %5977 = vmatprep.subr.bf16.mxu0 %v5367
      %5978 = vmatpush2.bf16.msra.mxu0 %v5366
      %5979 = vmatprep.subr.bf16.mxu0 %v5363
      %5980 = vmatpush2.bf16.msra.mxu0 %v5362
      %5981 = vmatprep.mubr.bf16.mxu0 %v4089
      %5982 = vmatmul.mubr.bf16.gmra.mxu0 %v4088
      %v5983 = vpop.f32.mrf.mxu0
      %v5984 = vadd.f32 %v5941, %v5983
      %v5985 = vpop.f32.mrf.mxu0
      %v5986 = vadd.f32 %v5943, %v5985
      %v5987 = vpop.f32.mrf.mxu0
      %v5988 = vadd.f32 %v5945, %v5987
      %v5989 = vpop.f32.mrf.mxu0
      %v5990 = vadd.f32 %v5947, %v5989
      %5991 = vdwg.mxu0
      %vm5992 = vcmp.ge.f32.partialorder %v5812, 0.0
      %vm5993 = vcmp.ge.f32.partialorder %v5814, 0.0
      %vm5994 = vcmp.ge.f32.partialorder %v5984, 0.0
      %vm5995 = vcmp.ge.f32.partialorder %v5986, 0.0
      %vm5996 = vcmp.ge.f32.partialorder %v5816, 0.0
      %vm5997 = vcmp.ge.f32.partialorder %v5818, 0.0
      %vm5998 = vcmp.ge.f32.partialorder %v5988, 0.0
      %vm5999 = vcmp.ge.f32.partialorder %v5990, 0.0
      %v6000 = vmul.f32 %v5812, 0.2
      %v6001 = vmul.f32 %v5814, 0.2
      %v6002 = vmul.f32 %v5984, 0.2
      %v6003 = vmul.f32 %v5986, 0.2
      %v6004 = vmul.f32 %v5816, 0.2
      %v6005 = vmul.f32 %v5818, 0.2
      %v6006 = vmul.f32 %v5988, 0.2
      %v6007 = vmul.f32 %v5990, 0.2
      %v6008 = vsel %vm5992, %v5812, %v6000
      %v6009 = vsel %vm5993, %v5814, %v6001
      %v6010 = vsel %vm5994, %v5984, %v6002
      %v6011 = vsel %vm5995, %v5986, %v6003
      %v6012 = vsel %vm5996, %v5816, %v6004
      %v6013 = vsel %vm5997, %v5818, %v6005
      %v6014 = vsel %vm5998, %v5988, %v6006
      %v6015 = vsel %vm5999, %v5990, %v6007
      %v6016 = vld [vmem:[#allocation13] sm:$0xf]
      %v6018 = vlaneseq
      %v6019 = vshrl.u32 %v6018, 7
      %v6020 = vsub.s32 0, %v6019
      %v6021 = vrot.slane %v6016, %v6020
      %v6022 = vlaneseq
      %v6023 = vshrl.u32 %v6022, 7
      %v6024 = vsub.s32 1, %v6023
      %v6025 = vrot.slane %v6016, %v6024
      %v6026 = vlaneseq
      %v6027 = vshrl.u32 %v6026, 7
      %v6028 = vsub.s32 2, %v6027
      %v6029 = vrot.slane %v6016, %v6028
      %v6030 = vlaneseq
      %v6031 = vshrl.u32 %v6030, 7
      %v6032 = vsub.s32 3, %v6031
      %v6033 = vrot.slane %v6016, %v6032
      %v6038 = vmul.f32 %v6008, %v6021
      %v6039 = vmul.f32 %v6009, %v6025
      %v6040 = vmul.f32 %v6010, %v6029
      %v6041 = vmul.f32 %v6011, %v6033
      %v6042 = vmul.f32 %v6012, %v6021
      %v6043 = vmul.f32 %v6013, %v6025
      %v6044 = vmul.f32 %v6014, %v6029
      %v6045 = vmul.f32 %v6015, %v6033
      %v6046 = vadd.f32 %v6038, %v6039
      %v6047 = vadd.f32 %v6046, %v6040
      %v6048 = vadd.f32 %v6047, %v6041
      %6049 = vadd.xlane.f32.xlu0 %v6048
      %v6050 = vpop.xlane.xlu0 %6049
      %v6051 = vadd.f32 %v6042, %v6043
      %v6052 = vadd.f32 %v6051, %v6044
      %v6053 = vadd.f32 %v6052, %v6045
      %6054 = vadd.xlane.f32.xlu0 %v6053
      %v6055 = vpop.xlane.xlu0 %6054
      %v6056 = vld [vmem:[#allocation3] sm:$0x1]
      %v6058 = vlaneseq
      %v6059 = vshrl.u32 %v6058, 7
      %v6060 = vsub.s32 0, %v6059
      %v6061 = vrot.slane %v6056, %v6060
      %v6063 = vadd.f32 %v6050, %v6061
      %v6064 = vadd.f32 %v6055, %v6061
      %v6065 = vxor.u32 %v6063, 2147483648
      %v6066 = vxor.u32 %v6064, 2147483648
      %v6067 = vmul.f32 %v6065, 1.442695
      %v6068 = vpow.pop %v6067
      %v6069 = vmul.f32 %v6066, 1.442695
      %v6070 = vpow.pop %v6069
      %v6071 = vadd.f32 %v6068, 1.0
      %v6072 = vadd.f32 %v6070, 1.0
      %v6073 = vrcp.pop %v6071
      %v6074 = vmul.f32 1.0, %v6073
      %v6075 = vrcp.pop %v6072
      %v6076 = vmul.f32 1.0, %v6075
      %6078 = vset.pattern.permute.xlu0 0
      %6079 = vperm.xlu0 %6078, %v6074
      %v6080 = vpop.permute.xlu0 %6079
      %6083 = vset.pattern.permute.xlu0 0
      %6084 = vperm.xlu0 %6083, %v6076
      %v6085 = vpop.permute.xlu0 %6084
      %6087 = vst [vmem:[#allocation15] sm:$0xff] %v6080
      %6088 = vst [vmem:[#allocation15 + $0x8] sm:$0xff] %v6085
    $region61: #{tpu_custom_call.1} parent=1 // pred_fallthru
      _
    // Predicated region
    $region62: #{tpu_custom_call.1} parent=1 // pred_check
      _
    $region63: #{tpu_custom_call.1} parent=1 // pred_check_branch
      %6090 = sbr.rel (0) target = $region65
    $region64: #{tpu_custom_call.1} parent=1 // pred_region
      %s6092 = ssub.s32 256, 256
      %6093 = vsyncadd [#allocation6], %s6092
      %s6094 = sshll.u32 [#allocation15], 4
      %s6095 = int_to_ptr.vmem [resolvable:$true] %s6094
      %6100 = dma.vmem_to_hbm [thread:$0]  %s6095, 256, %s7, [#allocation6], 128, 128, 8
    $region65: #{tpu_custom_call.1} parent=1 // pred_fallthru
      _
    // Predicated region
    $region66: #{tpu_custom_call.1} parent=1 // pred_check
      _
    $region67: #{tpu_custom_call.1} parent=1 // pred_check_branch
      %6102 = sbr.rel (0) target = $region69
    $region68: #{tpu_custom_call.1} parent=1 // pred_region
      %6103 = dma.done [#allocation6], 256
    $region69: #{tpu_custom_call.1} parent=1 // pred_fallthru
      _
    %6104 = vsyncpa [#allocation5], 1
    %6105 = vsyncpa [#allocation8], 1
    %6106 = vsyncpa [#allocation11], 1
    %6107 = vsyncpa [#allocation14], 1
    %6108 = vsyncpa [#allocation6], 1

</llo_original>
